<compile_context>
chip_gen: v6e
topology: v6e:2x2x1
jax: 0.10.0
libtpu: 0.0.40
codegen_flags: <defaults>
</compile_context>

<pallas_src>
import functools

import jax
import jax.numpy as jnp
from jax.experimental import pallas as pl
from jax.experimental.pallas import tpu as pltpu

F32 = jnp.float32

CFG = dict(
    vocab=128, type_vocab=2, max_pos=32,
    hidden=32, heads=4, ffn=64, layers=2, class_num=2,
)


# --------------------------- fused encoder kernel ---------------------------

def _encoder_kernel(x_ref, mask_ref, eg_ref, eb_ref,
                    wqkv_ref, bqkv_ref, wo_ref, bo_ref,
                    ln1g_ref, ln1b_ref, w1_ref, b1_ref,
                    w2_ref, b2_ref, ln2g_ref, ln2b_ref,
                    h_ref, *, B, S, H, A, Dh, eps, scale):
    def ln(x, g, b):
        mu = jnp.mean(x, axis=-1, keepdims=True)
        var = jnp.mean(jnp.square(x - mu), axis=-1, keepdims=True)
        return (x - mu) * jax.lax.rsqrt(var + eps) * g + b

    # Layer 0: initialize the resident hidden state with the embedding LayerNorm.
    @pl.when(pl.program_id(0) == 0)
    def _():
        h_ref[...] = ln(x_ref[...].astype(jnp.float32),
                        eg_ref[...], eb_ref[...]).astype(h_ref.dtype)

    h = h_ref[...].astype(jnp.float32)                       # [B*S, H]

    # --- self attention: fused QKV projection ---
    qkv = jnp.dot(h, wqkv_ref[...],
                  preferred_element_type=jnp.float32) + bqkv_ref[...]   # [B*S, 3H]
    q = qkv[:, 0:H].reshape(B, S, H)
    k = qkv[:, H:2 * H].reshape(B, S, H)
    v = qkv[:, 2 * H:3 * H].reshape(B, S, H)

    # additive mask, broadcast over heads/queries inside the kernel
    ext = (1.0 - mask_ref[...].astype(jnp.float32)) * -10000.0          # [B, S]
    ext = ext[:, None, :]                                               # [B, 1, S]

    ctx_heads = []
    for a in range(A):                                   # static unroll over heads
        qa = q[:, :, a * Dh:(a + 1) * Dh]
        ka = k[:, :, a * Dh:(a + 1) * Dh]
        va = v[:, :, a * Dh:(a + 1) * Dh]
        s = jnp.einsum("bqd,bkd->bqk", qa, ka,
                       preferred_element_type=jnp.float32) * scale
        s = s + ext
        s = s - jnp.max(s, axis=-1, keepdims=True)
        p = jnp.exp(s)
        inv_l = pl.reciprocal(jnp.sum(p, axis=-1, keepdims=True), approx=True)
        p = p * inv_l
        ctx_heads.append(jnp.einsum("bqk,bkd->bqd", p, va,
                                    preferred_element_type=jnp.float32))
    ctx = jnp.concatenate(ctx_heads, axis=-1).reshape(B * S, H)

    attn_out = jnp.dot(ctx, wo_ref[...],
                       preferred_element_type=jnp.float32) + bo_ref[...]
    h = ln(h + attn_out, ln1g_ref[...], ln1b_ref[...])

    # --- FFN ---
    f = jnp.dot(h, w1_ref[...], preferred_element_type=jnp.float32) + b1_ref[...]
    # TODO(synk): HF BERT uses erf-GELU; tanh approximation used for TPU EUP.
    c = 0.7978845608028654  # sqrt(2/pi)
    f = 0.5 * f * (1.0 + jnp.tanh(c * (f + 0.044715 * f * f * f)))
    f = jnp.dot(f, w2_ref[...], preferred_element_type=jnp.float32) + b2_ref[...]
    h = ln(h + f, ln2g_ref[...], ln2b_ref[...])

    h_ref[...] = h.astype(h_ref.dtype)


def encoder(x_emb, mask, params, cfg):
    B, S = mask.shape
    H, A, L, I = cfg["hidden"], cfg["heads"], cfg["layers"], cfg["ffn"]
    Dh = H // A
    kern = functools.partial(_encoder_kernel, B=B, S=S, H=H, A=A, Dh=Dh,
                             eps=1e-12, scale=1.0 / float(Dh) ** 0.5)

    def const_spec(shape):
        # same block every layer -> resident in VMEM across the layer axis
        return pl.BlockSpec(shape, lambda l: (0,) * len(shape))

    def layer_spec(shape):
        # per-layer weight slice; leading layer dim squeezed out
        return pl.BlockSpec((None,) + shape, lambda l: (l,) + (0,) * len(shape))

    return pl.pallas_call(
        kern,
        out_shape=jax.ShapeDtypeStruct((B * S, H), F32),
        grid_spec=pltpu.PrefetchScalarGridSpec(
            num_scalar_prefetch=0,
            grid=(L,),
            in_specs=[
                const_spec((B * S, H)),      # x_emb (pre-LN embedding sum)
                const_spec((B, S)),          # attention mask
                const_spec((1, H)),          # emb_ln_g
                const_spec((1, H)),          # emb_ln_b
                layer_spec((H, 3 * H)),      # wqkv
                layer_spec((1, 3 * H)),      # bqkv
                layer_spec((H, H)),          # wo
                layer_spec((1, H)),          # bo
                layer_spec((1, H)),          # ln1_g
                layer_spec((1, H)),          # ln1_b
                layer_spec((H, I)),          # w1
                layer_spec((1, I)),          # b1
                layer_spec((I, H)),          # w2
                layer_spec((1, H)),          # b2
                layer_spec((1, H)),          # ln2_g
                layer_spec((1, H)),          # ln2_b
            ],
            out_specs=pl.BlockSpec((B * S, H), lambda l: (0, 0)),
        ),
        compiler_params=pltpu.CompilerParams(
            dimension_semantics=("arbitrary",)),
    )(x_emb, mask, params["emb_ln_g"], params["emb_ln_b"],
      params["wqkv"], params["bqkv"], params["wo"], params["bo"],
      params["ln1_g"], params["ln1_b"], params["w1"], params["b1"],
      params["w2"], params["b2"], params["ln2_g"], params["ln2_b"])


# ------------------ fused pooler + classifier epilogue ----------------------

def _head_kernel(h_ref, pw_ref, pb_ref, ow_ref, ob_ref, o_ref):
    h = h_ref[...].astype(jnp.float32)                    # [B, S, H]
    cls = h[:, 0, :]                                      # CLS row gathered in-kernel
    pooled = jnp.tanh(
        jnp.dot(cls, pw_ref[...], preferred_element_type=jnp.float32) + pb_ref[...])
    logits = jnp.dot(pooled, ow_ref[...],
                     preferred_element_type=jnp.float32) + ob_ref[...]
    o_ref[...] = logits.astype(o_ref.dtype)


def pooler_classifier(hidden_bsh, params, cfg):
    B = hidden_bsh.shape[0]
    vmem = pl.BlockSpec(memory_space=pltpu.MemorySpace.VMEM)
    return pl.pallas_call(
        _head_kernel,
        out_shape=jax.ShapeDtypeStruct((B, cfg["class_num"]), F32),
        in_specs=[vmem] * 5,
        out_specs=vmem,
    )(hidden_bsh, params["pool_w"], params["pool_b"],
      params["out_w"], params["out_b"])


# ------------------------------ model (glue) --------------------------------

def init_params(key, cfg):
    ks = iter(jax.random.split(key, 32))

    def nrm(shape):
        return 0.02 * jax.random.normal(next(ks), shape, dtype=F32)

    H, I, L = cfg["hidden"], cfg["ffn"], cfg["layers"]
    return dict(
        word_emb=nrm((cfg["vocab"], H)),
        pos_emb=nrm((cfg["max_pos"], H)),
        type_emb=nrm((cfg["type_vocab"], H)),
        emb_ln_g=jnp.ones((1, H), F32),
        emb_ln_b=jnp.zeros((1, H), F32),
        # per-layer weights stacked along a leading layer axis; Q|K|V fused to [H,3H]
        wqkv=nrm((L, H, 3 * H)),
        bqkv=jnp.zeros((L, 1, 3 * H), F32),
        wo=nrm((L, H, H)),
        bo=jnp.zeros((L, 1, H), F32),
        ln1_g=jnp.ones((L, 1, H), F32),
        ln1_b=jnp.zeros((L, 1, H), F32),
        w1=nrm((L, H, I)),
        b1=jnp.zeros((L, 1, I), F32),
        w2=nrm((L, I, H)),
        b2=jnp.zeros((L, 1, H), F32),
        ln2_g=jnp.ones((L, 1, H), F32),
        ln2_b=jnp.zeros((L, 1, H), F32),
        pool_w=nrm((H, H)),
        pool_b=jnp.zeros((1, H), F32),
        out_w=nrm((H, cfg["class_num"])),
        out_b=jnp.zeros((1, cfg["class_num"]), F32),
    )


def bert_for_cls_forward(params, cfg, input_ids, attention_mask):
    B, S = input_ids.shape
    H = cfg["hidden"]

    # BERT embeddings (gathers are plain-JAX glue; LN happens inside the kernel)
    x = (params["word_emb"][input_ids]
         + params["pos_emb"][jnp.arange(S)][None, :, :]
         + params["type_emb"][0][None, None, :])           # token_type_ids == 0
    x = x.reshape(B * S, H)

    hidden = encoder(x, attention_mask.astype(F32), params, cfg)   # [B*S, H]
    hidden = hidden.reshape(B, S, H)

    # pooler_output = tanh(W_pool @ hidden[:, 0] + b_pool); preds = output(pooled)
    return pooler_classifier(hidden, params, cfg)


if __name__ == "__main__":
    key = jax.random.PRNGKey(0)
    k_param, k_ids = jax.random.split(key, 2)

    params = init_params(k_param, CFG)

    B, S = 2, 8
    input_ids = jax.random.randint(k_ids, (B, S), 0, CFG["vocab"], dtype=jnp.int32)
    attention_mask = jnp.array([[1] * S, [1] * (S - 2) + [0] * 2], dtype=jnp.int32)

    fwd = jax.jit(lambda ii, am: bert_for_cls_forward(params, CFG, ii, am))
    preds = fwd(input_ids, attention_mask)
    preds = jax.block_until_ready(preds)
    assert preds.shape == (B, CFG["class_num"])
    print("KERNEL_OK")
</pallas_src>

<mosaic_0001>
module attributes {stable_mosaic.version = 11 : i64} {
  func.func @_head_kernel(%arg0: memref<2x8x32xf32, #tpu.memory_space<vmem>>, %arg1: memref<32x32xf32, #tpu.memory_space<vmem>>, %arg2: memref<1x32xf32, #tpu.memory_space<vmem>>, %arg3: memref<32x2xf32, #tpu.memory_space<vmem>>, %arg4: memref<1x2xf32, #tpu.memory_space<vmem>>, %arg5: memref<2x2xf32, #tpu.memory_space<vmem>>) attributes {dimension_semantics = [], scalar_prefetch = 0 : i64, scratch_operands = 0 : i64, tpu.core_type = #tpu.core_type<tc>} {
    %c0 = arith.constant 0 : index
    %c0_0 = arith.constant 0 : index
    %c0_1 = arith.constant 0 : index
    %0 = vector.load %arg0[%c0, %c0_0, %c0_1] : memref<2x8x32xf32, #tpu.memory_space<vmem>>, vector<2x8x32xf32>
    %1 = vector.extract_strided_slice %0 {offsets = [0, 0, 0], sizes = [2, 1, 32], strides = [1, 1, 1]} : vector<2x8x32xf32> to vector<2x1x32xf32>
    %2 = vector.shape_cast %1 : vector<2x1x32xf32> to vector<2x32xf32>
    %c0_2 = arith.constant 0 : index
    %c0_3 = arith.constant 0 : index
    %3 = vector.load %arg1[%c0_2, %c0_3] : memref<32x32xf32, #tpu.memory_space<vmem>>, vector<32x32xf32>
    %cst = arith.constant dense<0.000000e+00> : vector<2x32xf32>
    %4 = tpu.matmul %2, %3, %cst {dimension_numbers = #tpu.dot_dimension_numbers<[1], [0], [0], [1], [0, 0, 1, 1], [], []>} : vector<2x32xf32>, vector<32x32xf32>, vector<2x32xf32> -> vector<2x32xf32>
    %c0_4 = arith.constant 0 : index
    %c0_5 = arith.constant 0 : index
    %5 = vector.load %arg2[%c0_4, %c0_5] : memref<1x32xf32, #tpu.memory_space<vmem>>, vector<1x32xf32>
    %6 = vector.broadcast %5 : vector<1x32xf32> to vector<2x32xf32>
    %7 = arith.addf %4, %6 : vector<2x32xf32>
    %8 = math.tanh %7 : vector<2x32xf32>
    %c0_6 = arith.constant 0 : index
    %c0_7 = arith.constant 0 : index
    %9 = vector.load %arg3[%c0_6, %c0_7] : memref<32x2xf32, #tpu.memory_space<vmem>>, vector<32x2xf32>
    %cst_8 = arith.constant dense<0.000000e+00> : vector<2x2xf32>
    %10 = tpu.matmul %8, %9, %cst_8 {dimension_numbers = #tpu.dot_dimension_numbers<[1], [0], [0], [1], [0, 0, 1, 1], [], []>} : vector<2x32xf32>, vector<32x2xf32>, vector<2x2xf32> -> vector<2x2xf32>
    %c0_9 = arith.constant 0 : index
    %c0_10 = arith.constant 0 : index
    %11 = vector.load %arg4[%c0_9, %c0_10] : memref<1x2xf32, #tpu.memory_space<vmem>>, vector<1x2xf32>
    %12 = vector.broadcast %11 : vector<1x2xf32> to vector<2x2xf32>
    %13 = arith.addf %10, %12 : vector<2x2xf32>
    %c0_11 = arith.constant 0 : index
    %c0_12 = arith.constant 0 : index
    %14 = vector.load %arg5[%c0_11, %c0_12] : memref<2x2xf32, #tpu.memory_space<vmem>>, vector<2x2xf32>
    tpu.vector_store %arg5[%c0_11, %c0_12], %13 {strides = array<i32>} : memref<2x2xf32, #tpu.memory_space<vmem>>, vector<2x2xf32>,
    return
  }
}

module attributes {stable_mosaic.version = 11 : i64} {
  func.func @_encoder_kernel(%arg0: i32, %arg1: memref<16x32xf32, #tpu.memory_space<vmem>>, %arg2: memref<2x8xf32, #tpu.memory_space<vmem>>, %arg3: memref<1x32xf32, #tpu.memory_space<vmem>>, %arg4: memref<1x32xf32, #tpu.memory_space<vmem>>, %arg5: memref<1x32x96xf32, #tpu.memory_space<vmem>>, %arg6: memref<1x1x96xf32, #tpu.memory_space<vmem>>, %arg7: memref<1x32x32xf32, #tpu.memory_space<vmem>>, %arg8: memref<1x1x32xf32, #tpu.memory_space<vmem>>, %arg9: memref<1x1x32xf32, #tpu.memory_space<vmem>>, %arg10: memref<1x1x32xf32, #tpu.memory_space<vmem>>, %arg11: memref<1x32x64xf32, #tpu.memory_space<vmem>>, %arg12: memref<1x1x64xf32, #tpu.memory_space<vmem>>, %arg13: memref<1x64x32xf32, #tpu.memory_space<vmem>>, %arg14: memref<1x1x32xf32, #tpu.memory_space<vmem>>, %arg15: memref<1x1x32xf32, #tpu.memory_space<vmem>>, %arg16: memref<1x1x32xf32, #tpu.memory_space<vmem>>, %arg17: memref<16x32xf32, #tpu.memory_space<vmem>>) attributes {dimension_semantics = [#tpu.dimension_semantics<arbitrary>], iteration_bounds = array<i64: 2>, scalar_prefetch = 0 : i64, scratch_operands = 0 : i64, tpu.core_type = #tpu.core_type<tc>, window_params = [{pipeline_mode = #tpu.pipeline_mode<synchronous>, transform_indices = @transform_0, window_bounds = array<i64: 16, 32>}, {pipeline_mode = #tpu.pipeline_mode<synchronous>, transform_indices = @transform_1, window_bounds = array<i64: 2, 8>}, {pipeline_mode = #tpu.pipeline_mode<synchronous>, transform_indices = @transform_2, window_bounds = array<i64: 1, 32>}, {pipeline_mode = #tpu.pipeline_mode<synchronous>, transform_indices = @transform_3, window_bounds = array<i64: 1, 32>}, {transform_indices = @transform_4, window_bounds = array<i64: 1, 32, 96>}, {transform_indices = @transform_5, window_bounds = array<i64: 1, 1, 96>}, {transform_indices = @transform_6, window_bounds = array<i64: 1, 32, 32>}, {transform_indices = @transform_7, window_bounds = array<i64: 1, 1, 32>}, {transform_indices = @transform_8, window_bounds = array<i64: 1, 1, 32>}, {transform_indices = @transform_9, window_bounds = array<i64: 1, 1, 32>}, {transform_indices = @transform_10, window_bounds = array<i64: 1, 32, 64>}, {transform_indices = @transform_11, window_bounds = array<i64: 1, 1, 64>}, {transform_indices = @transform_12, window_bounds = array<i64: 1, 64, 32>}, {transform_indices = @transform_13, window_bounds = array<i64: 1, 1, 32>}, {transform_indices = @transform_14, window_bounds = array<i64: 1, 1, 32>}, {transform_indices = @transform_15, window_bounds = array<i64: 1, 1, 32>}, {pipeline_mode = #tpu.pipeline_mode<synchronous>, transform_indices = @transform_16, window_bounds = array<i64: 16, 32>}]} {
    %c0_i32 = arith.constant 0 : i32
    %0 = arith.cmpi eq, %arg0, %c0_i32 : i32
    %1 = arith.extui %0 : i1 to i32
    %c0_i32_0 = arith.constant 0 : i32
    %2 = arith.cmpi ne, %1, %c0_i32_0 : i32
    scf.if %2 {
      %c0_81 = arith.constant 0 : index
      %c0_82 = arith.constant 0 : index
      %190 = vector.load %arg1[%c0_81, %c0_82] : memref<16x32xf32, #tpu.memory_space<vmem>>, vector<16x32xf32>
      %c0_83 = arith.constant 0 : index
      %c0_84 = arith.constant 0 : index
      %191 = vector.load %arg3[%c0_83, %c0_84] : memref<1x32xf32, #tpu.memory_space<vmem>>, vector<1x32xf32>
      %c0_85 = arith.constant 0 : index
      %c0_86 = arith.constant 0 : index
      %192 = vector.load %arg4[%c0_85, %c0_86] : memref<1x32xf32, #tpu.memory_space<vmem>>, vector<1x32xf32>
      %cst_87 = arith.constant dense<0.000000e+00> : vector<16xf32>
      %193 = vector.multi_reduction <add>, %190, %cst_87 [1] : vector<16x32xf32> to vector<16xf32>
      %194 = vector.shape_cast %193 : vector<16xf32> to vector<16x1xf32>
      %cst_88 = arith.constant 3.200000e+01 : f32
      %195 = vector.broadcast %cst_88 : f32 to vector<16x1xf32>
      %196 = arith.divf %194, %195 : vector<16x1xf32>
      %197 = vector.broadcast %196 : vector<16x1xf32> to vector<16x32xf32>
      %198 = arith.subf %190, %197 : vector<16x32xf32>
      %199 = arith.mulf %198, %198 : vector<16x32xf32>
      %cst_89 = arith.constant dense<0.000000e+00> : vector<16xf32>
      %200 = vector.multi_reduction <add>, %199, %cst_89 [1] : vector<16x32xf32> to vector<16xf32>
      %201 = vector.shape_cast %200 : vector<16xf32> to vector<16x1xf32>
      %cst_90 = arith.constant 3.200000e+01 : f32
      %202 = vector.broadcast %cst_90 : f32 to vector<16x1xf32>
      %203 = arith.divf %201, %202 : vector<16x1xf32>
      %204 = vector.broadcast %196 : vector<16x1xf32> to vector<16x32xf32>
      %205 = arith.subf %190, %204 : vector<16x32xf32>
      %cst_91 = arith.constant 9.99999996E-13 : f32
      %206 = vector.broadcast %cst_91 : f32 to vector<16x1xf32>
      %207 = arith.addf %203, %206 : vector<16x1xf32>
      %208 = math.rsqrt %207 : vector<16x1xf32>
      %209 = vector.broadcast %208 : vector<16x1xf32> to vector<16x32xf32>
      %210 = arith.mulf %205, %209 : vector<16x32xf32>
      %211 = vector.broadcast %191 : vector<1x32xf32> to vector<16x32xf32>
      %212 = arith.mulf %210, %211 : vector<16x32xf32>
      %213 = vector.broadcast %192 : vector<1x32xf32> to vector<16x32xf32>
      %214 = arith.addf %212, %213 : vector<16x32xf32>
      %c0_92 = arith.constant 0 : index
      %c0_93 = arith.constant 0 : index
      %215 = vector.load %arg17[%c0_92, %c0_93] : memref<16x32xf32, #tpu.memory_space<vmem>>, vector<16x32xf32>
      tpu.vector_store %arg17[%c0_92, %c0_93], %214 {strides = array<i32>} : memref<16x32xf32, #tpu.memory_space<vmem>>, vector<16x32xf32>,
    } else {
    }
    %c0 = arith.constant 0 : index
    %c0_1 = arith.constant 0 : index
    %3 = vector.load %arg17[%c0, %c0_1] : memref<16x32xf32, #tpu.memory_space<vmem>>, vector<16x32xf32>
    %c0_2 = arith.constant 0 : index
    %c0_3 = arith.constant 0 : index
    %c0_4 = arith.constant 0 : index
    %4 = vector.load %arg5[%c0_2, %c0_3, %c0_4] : memref<1x32x96xf32, #tpu.memory_space<vmem>>, vector<1x32x96xf32>
    %5 = vector.shape_cast %4 : vector<1x32x96xf32> to vector<32x96xf32>
    %cst = arith.constant dense<0.000000e+00> : vector<16x96xf32>
    %6 = tpu.matmul %3, %5, %cst {dimension_numbers = #tpu.dot_dimension_numbers<[1], [0], [0], [1], [0, 0, 1, 1], [], []>} : vector<16x32xf32>, vector<32x96xf32>, vector<16x96xf32> -> vector<16x96xf32>
    %c0_5 = arith.constant 0 : index
    %c0_6 = arith.constant 0 : index
    %c0_7 = arith.constant 0 : index
    %7 = vector.load %arg6[%c0_5, %c0_6, %c0_7] : memref<1x1x96xf32, #tpu.memory_space<vmem>>, vector<1x1x96xf32>
    %8 = vector.shape_cast %7 : vector<1x1x96xf32> to vector<1x96xf32>
    %9 = vector.broadcast %8 : vector<1x96xf32> to vector<16x96xf32>
    %10 = arith.addf %6, %9 : vector<16x96xf32>
    %11 = vector.extract_strided_slice %10 {offsets = [0, 0], sizes = [16, 32], strides = [1, 1]} : vector<16x96xf32> to vector<16x32xf32>
    %12 = vector.shape_cast %11 : vector<16x32xf32> to vector<2x8x32xf32>
    %13 = vector.extract_strided_slice %10 {offsets = [0, 32], sizes = [16, 32], strides = [1, 1]} : vector<16x96xf32> to vector<16x32xf32>
    %14 = vector.shape_cast %13 : vector<16x32xf32> to vector<2x8x32xf32>
    %15 = vector.extract_strided_slice %10 {offsets = [0, 64], sizes = [16, 32], strides = [1, 1]} : vector<16x96xf32> to vector<16x32xf32>
    %16 = vector.shape_cast %15 : vector<16x32xf32> to vector<2x8x32xf32>
    %c0_8 = arith.constant 0 : index
    %c0_9 = arith.constant 0 : index
    %17 = vector.load %arg2[%c0_8, %c0_9] : memref<2x8xf32, #tpu.memory_space<vmem>>, vector<2x8xf32>
    %cst_10 = arith.constant 1.000000e+00 : f32
    %18 = vector.broadcast %cst_10 : f32 to vector<2x8xf32>
    %19 = arith.subf %18, %17 : vector<2x8xf32>
    %cst_11 = arith.constant -1.000000e+04 : f32
    %20 = vector.broadcast %cst_11 : f32 to vector<2x8xf32>
    %21 = arith.mulf %19, %20 : vector<2x8xf32>
    %22 = vector.shape_cast %21 : vector<2x8xf32> to vector<2x1x8xf32>
    %23 = vector.extract_strided_slice %12 {offsets = [0, 0, 0], sizes = [2, 8, 8], strides = [1, 1, 1]} : vector<2x8x32xf32> to vector<2x8x8xf32>
    %24 = vector.extract_strided_slice %14 {offsets = [0, 0, 0], sizes = [2, 8, 8], strides = [1, 1, 1]} : vector<2x8x32xf32> to vector<2x8x8xf32>
    %25 = vector.extract_strided_slice %16 {offsets = [0, 0, 0], sizes = [2, 8, 8], strides = [1, 1, 1]} : vector<2x8x32xf32> to vector<2x8x8xf32>
    "tpu.trace_start"() <{level = 10 : i32, message = "bqd,bkd->bqk"}> : () -> ()
    %cst_12 = arith.constant dense<0.000000e+00> : vector<2x8x8xf32>
    %26 = tpu.matmul %23, %24, %cst_12 {dimension_numbers = #tpu.dot_dimension_numbers<[2], [2], [1], [1], [0, 0, 0, 1, 1, 1], [0], [0]>} : vector<2x8x8xf32>, vector<2x8x8xf32>, vector<2x8x8xf32> -> vector<2x8x8xf32>
    "tpu.trace_stop"() : () -> ()
    %cst_13 = arith.constant 0.353553385 : f32
    %27 = vector.broadcast %cst_13 : f32 to vector<2x8x8xf32>
    %28 = arith.mulf %26, %27 : vector<2x8x8xf32>
    %29 = vector.broadcast %22 : vector<2x1x8xf32> to vector<2x8x8xf32>
    %30 = arith.addf %28, %29 : vector<2x8x8xf32>
    %cst_14 = arith.constant dense<0xFF800000> : vector<2x8xf32>
    %31 = vector.multi_reduction <maximumf>, %30, %cst_14 [2] : vector<2x8x8xf32> to vector<2x8xf32>
    %32 = vector.shape_cast %31 : vector<2x8xf32> to vector<2x8x1xf32>
    %33 = vector.broadcast %32 : vector<2x8x1xf32> to vector<2x8x8xf32>
    %34 = arith.subf %30, %33 : vector<2x8x8xf32>
    %35 = math.exp %34 : vector<2x8x8xf32>
    %cst_15 = arith.constant dense<0.000000e+00> : vector<2x8xf32>
    %36 = vector.multi_reduction <add>, %35, %cst_15 [2] : vector<2x8x8xf32> to vector<2x8xf32>
    %37 = vector.shape_cast %36 : vector<2x8xf32> to vector<2x8x1xf32>
    %38 = tpu.reciprocal %37 {approx = true} : vector<2x8x1xf32> -> vector<2x8x1xf32>
    %39 = vector.broadcast %38 : vector<2x8x1xf32> to vector<2x8x8xf32>
    %40 = arith.mulf %35, %39 : vector<2x8x8xf32>
    "tpu.trace_start"() <{level = 10 : i32, message = "bqk,bkd->bqd"}> : () -> ()
    %cst_16 = arith.constant dense<0.000000e+00> : vector<2x8x8xf32>
    %41 = tpu.matmul %40, %25, %cst_16 {dimension_numbers = #tpu.dot_dimension_numbers<[2], [1], [1], [2], [0, 0, 0, 1, 1, 2], [0], [0]>} : vector<2x8x8xf32>, vector<2x8x8xf32>, vector<2x8x8xf32> -> vector<2x8x8xf32>
    "tpu.trace_stop"() : () -> ()
    %42 = vector.extract_strided_slice %12 {offsets = [0, 0, 8], sizes = [2, 8, 8], strides = [1, 1, 1]} : vector<2x8x32xf32> to vector<2x8x8xf32>
    %43 = vector.extract_strided_slice %14 {offsets = [0, 0, 8], sizes = [2, 8, 8], strides = [1, 1, 1]} : vector<2x8x32xf32> to vector<2x8x8xf32>
    %44 = vector.extract_strided_slice %16 {offsets = [0, 0, 8], sizes = [2, 8, 8], strides = [1, 1, 1]} : vector<2x8x32xf32> to vector<2x8x8xf32>
    "tpu.trace_start"() <{level = 10 : i32, message = "bqd,bkd->bqk"}> : () -> ()
    %cst_17 = arith.constant dense<0.000000e+00> : vector<2x8x8xf32>
    %45 = tpu.matmul %42, %43, %cst_17 {dimension_numbers = #tpu.dot_dimension_numbers<[2], [2], [1], [1], [0, 0, 0, 1, 1, 1], [0], [0]>} : vector<2x8x8xf32>, vector<2x8x8xf32>, vector<2x8x8xf32> -> vector<2x8x8xf32>
    "tpu.trace_stop"() : () -> ()
    %cst_18 = arith.constant 0.353553385 : f32
    %46 = vector.broadcast %cst_18 : f32 to vector<2x8x8xf32>
    %47 = arith.mulf %45, %46 : vector<2x8x8xf32>
    %48 = vector.broadcast %22 : vector<2x1x8xf32> to vector<2x8x8xf32>
    %49 = arith.addf %47, %48 : vector<2x8x8xf32>
    %cst_19 = arith.constant dense<0xFF800000> : vector<2x8xf32>
    %50 = vector.multi_reduction <maximumf>, %49, %cst_19 [2] : vector<2x8x8xf32> to vector<2x8xf32>
    %51 = vector.shape_cast %50 : vector<2x8xf32> to vector<2x8x1xf32>
    %52 = vector.broadcast %51 : vector<2x8x1xf32> to vector<2x8x8xf32>
    %53 = arith.subf %49, %52 : vector<2x8x8xf32>
    %54 = math.exp %53 : vector<2x8x8xf32>
    %cst_20 = arith.constant dense<0.000000e+00> : vector<2x8xf32>
    %55 = vector.multi_reduction <add>, %54, %cst_20 [2] : vector<2x8x8xf32> to vector<2x8xf32>
    %56 = vector.shape_cast %55 : vector<2x8xf32> to vector<2x8x1xf32>
    %57 = tpu.reciprocal %56 {approx = true} : vector<2x8x1xf32> -> vector<2x8x1xf32>
    %58 = vector.broadcast %57 : vector<2x8x1xf32> to vector<2x8x8xf32>
    %59 = arith.mulf %54, %58 : vector<2x8x8xf32>
    "tpu.trace_start"() <{level = 10 : i32, message = "bqk,bkd->bqd"}> : () -> ()
    %cst_21 = arith.constant dense<0.000000e+00> : vector<2x8x8xf32>
    %60 = tpu.matmul %59, %44, %cst_21 {dimension_numbers = #tpu.dot_dimension_numbers<[2], [1], [1], [2], [0, 0, 0, 1, 1, 2], [0], [0]>} : vector<2x8x8xf32>, vector<2x8x8xf32>, vector<2x8x8xf32> -> vector<2x8x8xf32>
    "tpu.trace_stop"() : () -> ()
    %61 = vector.extract_strided_slice %12 {offsets = [0, 0, 16], sizes = [2, 8, 8], strides = [1, 1, 1]} : vector<2x8x32xf32> to vector<2x8x8xf32>
    %62 = vector.extract_strided_slice %14 {offsets = [0, 0, 16], sizes = [2, 8, 8], strides = [1, 1, 1]} : vector<2x8x32xf32> to vector<2x8x8xf32>
    %63 = vector.extract_strided_slice %16 {offsets = [0, 0, 16], sizes = [2, 8, 8], strides = [1, 1, 1]} : vector<2x8x32xf32> to vector<2x8x8xf32>
    "tpu.trace_start"() <{level = 10 : i32, message = "bqd,bkd->bqk"}> : () -> ()
    %cst_22 = arith.constant dense<0.000000e+00> : vector<2x8x8xf32>
    %64 = tpu.matmul %61, %62, %cst_22 {dimension_numbers = #tpu.dot_dimension_numbers<[2], [2], [1], [1], [0, 0, 0, 1, 1, 1], [0], [0]>} : vector<2x8x8xf32>, vector<2x8x8xf32>, vector<2x8x8xf32> -> vector<2x8x8xf32>
    "tpu.trace_stop"() : () -> ()
    %cst_23 = arith.constant 0.353553385 : f32
    %65 = vector.broadcast %cst_23 : f32 to vector<2x8x8xf32>
    %66 = arith.mulf %64, %65 : vector<2x8x8xf32>
    %67 = vector.broadcast %22 : vector<2x1x8xf32> to vector<2x8x8xf32>
    %68 = arith.addf %66, %67 : vector<2x8x8xf32>
    %cst_24 = arith.constant dense<0xFF800000> : vector<2x8xf32>
    %69 = vector.multi_reduction <maximumf>, %68, %cst_24 [2] : vector<2x8x8xf32> to vector<2x8xf32>
    %70 = vector.shape_cast %69 : vector<2x8xf32> to vector<2x8x1xf32>
    %71 = vector.broadcast %70 : vector<2x8x1xf32> to vector<2x8x8xf32>
    %72 = arith.subf %68, %71 : vector<2x8x8xf32>
    %73 = math.exp %72 : vector<2x8x8xf32>
    %cst_25 = arith.constant dense<0.000000e+00> : vector<2x8xf32>
    %74 = vector.multi_reduction <add>, %73, %cst_25 [2] : vector<2x8x8xf32> to vector<2x8xf32>
    %75 = vector.shape_cast %74 : vector<2x8xf32> to vector<2x8x1xf32>
    %76 = tpu.reciprocal %75 {approx = true} : vector<2x8x1xf32> -> vector<2x8x1xf32>
    %77 = vector.broadcast %76 : vector<2x8x1xf32> to vector<2x8x8xf32>
    %78 = arith.mulf %73, %77 : vector<2x8x8xf32>
    "tpu.trace_start"() <{level = 10 : i32, message = "bqk,bkd->bqd"}> : () -> ()
    %cst_26 = arith.constant dense<0.000000e+00> : vector<2x8x8xf32>
    %79 = tpu.matmul %78, %63, %cst_26 {dimension_numbers = #tpu.dot_dimension_numbers<[2], [1], [1], [2], [0, 0, 0, 1, 1, 2], [0], [0]>} : vector<2x8x8xf32>, vector<2x8x8xf32>, vector<2x8x8xf32> -> vector<2x8x8xf32>
    "tpu.trace_stop"() : () -> ()
    %80 = vector.extract_strided_slice %12 {offsets = [0, 0, 24], sizes = [2, 8, 8], strides = [1, 1, 1]} : vector<2x8x32xf32> to vector<2x8x8xf32>
    %81 = vector.extract_strided_slice %14 {offsets = [0, 0, 24], sizes = [2, 8, 8], strides = [1, 1, 1]} : vector<2x8x32xf32> to vector<2x8x8xf32>
    %82 = vector.extract_strided_slice %16 {offsets = [0, 0, 24], sizes = [2, 8, 8], strides = [1, 1, 1]} : vector<2x8x32xf32> to vector<2x8x8xf32>
    "tpu.trace_start"() <{level = 10 : i32, message = "bqd,bkd->bqk"}> : () -> ()
    %cst_27 = arith.constant dense<0.000000e+00> : vector<2x8x8xf32>
    %83 = tpu.matmul %80, %81, %cst_27 {dimension_numbers = #tpu.dot_dimension_numbers<[2], [2], [1], [1], [0, 0, 0, 1, 1, 1], [0], [0]>} : vector<2x8x8xf32>, vector<2x8x8xf32>, vector<2x8x8xf32> -> vector<2x8x8xf32>
    "tpu.trace_stop"() : () -> ()
    %cst_28 = arith.constant 0.353553385 : f32
    %84 = vector.broadcast %cst_28 : f32 to vector<2x8x8xf32>
    %85 = arith.mulf %83, %84 : vector<2x8x8xf32>
    %86 = vector.broadcast %22 : vector<2x1x8xf32> to vector<2x8x8xf32>
    %87 = arith.addf %85, %86 : vector<2x8x8xf32>
    %cst_29 = arith.constant dense<0xFF800000> : vector<2x8xf32>
    %88 = vector.multi_reduction <maximumf>, %87, %cst_29 [2] : vector<2x8x8xf32> to vector<2x8xf32>
    %89 = vector.shape_cast %88 : vector<2x8xf32> to vector<2x8x1xf32>
    %90 = vector.broadcast %89 : vector<2x8x1xf32> to vector<2x8x8xf32>
    %91 = arith.subf %87, %90 : vector<2x8x8xf32>
    %92 = math.exp %91 : vector<2x8x8xf32>
    %cst_30 = arith.constant dense<0.000000e+00> : vector<2x8xf32>
    %93 = vector.multi_reduction <add>, %92, %cst_30 [2] : vector<2x8x8xf32> to vector<2x8xf32>
    %94 = vector.shape_cast %93 : vector<2x8xf32> to vector<2x8x1xf32>
    %95 = tpu.reciprocal %94 {approx = true} : vector<2x8x1xf32> -> vector<2x8x1xf32>
    %96 = vector.broadcast %95 : vector<2x8x1xf32> to vector<2x8x8xf32>
    %97 = arith.mulf %92, %96 : vector<2x8x8xf32>
    "tpu.trace_start"() <{level = 10 : i32, message = "bqk,bkd->bqd"}> : () -> ()
    %cst_31 = arith.constant dense<0.000000e+00> : vector<2x8x8xf32>
    %98 = tpu.matmul %97, %82, %cst_31 {dimension_numbers = #tpu.dot_dimension_numbers<[2], [1], [1], [2], [0, 0, 0, 1, 1, 2], [0], [0]>} : vector<2x8x8xf32>, vector<2x8x8xf32>, vector<2x8x8xf32> -> vector<2x8x8xf32>
    "tpu.trace_stop"() : () -> ()
    %99 = tpu.concatenate %41, %60, %79, %98 in 2 : vector<2x8x8xf32>, vector<2x8x8xf32>, vector<2x8x8xf32>, vector<2x8x8xf32> -> vector<2x8x32xf32>
    %100 = vector.shape_cast %99 : vector<2x8x32xf32> to vector<16x32xf32>
    %c0_32 = arith.constant 0 : index
    %c0_33 = arith.constant 0 : index
    %c0_34 = arith.constant 0 : index
    %101 = vector.load %arg7[%c0_32, %c0_33, %c0_34] : memref<1x32x32xf32, #tpu.memory_space<vmem>>, vector<1x32x32xf32>
    %102 = vector.shape_cast %101 : vector<1x32x32xf32> to vector<32x32xf32>
    %cst_35 = arith.constant dense<0.000000e+00> : vector<16x32xf32>
    %103 = tpu.matmul %100, %102, %cst_35 {dimension_numbers = #tpu.dot_dimension_numbers<[1], [0], [0], [1], [0, 0, 1, 1], [], []>} : vector<16x32xf32>, vector<32x32xf32>, vector<16x32xf32> -> vector<16x32xf32>
    %c0_36 = arith.constant 0 : index
    %c0_37 = arith.constant 0 : index
    %c0_38 = arith.constant 0 : index
    %104 = vector.load %arg8[%c0_36, %c0_37, %c0_38] : memref<1x1x32xf32, #tpu.memory_space<vmem>>, vector<1x1x32xf32>
    %105 = vector.shape_cast %104 : vector<1x1x32xf32> to vector<1x32xf32>
    %106 = vector.broadcast %105 : vector<1x32xf32> to vector<16x32xf32>
    %107 = arith.addf %103, %106 : vector<16x32xf32>
    %108 = arith.addf %3, %107 : vector<16x32xf32>
    %c0_39 = arith.constant 0 : index
    %c0_40 = arith.constant 0 : index
    %c0_41 = arith.constant 0 : index
    %109 = vector.load %arg9[%c0_39, %c0_40, %c0_41] : memref<1x1x32xf32, #tpu.memory_space<vmem>>, vector<1x1x32xf32>
    %110 = vector.shape_cast %109 : vector<1x1x32xf32> to vector<1x32xf32>
    %c0_42 = arith.constant 0 : index
    %c0_43 = arith.constant 0 : index
    %c0_44 = arith.constant 0 : index
    %111 = vector.load %arg10[%c0_42, %c0_43, %c0_44] : memref<1x1x32xf32, #tpu.memory_space<vmem>>, vector<1x1x32xf32>
    %112 = vector.shape_cast %111 : vector<1x1x32xf32> to vector<1x32xf32>
    %cst_45 = arith.constant dense<0.000000e+00> : vector<16xf32>
    %113 = vector.multi_reduction <add>, %108, %cst_45 [1] : vector<16x32xf32> to vector<16xf32>
    %114 = vector.shape_cast %113 : vector<16xf32> to vector<16x1xf32>
    %cst_46 = arith.constant 3.200000e+01 : f32
    %115 = vector.broadcast %cst_46 : f32 to vector<16x1xf32>
    %116 = arith.divf %114, %115 : vector<16x1xf32>
    %117 = vector.broadcast %116 : vector<16x1xf32> to vector<16x32xf32>
    %118 = arith.subf %108, %117 : vector<16x32xf32>
    %119 = arith.mulf %118, %118 : vector<16x32xf32>
    %cst_47 = arith.constant dense<0.000000e+00> : vector<16xf32>
    %120 = vector.multi_reduction <add>, %119, %cst_47 [1] : vector<16x32xf32> to vector<16xf32>
    %121 = vector.shape_cast %120 : vector<16xf32> to vector<16x1xf32>
    %cst_48 = arith.constant 3.200000e+01 : f32
    %122 = vector.broadcast %cst_48 : f32 to vector<16x1xf32>
    %123 = arith.divf %121, %122 : vector<16x1xf32>
    %124 = vector.broadcast %116 : vector<16x1xf32> to vector<16x32xf32>
    %125 = arith.subf %108, %124 : vector<16x32xf32>
    %cst_49 = arith.constant 9.99999996E-13 : f32
    %126 = vector.broadcast %cst_49 : f32 to vector<16x1xf32>
    %127 = arith.addf %123, %126 : vector<16x1xf32>
    %128 = math.rsqrt %127 : vector<16x1xf32>
    %129 = vector.broadcast %128 : vector<16x1xf32> to vector<16x32xf32>
    %130 = arith.mulf %125, %129 : vector<16x32xf32>
    %131 = vector.broadcast %110 : vector<1x32xf32> to vector<16x32xf32>
    %132 = arith.mulf %130, %131 : vector<16x32xf32>
    %133 = vector.broadcast %112 : vector<1x32xf32> to vector<16x32xf32>
    %134 = arith.addf %132, %133 : vector<16x32xf32>
    %c0_50 = arith.constant 0 : index
    %c0_51 = arith.constant 0 : index
    %c0_52 = arith.constant 0 : index
    %135 = vector.load %arg11[%c0_50, %c0_51, %c0_52] : memref<1x32x64xf32, #tpu.memory_space<vmem>>, vector<1x32x64xf32>
    %136 = vector.shape_cast %135 : vector<1x32x64xf32> to vector<32x64xf32>
    %cst_53 = arith.constant dense<0.000000e+00> : vector<16x64xf32>
    %137 = tpu.matmul %134, %136, %cst_53 {dimension_numbers = #tpu.dot_dimension_numbers<[1], [0], [0], [1], [0, 0, 1, 1], [], []>} : vector<16x32xf32>, vector<32x64xf32>, vector<16x64xf32> -> vector<16x64xf32>
    %c0_54 = arith.constant 0 : index
    %c0_55 = arith.constant 0 : index
    %c0_56 = arith.constant 0 : index
    %138 = vector.load %arg12[%c0_54, %c0_55, %c0_56] : memref<1x1x64xf32, #tpu.memory_space<vmem>>, vector<1x1x64xf32>
    %139 = vector.shape_cast %138 : vector<1x1x64xf32> to vector<1x64xf32>
    %140 = vector.broadcast %139 : vector<1x64xf32> to vector<16x64xf32>
    %141 = arith.addf %137, %140 : vector<16x64xf32>
    %cst_57 = arith.constant 5.000000e-01 : f32
    %142 = vector.broadcast %cst_57 : f32 to vector<16x64xf32>
    %143 = arith.mulf %142, %141 : vector<16x64xf32>
    %cst_58 = arith.constant 4.471500e-02 : f32
    %144 = vector.broadcast %cst_58 : f32 to vector<16x64xf32>
    %145 = arith.mulf %144, %141 : vector<16x64xf32>
    %146 = arith.mulf %145, %141 : vector<16x64xf32>
    %147 = arith.mulf %146, %141 : vector<16x64xf32>
    %148 = arith.addf %141, %147 : vector<16x64xf32>
    %cst_59 = arith.constant 0.797884583 : f32
    %149 = vector.broadcast %cst_59 : f32 to vector<16x64xf32>
    %150 = arith.mulf %149, %148 : vector<16x64xf32>
    %151 = math.tanh %150 : vector<16x64xf32>
    %cst_60 = arith.constant 1.000000e+00 : f32
    %152 = vector.broadcast %cst_60 : f32 to vector<16x64xf32>
    %153 = arith.addf %152, %151 : vector<16x64xf32>
    %154 = arith.mulf %143, %153 : vector<16x64xf32>
    %c0_61 = arith.constant 0 : index
    %c0_62 = arith.constant 0 : index
    %c0_63 = arith.constant 0 : index
    %155 = vector.load %arg13[%c0_61, %c0_62, %c0_63] : memref<1x64x32xf32, #tpu.memory_space<vmem>>, vector<1x64x32xf32>
    %156 = vector.shape_cast %155 : vector<1x64x32xf32> to vector<64x32xf32>
    %cst_64 = arith.constant dense<0.000000e+00> : vector<16x32xf32>
    %157 = tpu.matmul %154, %156, %cst_64 {dimension_numbers = #tpu.dot_dimension_numbers<[1], [0], [0], [1], [0, 0, 1, 1], [], []>} : vector<16x64xf32>, vector<64x32xf32>, vector<16x32xf32> -> vector<16x32xf32>
    %c0_65 = arith.constant 0 : index
    %c0_66 = arith.constant 0 : index
    %c0_67 = arith.constant 0 : index
    %158 = vector.load %arg14[%c0_65, %c0_66, %c0_67] : memref<1x1x32xf32, #tpu.memory_space<vmem>>, vector<1x1x32xf32>
    %159 = vector.shape_cast %158 : vector<1x1x32xf32> to vector<1x32xf32>
    %160 = vector.broadcast %159 : vector<1x32xf32> to vector<16x32xf32>
    %161 = arith.addf %157, %160 : vector<16x32xf32>
    %162 = arith.addf %134, %161 : vector<16x32xf32>
    %c0_68 = arith.constant 0 : index
    %c0_69 = arith.constant 0 : index
    %c0_70 = arith.constant 0 : index
    %163 = vector.load %arg15[%c0_68, %c0_69, %c0_70] : memref<1x1x32xf32, #tpu.memory_space<vmem>>, vector<1x1x32xf32>
    %164 = vector.shape_cast %163 : vector<1x1x32xf32> to vector<1x32xf32>
    %c0_71 = arith.constant 0 : index
    %c0_72 = arith.constant 0 : index
    %c0_73 = arith.constant 0 : index
    %165 = vector.load %arg16[%c0_71, %c0_72, %c0_73] : memref<1x1x32xf32, #tpu.memory_space<vmem>>, vector<1x1x32xf32>
    %166 = vector.shape_cast %165 : vector<1x1x32xf32> to vector<1x32xf32>
    %cst_74 = arith.constant dense<0.000000e+00> : vector<16xf32>
    %167 = vector.multi_reduction <add>, %162, %cst_74 [1] : vector<16x32xf32> to vector<16xf32>
    %168 = vector.shape_cast %167 : vector<16xf32> to vector<16x1xf32>
    %cst_75 = arith.constant 3.200000e+01 : f32
    %169 = vector.broadcast %cst_75 : f32 to vector<16x1xf32>
    %170 = arith.divf %168, %169 : vector<16x1xf32>
    %171 = vector.broadcast %170 : vector<16x1xf32> to vector<16x32xf32>
    %172 = arith.subf %162, %171 : vector<16x32xf32>
    %173 = arith.mulf %172, %172 : vector<16x32xf32>
    %cst_76 = arith.constant dense<0.000000e+00> : vector<16xf32>
    %174 = vector.multi_reduction <add>, %173, %cst_76 [1] : vector<16x32xf32> to vector<16xf32>
    %175 = vector.shape_cast %174 : vector<16xf32> to vector<16x1xf32>
    %cst_77 = arith.constant 3.200000e+01 : f32
    %176 = vector.broadcast %cst_77 : f32 to vector<16x1xf32>
    %177 = arith.divf %175, %176 : vector<16x1xf32>
    %178 = vector.broadcast %170 : vector<16x1xf32> to vector<16x32xf32>
    %179 = arith.subf %162, %178 : vector<16x32xf32>
    %cst_78 = arith.constant 9.99999996E-13 : f32
    %180 = vector.broadcast %cst_78 : f32 to vector<16x1xf32>
    %181 = arith.addf %177, %180 : vector<16x1xf32>
    %182 = math.rsqrt %181 : vector<16x1xf32>
    %183 = vector.broadcast %182 : vector<16x1xf32> to vector<16x32xf32>
    %184 = arith.mulf %179, %183 : vector<16x32xf32>
    %185 = vector.broadcast %164 : vector<1x32xf32> to vector<16x32xf32>
    %186 = arith.mulf %184, %185 : vector<16x32xf32>
    %187 = vector.broadcast %166 : vector<1x32xf32> to vector<16x32xf32>
    %188 = arith.addf %186, %187 : vector<16x32xf32>
    %c0_79 = arith.constant 0 : index
    %c0_80 = arith.constant 0 : index
    %189 = vector.load %arg17[%c0_79, %c0_80] : memref<16x32xf32, #tpu.memory_space<vmem>>, vector<16x32xf32>
    tpu.vector_store %arg17[%c0_79, %c0_80], %188 {strides = array<i32>} : memref<16x32xf32, #tpu.memory_space<vmem>>, vector<16x32xf32>,
    return
  }
  func.func @transform_0(%arg0: i32) -> (i32, i32) {
    %c0_i32 = arith.constant 0 : i32
    %c0_i32_0 = arith.constant 0 : i32
    %c0_i32_1 = arith.constant 0 : i32
    return %c0_i32, %c0_i32_0 : i32, i32
  }
  func.func @transform_1(%arg0: i32) -> (i32, i32) {
    %c0_i32 = arith.constant 0 : i32
    %c0_i32_0 = arith.constant 0 : i32
    %c0_i32_1 = arith.constant 0 : i32
    return %c0_i32, %c0_i32_0 : i32, i32
  }
  func.func @transform_2(%arg0: i32) -> (i32, i32) {
    %c0_i32 = arith.constant 0 : i32
    %c0_i32_0 = arith.constant 0 : i32
    %c0_i32_1 = arith.constant 0 : i32
    return %c0_i32, %c0_i32_0 : i32, i32
  }
  func.func @transform_3(%arg0: i32) -> (i32, i32) {
    %c0_i32 = arith.constant 0 : i32
    %c0_i32_0 = arith.constant 0 : i32
    %c0_i32_1 = arith.constant 0 : i32
    return %c0_i32, %c0_i32_0 : i32, i32
  }
  func.func @transform_4(%arg0: i32) -> (i32, i32, i32) {
    %c0_i32 = arith.constant 0 : i32
    %c0_i32_0 = arith.constant 0 : i32
    %c0_i32_1 = arith.constant 0 : i32
    return %arg0, %c0_i32, %c0_i32_0 : i32, i32, i32
  }
  func.func @transform_5(%arg0: i32) -> (i32, i32, i32) {
    %c0_i32 = arith.constant 0 : i32
    %c0_i32_0 = arith.constant 0 : i32
    %c0_i32_1 = arith.constant 0 : i32
    return %arg0, %c0_i32, %c0_i32_0 : i32, i32, i32
  }
  func.func @transform_6(%arg0: i32) -> (i32, i32, i32) {
    %c0_i32 = arith.constant 0 : i32
    %c0_i32_0 = arith.constant 0 : i32
    %c0_i32_1 = arith.constant 0 : i32
    return %arg0, %c0_i32, %c0_i32_0 : i32, i32, i32
  }
  func.func @transform_7(%arg0: i32) -> (i32, i32, i32) {
    %c0_i32 = arith.constant 0 : i32
    %c0_i32_0 = arith.constant 0 : i32
    %c0_i32_1 = arith.constant 0 : i32
    return %arg0, %c0_i32, %c0_i32_0 : i32, i32, i32
  }
  func.func @transform_8(%arg0: i32) -> (i32, i32, i32) {
    %c0_i32 = arith.constant 0 : i32
    %c0_i32_0 = arith.constant 0 : i32
    %c0_i32_1 = arith.constant 0 : i32
    return %arg0, %c0_i32, %c0_i32_0 : i32, i32, i32
  }
  func.func @transform_9(%arg0: i32) -> (i32, i32, i32) {
    %c0_i32 = arith.constant 0 : i32
    %c0_i32_0 = arith.constant 0 : i32
    %c0_i32_1 = arith.constant 0 : i32
    return %arg0, %c0_i32, %c0_i32_0 : i32, i32, i32
  }
  func.func @transform_10(%arg0: i32) -> (i32, i32, i32) {
    %c0_i32 = arith.constant 0 : i32
    %c0_i32_0 = arith.constant 0 : i32
    %c0_i32_1 = arith.constant 0 : i32
    return %arg0, %c0_i32, %c0_i32_0 : i32, i32, i32
  }
  func.func @transform_11(%arg0: i32) -> (i32, i32, i32) {
    %c0_i32 = arith.constant 0 : i32
    %c0_i32_0 = arith.constant 0 : i32
    %c0_i32_1 = arith.constant 0 : i32
    return %arg0, %c0_i32, %c0_i32_0 : i32, i32, i32
  }
  func.func @transform_12(%arg0: i32) -> (i32, i32, i32) {
    %c0_i32 = arith.constant 0 : i32
    %c0_i32_0 = arith.constant 0 : i32
    %c0_i32_1 = arith.constant 0 : i32
    return %arg0, %c0_i32, %c0_i32_0 : i32, i32, i32
  }
  func.func @transform_13(%arg0: i32) -> (i32, i32, i32) {
    %c0_i32 = arith.constant 0 : i32
    %c0_i32_0 = arith.constant 0 : i32
    %c0_i32_1 = arith.constant 0 : i32
    return %arg0, %c0_i32, %c0_i32_0 : i32, i32, i32
  }
  func.func @transform_14(%arg0: i32) -> (i32, i32, i32) {
    %c0_i32 = arith.constant 0 : i32
    %c0_i32_0 = arith.constant 0 : i32
    %c0_i32_1 = arith.constant 0 : i32
    return %arg0, %c0_i32, %c0_i32_0 : i32, i32, i32
  }
  func.func @transform_15(%arg0: i32) -> (i32, i32, i32) {
    %c0_i32 = arith.constant 0 : i32
    %c0_i32_0 = arith.constant 0 : i32
    %c0_i32_1 = arith.constant 0 : i32
    return %arg0, %c0_i32, %c0_i32_0 : i32, i32, i32
  }
  func.func @transform_16(%arg0: i32) -> (i32, i32) {
    %c0_i32 = arith.constant 0 : i32
    %c0_i32_0 = arith.constant 0 : i32
    %c0_i32_1 = arith.constant 0 : i32
    return %c0_i32, %c0_i32_0 : i32, i32
  }
}

</mosaic_0001>

<llo_original>
// kernel: _lambda_.3
$region0: #{_lambda_.3}
  #allocation0 [shape = 'u32[]', space=smem, size = 0x4, offset = 0x4, fixed_abs, tag = 'smem constant byte address 0x4 - core index']
  #allocation1 [shape = 'u32[144,128]{1,0:T(1,128)}', space=vmem, size = 0x12000, scoped, tag = 'internal scratch']
  %s0 = inlined_call_operand.vmem [shape: f32[2,8,32], index: 0, kind: input, shape index: {}]
  %s1 = inlined_call_operand.vmem [shape: f32[32,32], index: 1, kind: input, shape index: {}]
  %s2 = inlined_call_operand.vmem [shape: f32[1,32], index: 2, kind: input, shape index: {}]
  %s3 = inlined_call_operand.vmem [shape: f32[32,2], index: 3, kind: input, shape index: {}]
  %s4 = inlined_call_operand.vmem [shape: f32[1,2], index: 4, kind: input, shape index: {}]
  %s5 = inlined_call_operand.hbm [shape: f32[2,2], index: 5, kind: output, shape index: {}]
  %s6 = sld [smem:[#allocation0]]
  $region30: #{_lambda_.3} parent=0
    _
  %s8 = ssub.s32 1, %s6
  %s9 = scalar_select 0, %s8, %s6
  $region1: #{_lambda_.3} parent=0
    #allocation2 [shape = 'u8[1024]{0}', space=vmem, size = 0x400, scoped, tag = 'output window, operand 0, single buffered']
    #allocation3 [shape = 's32[1]{0}', space=sflag, size = 0x4, scoped, tag = 'scoped memory for _lambda_.3']
    %10 = vsyncpa [#allocation3], 0
    // Predicated region
    $region2: #{_lambda_.3} parent=1 // pred_check
      _
    $region3: #{_lambda_.3} parent=1 // pred_check_branch
      %12 = sbr.rel (0) target = $region5
    $region4: #{_lambda_.3} parent=1 // pred_region
      _
    $region5: #{_lambda_.3} parent=1 // pred_fallthru
      _
    // Predicated region
    $region6: #{_lambda_.3} parent=1 // pred_check
      _
    $region7: #{_lambda_.3} parent=1 // pred_check_branch
      %14 = sbr.rel (0) target = $region9
    $region8: #{_lambda_.3} parent=1 // pred_region
      _
    $region9: #{_lambda_.3} parent=1 // pred_fallthru
      _
    // Predicated region
    $region10: #{_lambda_.3} parent=1 // pred_check
      _
    $region11: #{_lambda_.3} parent=1 // pred_check_branch
      %16 = sbr.rel (0) target = $region13
    $region12: #{_lambda_.3} parent=1 // pred_region
      _
    $region13: #{_lambda_.3} parent=1 // pred_fallthru
      _
    // Predicated region
    $region14: #{_lambda_.3} parent=1 // pred_check
      _
    $region15: #{_lambda_.3} parent=1 // pred_check_branch
      %18 = sbr.rel (0) target = $region17
    $region16: #{_lambda_.3} parent=1 // pred_region
      _
    $region17: #{_lambda_.3} parent=1 // pred_fallthru
      _
    // Predicated region
    $region18: #{_lambda_.3} parent=1 // pred_check
      _
    $region19: #{_lambda_.3} parent=1 // pred_check_branch
      %20 = sbr.rel (0) target = $region21
    $region20: #{_lambda_.3} parent=1 // pred_region
      _
    $region21: #{_lambda_.3} parent=1 // pred_fallthru
      _
    %v21 = vld [vmem:[%s0] sm:$0xff]
    %v22 = vld [vmem:[%s0 + $0x8] sm:$0xff]
    %v23 = vld [vmem:[%s1] sm:$0xff]
    %v24 = vld [vmem:[%s1 + $0x8] sm:$0xff]
    %v25 = vld [vmem:[%s1 + $0x10] sm:$0xff]
    %v26 = vld [vmem:[%s1 + $0x18] sm:$0xff]
    %v27 = vld [vmem:[%s2] sm:$0x1]
    %v29 = vlaneseq
    %v30 = vshrl.u32 %v29, 7
    %v31 = vsub.s32 0, %v30
    %v32 = vrot.slane %v27, %v31
    %v36 = vrot.slane %v22, 7
    %vm37 = vcmask 1041409
    %v38 = vsel %vm37, %v36, %v21
    %vm39 = vcmask 261120
    %v40 = vsel %vm39, %v38, 0
    %42 = vmatprep.subr.mxu0 0.0
    %43 = vmatpush1.msra.mxu0 0.0
    %44 = vmatprep.subr.mxu0 0.0
    %45 = vmatpush1.msra.mxu0 0.0
    %46 = vmatprep.subr.mxu0 0.0
    %47 = vmatpush1.msra.mxu0 0.0
    %48 = vmatprep.subr.mxu0 0.0
    %49 = vmatpush1.msra.mxu0 0.0
    %50 = vmatprep.subr.mxu0 0.0
    %51 = vmatpush1.msra.mxu0 0.0
    %52 = vmatprep.subr.mxu0 0.0
    %53 = vmatpush1.msra.mxu0 0.0
    %54 = vmatprep.subr.mxu0 0.0
    %55 = vmatpush1.msra.mxu0 0.0
    %56 = vmatprep.subr.mxu0 0.0
    %57 = vmatpush1.msra.mxu0 0.0
    %58 = vmatprep.subr.mxu0 0.0
    %59 = vmatpush1.msra.mxu0 0.0
    %60 = vmatprep.subr.mxu0 0.0
    %61 = vmatpush1.msra.mxu0 0.0
    %62 = vmatprep.subr.mxu0 0.0
    %63 = vmatpush1.msra.mxu0 0.0
    %64 = vmatprep.subr.mxu0 0.0
    %65 = vmatpush1.msra.mxu0 0.0
    %66 = vmatprep.subr.mxu0 0.0
    %67 = vmatpush1.msra.mxu0 %v26
    %68 = vmatprep.subr.mxu0 0.0
    %69 = vmatpush1.msra.mxu0 %v25
    %70 = vmatprep.subr.mxu0 0.0
    %71 = vmatpush1.msra.mxu0 %v24
    %72 = vmatprep.subr.mxu0 0.0
    %73 = vmatpush1.msra.mxu0 %v23
    %74 = vmatprep.subr.mxu0 0.0
    %75 = vmatpush2.msra.mxu0 0.0
    %76 = vmatprep.subr.mxu0 0.0
    %77 = vmatpush2.msra.mxu0 0.0
    %78 = vmatprep.subr.mxu0 0.0
    %79 = vmatpush2.msra.mxu0 0.0
    %80 = vmatprep.subr.mxu0 0.0
    %81 = vmatpush2.msra.mxu0 0.0
    %82 = vmatprep.subr.mxu0 0.0
    %83 = vmatpush2.msra.mxu0 0.0
    %84 = vmatprep.subr.mxu0 0.0
    %85 = vmatpush2.msra.mxu0 0.0
    %86 = vmatprep.subr.mxu0 0.0
    %87 = vmatpush2.msra.mxu0 0.0
    %88 = vmatprep.subr.mxu0 0.0
    %89 = vmatpush2.msra.mxu0 0.0
    %90 = vmatprep.subr.mxu0 0.0
    %91 = vmatpush2.msra.mxu0 0.0
    %92 = vmatprep.subr.mxu0 0.0
    %93 = vmatpush2.msra.mxu0 0.0
    %94 = vmatprep.subr.mxu0 0.0
    %95 = vmatpush2.msra.mxu0 0.0
    %96 = vmatprep.subr.mxu0 0.0
    %97 = vmatpush2.msra.mxu0 0.0
    %98 = vmatprep.subr.mxu0 0.0
    %99 = vmatpush2.msra.mxu0 0.0
    %100 = vmatprep.subr.mxu0 0.0
    %101 = vmatpush2.msra.mxu0 0.0
    %102 = vmatprep.subr.mxu0 0.0
    %103 = vmatpush2.msra.mxu0 0.0
    %104 = vmatprep.subr.mxu0 0.0
    %105 = vmatpush2.msra.mxu0 0.0
    %106 = vmatprep.mubr.f32.mxu0 0.0
    %107 = vmatmul.mubr.f32.gmra.mxu0 %v40
    %v108 = vpop.f32.mrf.mxu0
    %v109 = vadd.f32 %v32, %v108
    %v110 = vpop.f32.mrf.mxu0
    %111 = vdwg.mxu0
    %v112 = vtanh.pop %v109
    %v113 = vld [vmem:[%s3] sm:$0xff]
    %v114 = vld [vmem:[%s3 + $0x8] sm:$0xff]
    %v115 = vld [vmem:[%s3 + $0x10] sm:$0xff]
    %v116 = vld [vmem:[%s3 + $0x18] sm:$0xff]
    %v117 = vld [vmem:[%s4] sm:$0x1]
    %v119 = vlaneseq
    %v120 = vshrl.u32 %v119, 7
    %v121 = vsub.s32 0, %v120
    %v122 = vrot.slane %v117, %v121
    %v125 = vsel %vm39, %v112, 0
    %127 = vmatprep.subr.mxu0 0.0
    %128 = vmatpush1.msra.mxu0 0.0
    %129 = vmatprep.subr.mxu0 0.0
    %130 = vmatpush1.msra.mxu0 0.0
    %131 = vmatprep.subr.mxu0 0.0
    %132 = vmatpush1.msra.mxu0 0.0
    %133 = vmatprep.subr.mxu0 0.0
    %134 = vmatpush1.msra.mxu0 0.0
    %135 = vmatprep.subr.mxu0 0.0
    %136 = vmatpush1.msra.mxu0 0.0
    %137 = vmatprep.subr.mxu0 0.0
    %138 = vmatpush1.msra.mxu0 0.0
    %139 = vmatprep.subr.mxu0 0.0
    %140 = vmatpush1.msra.mxu0 0.0
    %141 = vmatprep.subr.mxu0 0.0
    %142 = vmatpush1.msra.mxu0 0.0
    %143 = vmatprep.subr.mxu0 0.0
    %144 = vmatpush1.msra.mxu0 0.0
    %145 = vmatprep.subr.mxu0 0.0
    %146 = vmatpush1.msra.mxu0 0.0
    %147 = vmatprep.subr.mxu0 0.0
    %148 = vmatpush1.msra.mxu0 0.0
    %149 = vmatprep.subr.mxu0 0.0
    %150 = vmatpush1.msra.mxu0 0.0
    %151 = vmatprep.subr.mxu0 0.0
    %152 = vmatpush1.msra.mxu0 %v116
    %153 = vmatprep.subr.mxu0 0.0
    %154 = vmatpush1.msra.mxu0 %v115
    %155 = vmatprep.subr.mxu0 0.0
    %156 = vmatpush1.msra.mxu0 %v114
    %157 = vmatprep.subr.mxu0 0.0
    %158 = vmatpush1.msra.mxu0 %v113
    %159 = vmatprep.subr.mxu0 0.0
    %160 = vmatpush2.msra.mxu0 0.0
    %161 = vmatprep.subr.mxu0 0.0
    %162 = vmatpush2.msra.mxu0 0.0
    %163 = vmatprep.subr.mxu0 0.0
    %164 = vmatpush2.msra.mxu0 0.0
    %165 = vmatprep.subr.mxu0 0.0
    %166 = vmatpush2.msra.mxu0 0.0
    %167 = vmatprep.subr.mxu0 0.0
    %168 = vmatpush2.msra.mxu0 0.0
    %169 = vmatprep.subr.mxu0 0.0
    %170 = vmatpush2.msra.mxu0 0.0
    %171 = vmatprep.subr.mxu0 0.0
    %172 = vmatpush2.msra.mxu0 0.0
    %173 = vmatprep.subr.mxu0 0.0
    %174 = vmatpush2.msra.mxu0 0.0
    %175 = vmatprep.subr.mxu0 0.0
    %176 = vmatpush2.msra.mxu0 0.0
    %177 = vmatprep.subr.mxu0 0.0
    %178 = vmatpush2.msra.mxu0 0.0
    %179 = vmatprep.subr.mxu0 0.0
    %180 = vmatpush2.msra.mxu0 0.0
    %181 = vmatprep.subr.mxu0 0.0
    %182 = vmatpush2.msra.mxu0 0.0
    %183 = vmatprep.subr.mxu0 0.0
    %184 = vmatpush2.msra.mxu0 0.0
    %185 = vmatprep.subr.mxu0 0.0
    %186 = vmatpush2.msra.mxu0 0.0
    %187 = vmatprep.subr.mxu0 0.0
    %188 = vmatpush2.msra.mxu0 0.0
    %189 = vmatprep.subr.mxu0 0.0
    %190 = vmatpush2.msra.mxu0 0.0
    %191 = vmatprep.mubr.f32.mxu0 0.0
    %192 = vmatmul.mubr.f32.gmra.mxu0 %v125
    %v193 = vpop.f32.mrf.mxu0
    %v194 = vadd.f32 %v122, %v193
    %v195 = vpop.f32.mrf.mxu0
    %196 = vdwg.mxu0
    %vm197 = vcmask 9216
    %198 = vst.msk [vmem:[#allocation2] sm:$0x3] %vm197, %v194
    // Predicated region
    $region22: #{_lambda_.3} parent=1 // pred_check
      _
    $region23: #{_lambda_.3} parent=1 // pred_check_branch
      %200 = sbr.rel (0) target = $region25
    $region24: #{_lambda_.3} parent=1 // pred_region
      %s202 = ssub.s32 32, 32
      %203 = vsyncadd [#allocation3], %s202
      %s205 = sshll.u32 [#allocation2], 4
      %s206 = int_to_ptr.vmem [resolvable:$true] %s205
      %208 = dma.vmem_to_hbm [thread:$0]  %s206, 32, %s5, [#allocation3]
    $region25: #{_lambda_.3} parent=1 // pred_fallthru
      _
    // Predicated region
    $region26: #{_lambda_.3} parent=1 // pred_check
      _
    $region27: #{_lambda_.3} parent=1 // pred_check_branch
      %210 = sbr.rel (0) target = $region29
    $region28: #{_lambda_.3} parent=1 // pred_region
      %211 = dma.done [#allocation3], 32
    $region29: #{_lambda_.3} parent=1 // pred_fallthru
      _
    %212 = vsyncpa [#allocation3], 1

// kernel: _lambda_.2
$region0: #{_lambda_.2}
  #allocation0 [shape = 'u32[]', space=smem, size = 0x4, offset = 0x4, fixed_abs, tag = 'smem constant byte address 0x4 - core index']
  #allocation1 [shape = 'u32[144,128]{1,0:T(1,128)}', space=vmem, size = 0x12000, scoped, tag = 'internal scratch']
  %s0 = inlined_call_operand.vmem [shape: f32[16,32], index: 0, kind: input, shape index: {}]
  %s1 = inlined_call_operand.vmem [shape: f32[2,8], index: 1, kind: input, shape index: {}]
  %s2 = inlined_call_operand.vmem [shape: f32[1,32], index: 2, kind: input, shape index: {}]
  %s3 = inlined_call_operand.vmem [shape: f32[1,32], index: 3, kind: input, shape index: {}]
  %s4 = inlined_call_operand.vmem [shape: f32[2,32,96], index: 4, kind: input, shape index: {}]
  %s5 = inlined_call_operand.vmem [shape: f32[2,1,96], index: 5, kind: input, shape index: {}]
  %s6 = inlined_call_operand.hbm [shape: f32[2,32,32], index: 6, kind: input, shape index: {}]
  %s7 = inlined_call_operand.vmem [shape: f32[2,1,32], index: 7, kind: input, shape index: {}, may-alias: {7,9,13,15}]
  %s8 = inlined_call_operand.vmem [shape: f32[2,1,32], index: 8, kind: input, shape index: {}, may-alias: {8,14}]
  %s9 = inlined_call_operand.vmem [shape: f32[2,1,32], index: 9, kind: input, shape index: {}, may-alias: {7,9,13,15}]
  %s10 = inlined_call_operand.hbm [shape: f32[2,32,64], index: 10, kind: input, shape index: {}]
  %s11 = inlined_call_operand.vmem [shape: f32[2,1,64], index: 11, kind: input, shape index: {}]
  %s12 = inlined_call_operand.vmem [shape: f32[2,64,32], index: 12, kind: input, shape index: {}]
  %s13 = inlined_call_operand.vmem [shape: f32[2,1,32], index: 13, kind: input, shape index: {}, may-alias: {7,9,13,15}]
  %s14 = inlined_call_operand.vmem [shape: f32[2,1,32], index: 14, kind: input, shape index: {}, may-alias: {8,14}]
  %s15 = inlined_call_operand.vmem [shape: f32[2,1,32], index: 15, kind: input, shape index: {}, may-alias: {7,9,13,15}]
  %s16 = inlined_call_operand.vmem [shape: f32[16,32], index: 16, kind: output, shape index: {}]
  %s17 = sld [smem:[#allocation0]]
  $region109: #{_lambda_.2} parent=0
    _
  %s19 = ssub.s32 1, %s17
  %s20 = scalar_select 0, %s19, %s17
  $region1: #{_lambda_.2} parent=0
    #allocation2 [shape = 'u8[32768]{0}', space=vmem, size = 0x8000, scoped, tag = 'input window, operand 6']
    #allocation3 [shape = 's32[2]{0}', space=sflag, size = 0x8, scoped, tag = 'scoped memory for _lambda_.2']
    #allocation4 [shape = 'u8[32768]{0}', space=vmem, size = 0x8000, scoped, tag = 'input window, operand 10']
    #allocation5 [shape = 's32[2]{0}', space=sflag, size = 0x8, scoped, tag = 'scoped memory for _lambda_.2']
    %21 = vsyncpa [#allocation3], 0
    %s22 = scalar_lea.sflag [#allocation3], 1
    %23 = vsyncpa %s22, 0
    %24 = vsyncpa [#allocation5], 0
    %s25 = scalar_lea.sflag [#allocation5], 1
    %26 = vsyncpa %s25, 0
    loop: start=0, step=1, limit=4
    $region2: #{_lambda_.2} parent=1 // loop_pre_header
      _
    $region3: #{_lambda_.2} parent=1 // loop_header
      %s28 = sphi 0, %s32
      %p29 = scmp.ge.s32.totalorder %s28, 4
      %s36 = sphi 0, %s36
      %s38 = sphi 0, %s36
      %s39 = sphi 0, %s38
      %s53 = sphi 0, %s39
      %s57 = sphi 0, %s57
      %s59 = sphi 0, %s57
      %s60 = sphi 0, %s59
      %s74 = sphi 0, %s60
      %s78 = sphi 0, %s78
      %s80 = sphi 0, %s78
      %s81 = sphi 0, %s80
      %s95 = sphi 0, %s81
      %s99 = sphi 0, %s99
      %s101 = sphi 0, %s99
      %s102 = sphi 0, %s101
      %s116 = sphi 0, %s102
      %s122 = sphi 0, %s124
      %s125 = sphi 0, %s122
      %s126 = sphi 0, %s125
      %s142 = sphi 0, %s126
      %s148 = sphi 0, %s150
      %s151 = sphi 0, %s148
      %s152 = sphi 0, %s151
      %s168 = sphi 0, %s152
      %s174 = sphi 0, %s176
      %s177 = sphi 0, %s174
      %s178 = sphi 0, %s177
      %s194 = sphi 0, %s178
      %s200 = sphi 0, %s202
      %s203 = sphi 0, %s200
      %s204 = sphi 0, %s203
      %s220 = sphi 0, %s204
      %s226 = sphi 0, %s228
      %s229 = sphi 0, %s226
      %s230 = sphi 0, %s229
      %s246 = sphi 0, %s230
      %s252 = sphi 0, %s254
      %s255 = sphi 0, %s252
      %s256 = sphi 0, %s255
      %s272 = sphi 0, %s256
      %s278 = sphi 0, %s280
      %s281 = sphi 0, %s278
      %s282 = sphi 0, %s281
      %s298 = sphi 0, %s282
      %s304 = sphi 0, %s306
      %s307 = sphi 0, %s304
      %s308 = sphi 0, %s307
      %s324 = sphi 0, %s308
      %s330 = sphi 0, %s332
      %s333 = sphi 0, %s330
      %s334 = sphi 0, %s333
      %s350 = sphi 0, %s334
      %s356 = sphi 0, %s358
      %s359 = sphi 0, %s356
      %s360 = sphi 0, %s359
      %s376 = sphi 0, %s360
      %s382 = sphi 0, %s384
      %s385 = sphi 0, %s382
      %s386 = sphi 0, %s385
      %s402 = sphi 0, %s386
      %s408 = sphi 0, %s410
      %s411 = sphi 0, %s408
      %s412 = sphi 0, %s411
      %s428 = sphi 0, %s412
      %s432 = sphi 0, %s432
      %s434 = sphi 0, %s432
      %s435 = sphi 0, %s434
      %s449 = sphi 0, %s435
    $region4: #{_lambda_.2} parent=1 // loop_header_branch
      %31 = sbr.rel (%p29) target = $region8
    $region5: #{_lambda_.2} parent=1 // loop_body
      %s33 = ssub.s32 %s28, 1
      %s34 = ssub.s32 %s28, 2
      %s35 = sadd.s32 %s28, 1
      %s37 = sadd.s32 %s36, 1
      %p40 = scmp.eq.s32.totalorder %s28, 1
      %p41 = scmp.ne.s32.totalorder %s36, %s38
      %p42 = scmp.eq.s32.totalorder %s28, 0
      %p43 = por %p41, %p42
      %p44 = scmp.ne.s32.totalorder %s36, %s38
      %p45 = scmp.eq.s32.totalorder %s33, 1
      %p46 = por %p44, %p45
      %p47 = scmp.ne.s32.totalorder %s38, %s39
      %p48 = scmp.eq.s32.totalorder %s33, 0
      %p49 = por %p47, %p48
      %p50 = scmp.ne.s32.totalorder %s38, %s39
      %p51 = scmp.eq.s32.totalorder %s34, 1
      %p52 = por %p50, %p51
      %p54 = scmp.ne.s32.totalorder %s39, %s53
      %p55 = scmp.eq.s32.totalorder %s34, 0
      %p56 = por %p54, %p55
      %s58 = sadd.s32 %s57, 1
      %p61 = scmp.eq.s32.totalorder %s28, 1
      %p62 = scmp.ne.s32.totalorder %s57, %s59
      %p63 = scmp.eq.s32.totalorder %s28, 0
      %p64 = por %p62, %p63
      %p65 = scmp.ne.s32.totalorder %s57, %s59
      %p66 = scmp.eq.s32.totalorder %s33, 1
      %p67 = por %p65, %p66
      %p68 = scmp.ne.s32.totalorder %s59, %s60
      %p69 = scmp.eq.s32.totalorder %s33, 0
      %p70 = por %p68, %p69
      %p71 = scmp.ne.s32.totalorder %s59, %s60
      %p72 = scmp.eq.s32.totalorder %s34, 1
      %p73 = por %p71, %p72
      %p75 = scmp.ne.s32.totalorder %s60, %s74
      %p76 = scmp.eq.s32.totalorder %s34, 0
      %p77 = por %p75, %p76
      %s79 = sadd.s32 %s78, 1
      %p82 = scmp.eq.s32.totalorder %s28, 1
      %p83 = scmp.ne.s32.totalorder %s78, %s80
      %p84 = scmp.eq.s32.totalorder %s28, 0
      %p85 = por %p83, %p84
      %p86 = scmp.ne.s32.totalorder %s78, %s80
      %p87 = scmp.eq.s32.totalorder %s33, 1
      %p88 = por %p86, %p87
      %p89 = scmp.ne.s32.totalorder %s80, %s81
      %p90 = scmp.eq.s32.totalorder %s33, 0
      %p91 = por %p89, %p90
      %p92 = scmp.ne.s32.totalorder %s80, %s81
      %p93 = scmp.eq.s32.totalorder %s34, 1
      %p94 = por %p92, %p93
      %p96 = scmp.ne.s32.totalorder %s81, %s95
      %p97 = scmp.eq.s32.totalorder %s34, 0
      %p98 = por %p96, %p97
      %s100 = sadd.s32 %s99, 1
      %p103 = scmp.eq.s32.totalorder %s28, 1
      %p104 = scmp.ne.s32.totalorder %s99, %s101
      %p105 = scmp.eq.s32.totalorder %s28, 0
      %p106 = por %p104, %p105
      %p107 = scmp.ne.s32.totalorder %s99, %s101
      %p108 = scmp.eq.s32.totalorder %s33, 1
      %p109 = por %p107, %p108
      %p110 = scmp.ne.s32.totalorder %s101, %s102
      %p111 = scmp.eq.s32.totalorder %s33, 0
      %p112 = por %p110, %p111
      %p113 = scmp.ne.s32.totalorder %s101, %s102
      %p114 = scmp.eq.s32.totalorder %s34, 1
      %p115 = por %p113, %p114
      %p117 = scmp.ne.s32.totalorder %s102, %s116
      %p118 = scmp.eq.s32.totalorder %s34, 0
      %p119 = por %p117, %p118
      %s120 = ssub.s32 %s28, %s35
      %p121 = scmp.eq.s32.totalorder %s120, 0
      %s123 = sadd.s32 %s122, 1
      %s124 = scalar_select %p121, %s122, %s123
      %p127 = pneg %p121
      %p128 = scmp.eq.s32.totalorder %s28, 1
      %p129 = por %p127, %p128
      %p130 = scmp.ne.s32.totalorder %s122, %s125
      %p131 = scmp.eq.s32.totalorder %s28, 0
      %p132 = por %p130, %p131
      %p133 = scmp.ne.s32.totalorder %s122, %s125
      %p134 = scmp.eq.s32.totalorder %s33, 1
      %p135 = por %p133, %p134
      %p136 = scmp.ne.s32.totalorder %s125, %s126
      %p137 = scmp.eq.s32.totalorder %s33, 0
      %p138 = por %p136, %p137
      %p139 = scmp.ne.s32.totalorder %s125, %s126
      %p140 = scmp.eq.s32.totalorder %s34, 1
      %p141 = por %p139, %p140
      %p143 = scmp.ne.s32.totalorder %s126, %s142
      %p144 = scmp.eq.s32.totalorder %s34, 0
      %p145 = por %p143, %p144
      %s146 = ssub.s32 %s28, %s35
      %p147 = scmp.eq.s32.totalorder %s146, 0
      %s149 = sadd.s32 %s148, 1
      %s150 = scalar_select %p147, %s148, %s149
      %p153 = pneg %p147
      %p154 = scmp.eq.s32.totalorder %s28, 1
      %p155 = por %p153, %p154
      %p156 = scmp.ne.s32.totalorder %s148, %s151
      %p157 = scmp.eq.s32.totalorder %s28, 0
      %p158 = por %p156, %p157
      %p159 = scmp.ne.s32.totalorder %s148, %s151
      %p160 = scmp.eq.s32.totalorder %s33, 1
      %p161 = por %p159, %p160
      %p162 = scmp.ne.s32.totalorder %s151, %s152
      %p163 = scmp.eq.s32.totalorder %s33, 0
      %p164 = por %p162, %p163
      %p165 = scmp.ne.s32.totalorder %s151, %s152
      %p166 = scmp.eq.s32.totalorder %s34, 1
      %p167 = por %p165, %p166
      %p169 = scmp.ne.s32.totalorder %s152, %s168
      %p170 = scmp.eq.s32.totalorder %s34, 0
      %p171 = por %p169, %p170
      %s172 = ssub.s32 %s28, %s35
      %p173 = scmp.eq.s32.totalorder %s172, 0
      %s175 = sadd.s32 %s174, 1
      %s176 = scalar_select %p173, %s174, %s175
      %p179 = pneg %p173
      %p180 = scmp.eq.s32.totalorder %s28, 1
      %p181 = por %p179, %p180
      %p182 = scmp.ne.s32.totalorder %s174, %s177
      %p183 = scmp.eq.s32.totalorder %s28, 0
      %p184 = por %p182, %p183
      %p185 = scmp.ne.s32.totalorder %s174, %s177
      %p186 = scmp.eq.s32.totalorder %s33, 1
      %p187 = por %p185, %p186
      %p188 = scmp.ne.s32.totalorder %s177, %s178
      %p189 = scmp.eq.s32.totalorder %s33, 0
      %p190 = por %p188, %p189
      %p191 = scmp.ne.s32.totalorder %s177, %s178
      %p192 = scmp.eq.s32.totalorder %s34, 1
      %p193 = por %p191, %p192
      %p195 = scmp.ne.s32.totalorder %s178, %s194
      %p196 = scmp.eq.s32.totalorder %s34, 0
      %p197 = por %p195, %p196
      %s198 = ssub.s32 %s28, %s35
      %p199 = scmp.eq.s32.totalorder %s198, 0
      %s201 = sadd.s32 %s200, 1
      %s202 = scalar_select %p199, %s200, %s201
      %p205 = pneg %p199
      %p206 = scmp.eq.s32.totalorder %s28, 1
      %p207 = por %p205, %p206
      %p208 = scmp.ne.s32.totalorder %s200, %s203
      %p209 = scmp.eq.s32.totalorder %s28, 0
      %p210 = por %p208, %p209
      %p211 = scmp.ne.s32.totalorder %s200, %s203
      %p212 = scmp.eq.s32.totalorder %s33, 1
      %p213 = por %p211, %p212
      %p214 = scmp.ne.s32.totalorder %s203, %s204
      %p215 = scmp.eq.s32.totalorder %s33, 0
      %p216 = por %p214, %p215
      %p217 = scmp.ne.s32.totalorder %s203, %s204
      %p218 = scmp.eq.s32.totalorder %s34, 1
      %p219 = por %p217, %p218
      %p221 = scmp.ne.s32.totalorder %s204, %s220
      %p222 = scmp.eq.s32.totalorder %s34, 0
      %p223 = por %p221, %p222
      %s224 = ssub.s32 %s28, %s35
      %p225 = scmp.eq.s32.totalorder %s224, 0
      %s227 = sadd.s32 %s226, 1
      %s228 = scalar_select %p225, %s226, %s227
      %p231 = pneg %p225
      %p232 = scmp.eq.s32.totalorder %s28, 1
      %p233 = por %p231, %p232
      %p234 = scmp.ne.s32.totalorder %s226, %s229
      %p235 = scmp.eq.s32.totalorder %s28, 0
      %p236 = por %p234, %p235
      %p237 = scmp.ne.s32.totalorder %s226, %s229
      %p238 = scmp.eq.s32.totalorder %s33, 1
      %p239 = por %p237, %p238
      %p240 = scmp.ne.s32.totalorder %s229, %s230
      %p241 = scmp.eq.s32.totalorder %s33, 0
      %p242 = por %p240, %p241
      %p243 = scmp.ne.s32.totalorder %s229, %s230
      %p244 = scmp.eq.s32.totalorder %s34, 1
      %p245 = por %p243, %p244
      %p247 = scmp.ne.s32.totalorder %s230, %s246
      %p248 = scmp.eq.s32.totalorder %s34, 0
      %p249 = por %p247, %p248
      %s250 = ssub.s32 %s28, %s35
      %p251 = scmp.eq.s32.totalorder %s250, 0
      %s253 = sadd.s32 %s252, 1
      %s254 = scalar_select %p251, %s252, %s253
      %p257 = pneg %p251
      %p258 = scmp.eq.s32.totalorder %s28, 1
      %p259 = por %p257, %p258
      %p260 = scmp.ne.s32.totalorder %s252, %s255
      %p261 = scmp.eq.s32.totalorder %s28, 0
      %p262 = por %p260, %p261
      %p263 = scmp.ne.s32.totalorder %s252, %s255
      %p264 = scmp.eq.s32.totalorder %s33, 1
      %p265 = por %p263, %p264
      %p266 = scmp.ne.s32.totalorder %s255, %s256
      %p267 = scmp.eq.s32.totalorder %s33, 0
      %p268 = por %p266, %p267
      %p269 = scmp.ne.s32.totalorder %s255, %s256
      %p270 = scmp.eq.s32.totalorder %s34, 1
      %p271 = por %p269, %p270
      %p273 = scmp.ne.s32.totalorder %s256, %s272
      %p274 = scmp.eq.s32.totalorder %s34, 0
      %p275 = por %p273, %p274
      %s276 = ssub.s32 %s28, %s35
      %p277 = scmp.eq.s32.totalorder %s276, 0
      %s279 = sadd.s32 %s278, 1
      %s280 = scalar_select %p277, %s278, %s279
      %p283 = pneg %p277
      %p284 = scmp.eq.s32.totalorder %s28, 1
      %p285 = por %p283, %p284
      %p286 = scmp.ne.s32.totalorder %s278, %s281
      %p287 = scmp.eq.s32.totalorder %s28, 0
      %p288 = por %p286, %p287
      %p289 = scmp.ne.s32.totalorder %s278, %s281
      %p290 = scmp.eq.s32.totalorder %s33, 1
      %p291 = por %p289, %p290
      %p292 = scmp.ne.s32.totalorder %s281, %s282
      %p293 = scmp.eq.s32.totalorder %s33, 0
      %p294 = por %p292, %p293
      %p295 = scmp.ne.s32.totalorder %s281, %s282
      %p296 = scmp.eq.s32.totalorder %s34, 1
      %p297 = por %p295, %p296
      %p299 = scmp.ne.s32.totalorder %s282, %s298
      %p300 = scmp.eq.s32.totalorder %s34, 0
      %p301 = por %p299, %p300
      %s302 = ssub.s32 %s28, %s35
      %p303 = scmp.eq.s32.totalorder %s302, 0
      %s305 = sadd.s32 %s304, 1
      %s306 = scalar_select %p303, %s304, %s305
      %p309 = pneg %p303
      %p310 = scmp.eq.s32.totalorder %s28, 1
      %p311 = por %p309, %p310
      %p312 = scmp.ne.s32.totalorder %s304, %s307
      %p313 = scmp.eq.s32.totalorder %s28, 0
      %p314 = por %p312, %p313
      %p315 = scmp.ne.s32.totalorder %s304, %s307
      %p316 = scmp.eq.s32.totalorder %s33, 1
      %p317 = por %p315, %p316
      %p318 = scmp.ne.s32.totalorder %s307, %s308
      %p319 = scmp.eq.s32.totalorder %s33, 0
      %p320 = por %p318, %p319
      %p321 = scmp.ne.s32.totalorder %s307, %s308
      %p322 = scmp.eq.s32.totalorder %s34, 1
      %p323 = por %p321, %p322
      %p325 = scmp.ne.s32.totalorder %s308, %s324
      %p326 = scmp.eq.s32.totalorder %s34, 0
      %p327 = por %p325, %p326
      %s328 = ssub.s32 %s28, %s35
      %p329 = scmp.eq.s32.totalorder %s328, 0
      %s331 = sadd.s32 %s330, 1
      %s332 = scalar_select %p329, %s330, %s331
      %p335 = pneg %p329
      %p336 = scmp.eq.s32.totalorder %s28, 1
      %p337 = por %p335, %p336
      %p338 = scmp.ne.s32.totalorder %s330, %s333
      %p339 = scmp.eq.s32.totalorder %s28, 0
      %p340 = por %p338, %p339
      %p341 = scmp.ne.s32.totalorder %s330, %s333
      %p342 = scmp.eq.s32.totalorder %s33, 1
      %p343 = por %p341, %p342
      %p344 = scmp.ne.s32.totalorder %s333, %s334
      %p345 = scmp.eq.s32.totalorder %s33, 0
      %p346 = por %p344, %p345
      %p347 = scmp.ne.s32.totalorder %s333, %s334
      %p348 = scmp.eq.s32.totalorder %s34, 1
      %p349 = por %p347, %p348
      %p351 = scmp.ne.s32.totalorder %s334, %s350
      %p352 = scmp.eq.s32.totalorder %s34, 0
      %p353 = por %p351, %p352
      %s354 = ssub.s32 %s28, %s35
      %p355 = scmp.eq.s32.totalorder %s354, 0
      %s357 = sadd.s32 %s356, 1
      %s358 = scalar_select %p355, %s356, %s357
      %p361 = pneg %p355
      %p362 = scmp.eq.s32.totalorder %s28, 1
      %p363 = por %p361, %p362
      %p364 = scmp.ne.s32.totalorder %s356, %s359
      %p365 = scmp.eq.s32.totalorder %s28, 0
      %p366 = por %p364, %p365
      %p367 = scmp.ne.s32.totalorder %s356, %s359
      %p368 = scmp.eq.s32.totalorder %s33, 1
      %p369 = por %p367, %p368
      %p370 = scmp.ne.s32.totalorder %s359, %s360
      %p371 = scmp.eq.s32.totalorder %s33, 0
      %p372 = por %p370, %p371
      %p373 = scmp.ne.s32.totalorder %s359, %s360
      %p374 = scmp.eq.s32.totalorder %s34, 1
      %p375 = por %p373, %p374
      %p377 = scmp.ne.s32.totalorder %s360, %s376
      %p378 = scmp.eq.s32.totalorder %s34, 0
      %p379 = por %p377, %p378
      %s380 = ssub.s32 %s28, %s35
      %p381 = scmp.eq.s32.totalorder %s380, 0
      %s383 = sadd.s32 %s382, 1
      %s384 = scalar_select %p381, %s382, %s383
      %p387 = pneg %p381
      %p388 = scmp.eq.s32.totalorder %s28, 1
      %p389 = por %p387, %p388
      %p390 = scmp.ne.s32.totalorder %s382, %s385
      %p391 = scmp.eq.s32.totalorder %s28, 0
      %p392 = por %p390, %p391
      %p393 = scmp.ne.s32.totalorder %s382, %s385
      %p394 = scmp.eq.s32.totalorder %s33, 1
      %p395 = por %p393, %p394
      %p396 = scmp.ne.s32.totalorder %s385, %s386
      %p397 = scmp.eq.s32.totalorder %s33, 0
      %p398 = por %p396, %p397
      %p399 = scmp.ne.s32.totalorder %s385, %s386
      %p400 = scmp.eq.s32.totalorder %s34, 1
      %p401 = por %p399, %p400
      %p403 = scmp.ne.s32.totalorder %s386, %s402
      %p404 = scmp.eq.s32.totalorder %s34, 0
      %p405 = por %p403, %p404
      %s406 = ssub.s32 %s28, %s35
      %p407 = scmp.eq.s32.totalorder %s406, 0
      %s409 = sadd.s32 %s408, 1
      %s410 = scalar_select %p407, %s408, %s409
      %p413 = pneg %p407
      %p414 = scmp.eq.s32.totalorder %s28, 1
      %p415 = por %p413, %p414
      %p416 = scmp.ne.s32.totalorder %s408, %s411
      %p417 = scmp.eq.s32.totalorder %s28, 0
      %p418 = por %p416, %p417
      %p419 = scmp.ne.s32.totalorder %s408, %s411
      %p420 = scmp.eq.s32.totalorder %s33, 1
      %p421 = por %p419, %p420
      %p422 = scmp.ne.s32.totalorder %s411, %s412
      %p423 = scmp.eq.s32.totalorder %s33, 0
      %p424 = por %p422, %p423
      %p425 = scmp.ne.s32.totalorder %s411, %s412
      %p426 = scmp.eq.s32.totalorder %s34, 1
      %p427 = por %p425, %p426
      %p429 = scmp.ne.s32.totalorder %s412, %s428
      %p430 = scmp.eq.s32.totalorder %s34, 0
      %p431 = por %p429, %p430
      %s433 = sadd.s32 %s432, 1
      %p436 = scmp.eq.s32.totalorder %s28, 1
      %p437 = scmp.ne.s32.totalorder %s432, %s434
      %p438 = scmp.eq.s32.totalorder %s28, 0
      %p439 = por %p437, %p438
      %p440 = scmp.ne.s32.totalorder %s432, %s434
      %p441 = scmp.eq.s32.totalorder %s33, 1
      %p442 = por %p440, %p441
      %p443 = scmp.ne.s32.totalorder %s434, %s435
      %p444 = scmp.eq.s32.totalorder %s33, 0
      %p445 = por %p443, %p444
      %p446 = scmp.ne.s32.totalorder %s434, %s435
      %p447 = scmp.eq.s32.totalorder %s34, 1
      %p448 = por %p446, %p447
      %p450 = scmp.ne.s32.totalorder %s435, %s449
      %p451 = scmp.eq.s32.totalorder %s34, 0
      %p452 = por %p450, %p451
      %p453 = scmp.le.s32.totalorder 1, %s28
      %p454 = scmp.lt.s32.totalorder %s28, 3
      %p455 = pnand %p453, %p454
      %p456 = pneg %p455
      // Predicated region
      $region9: #{_lambda_.2} parent=5 // pred_check
        _
      $region10: #{_lambda_.2} parent=5 // pred_check_branch
        %458 = sbr.rel (%p455) target = $region12
      $region11: #{_lambda_.2} parent=5 // pred_region
        %s459 = ssub.s32 %s28, 1
        // Predicated region
        $region13: #{_lambda_.2} parent=11 // pred_check
          %p460 = pneg %p49
        $region14: #{_lambda_.2} parent=11 // pred_check_branch
          %462 = sbr.rel (%p460) target = $region16
        $region15: #{_lambda_.2} parent=11 // pred_region
          _
        $region16: #{_lambda_.2} parent=11 // pred_fallthru
          _
        // Predicated region
        $region17: #{_lambda_.2} parent=11 // pred_check
          %p463 = pneg %p70
        $region18: #{_lambda_.2} parent=11 // pred_check_branch
          %465 = sbr.rel (%p463) target = $region20
        $region19: #{_lambda_.2} parent=11 // pred_region
          _
        $region20: #{_lambda_.2} parent=11 // pred_fallthru
          _
        // Predicated region
        $region21: #{_lambda_.2} parent=11 // pred_check
          %p466 = pneg %p91
        $region22: #{_lambda_.2} parent=11 // pred_check_branch
          %468 = sbr.rel (%p466) target = $region24
        $region23: #{_lambda_.2} parent=11 // pred_region
          _
        $region24: #{_lambda_.2} parent=11 // pred_fallthru
          _
        // Predicated region
        $region25: #{_lambda_.2} parent=11 // pred_check
          %p469 = pneg %p112
        $region26: #{_lambda_.2} parent=11 // pred_check_branch
          %471 = sbr.rel (%p469) target = $region28
        $region27: #{_lambda_.2} parent=11 // pred_region
          _
        $region28: #{_lambda_.2} parent=11 // pred_fallthru
          _
      $region12: #{_lambda_.2} parent=5 // pred_fallthru
        _
      %p472 = scmp.lt.s32.totalorder %s28, 2
      // Predicated region
      $region29: #{_lambda_.2} parent=5 // pred_check
        %p473 = pneg %p472
      $region30: #{_lambda_.2} parent=5 // pred_check_branch
        %475 = sbr.rel (%p473) target = $region32
      $region31: #{_lambda_.2} parent=5 // pred_region
        // Predicated region
        $region33: #{_lambda_.2} parent=31 // pred_check
          %p476 = pneg %p132
        $region34: #{_lambda_.2} parent=31 // pred_check_branch
          %478 = sbr.rel (%p476) target = $region36
        $region35: #{_lambda_.2} parent=31 // pred_region
          %p479 = scmp.lt.s32.totalorder %s28, 1
          %s480 = scalar_select %p479, %s28, 1
          %s481 = smul.addr %s480, 4
          %s482 = smul.addr %s481, 8
          %s483 = scalar_lea.vmem %s4, %s482
        $region36: #{_lambda_.2} parent=31 // pred_fallthru
          _
        // Predicated region
        $region37: #{_lambda_.2} parent=31 // pred_check
          %p484 = pneg %p158
        $region38: #{_lambda_.2} parent=31 // pred_check_branch
          %486 = sbr.rel (%p484) target = $region40
        $region39: #{_lambda_.2} parent=31 // pred_region
          %p487 = scmp.lt.s32.totalorder %s28, 1
          %s488 = scalar_select %p487, %s28, 1
          %s489 = scalar_lea.vmem %s5, %s488
        $region40: #{_lambda_.2} parent=31 // pred_fallthru
          _
        // Predicated region
        $region41: #{_lambda_.2} parent=31 // pred_check
          %p490 = pneg %p184
        $region42: #{_lambda_.2} parent=31 // pred_check_branch
          %492 = sbr.rel (%p490) target = $region44
        $region43: #{_lambda_.2} parent=31 // pred_region
          %s493 = sand.u32 %s174, 1
          %s494 = scalar_lea.sflag [#allocation3], %s493
          %s495 = sand.u32 %s174, 1
          %s496 = smul.addr %s495, 32
          %s497 = scalar_lea.vmem [#allocation2], %s496
          %s499 = ssub.s32 512, 512
          %500 = vsyncadd %s494, %s499
          %s501 = smul.addr %s28, 4
          %s502 = smul.addr %s501, 128
          %s503 = scalar_lea.hbm %s6, %s502
          %s504 = sshll.u32 %s497, 4
          %s505 = int_to_ptr.vmem [resolvable:$true] %s504
          %510 = dma.hbm_to_vmem [thread:$0]  %s503, 512, %s505, %s494, 128, 128, 8
        $region44: #{_lambda_.2} parent=31 // pred_fallthru
          _
        // Predicated region
        $region45: #{_lambda_.2} parent=31 // pred_check
          %p511 = pneg %p210
        $region46: #{_lambda_.2} parent=31 // pred_check_branch
          %513 = sbr.rel (%p511) target = $region48
        $region47: #{_lambda_.2} parent=31 // pred_region
          %p514 = scmp.lt.s32.totalorder %s28, 1
          %s515 = scalar_select %p514, %s28, 1
          %s516 = scalar_lea.vmem %s7, %s515
        $region48: #{_lambda_.2} parent=31 // pred_fallthru
          _
        // Predicated region
        $region49: #{_lambda_.2} parent=31 // pred_check
          %p517 = pneg %p236
        $region50: #{_lambda_.2} parent=31 // pred_check_branch
          %519 = sbr.rel (%p517) target = $region52
        $region51: #{_lambda_.2} parent=31 // pred_region
          %p520 = scmp.lt.s32.totalorder %s28, 1
          %s521 = scalar_select %p520, %s28, 1
          %s522 = scalar_lea.vmem %s8, %s521
        $region52: #{_lambda_.2} parent=31 // pred_fallthru
          _
        // Predicated region
        $region53: #{_lambda_.2} parent=31 // pred_check
          %p523 = pneg %p262
        $region54: #{_lambda_.2} parent=31 // pred_check_branch
          %525 = sbr.rel (%p523) target = $region56
        $region55: #{_lambda_.2} parent=31 // pred_region
          %p526 = scmp.lt.s32.totalorder %s28, 1
          %s527 = scalar_select %p526, %s28, 1
          %s528 = scalar_lea.vmem %s9, %s527
        $region56: #{_lambda_.2} parent=31 // pred_fallthru
          _
        // Predicated region
        $region57: #{_lambda_.2} parent=31 // pred_check
          %p529 = pneg %p288
        $region58: #{_lambda_.2} parent=31 // pred_check_branch
          %531 = sbr.rel (%p529) target = $region60
        $region59: #{_lambda_.2} parent=31 // pred_region
          %s532 = sand.u32 %s278, 1
          %s533 = scalar_lea.sflag [#allocation5], %s532
          %s534 = sand.u32 %s278, 1
          %s535 = smul.addr %s534, 32
          %s536 = scalar_lea.vmem [#allocation4], %s535
          %s538 = ssub.s32 512, 512
          %539 = vsyncadd %s533, %s538
          %s540 = smul.addr %s28, 4
          %s541 = smul.addr %s540, 128
          %s542 = scalar_lea.hbm %s10, %s541
          %s543 = sshll.u32 %s536, 4
          %s544 = int_to_ptr.vmem [resolvable:$true] %s543
          %549 = dma.hbm_to_vmem [thread:$0]  %s542, 512, %s544, %s533, 128, 128, 8
        $region60: #{_lambda_.2} parent=31 // pred_fallthru
          _
        // Predicated region
        $region61: #{_lambda_.2} parent=31 // pred_check
          %p550 = pneg %p314
        $region62: #{_lambda_.2} parent=31 // pred_check_branch
          %552 = sbr.rel (%p550) target = $region64
        $region63: #{_lambda_.2} parent=31 // pred_region
          %p553 = scmp.lt.s32.totalorder %s28, 1
          %s554 = scalar_select %p553, %s28, 1
          %s555 = scalar_lea.vmem %s11, %s554
        $region64: #{_lambda_.2} parent=31 // pred_fallthru
          _
        // Predicated region
        $region65: #{_lambda_.2} parent=31 // pred_check
          %p556 = pneg %p340
        $region66: #{_lambda_.2} parent=31 // pred_check_branch
          %558 = sbr.rel (%p556) target = $region68
        $region67: #{_lambda_.2} parent=31 // pred_region
          %p559 = scmp.lt.s32.totalorder %s28, 1
          %s560 = scalar_select %p559, %s28, 1
          %s561 = smul.addr %s560, 8
          %s562 = smul.addr %s561, 8
          %s563 = scalar_lea.vmem %s12, %s562
        $region68: #{_lambda_.2} parent=31 // pred_fallthru
          _
        // Predicated region
        $region69: #{_lambda_.2} parent=31 // pred_check
          %p564 = pneg %p366
        $region70: #{_lambda_.2} parent=31 // pred_check_branch
          %566 = sbr.rel (%p564) target = $region72
        $region71: #{_lambda_.2} parent=31 // pred_region
          %p567 = scmp.lt.s32.totalorder %s28, 1
          %s568 = scalar_select %p567, %s28, 1
          %s569 = scalar_lea.vmem %s13, %s568
        $region72: #{_lambda_.2} parent=31 // pred_fallthru
          _
        // Predicated region
        $region73: #{_lambda_.2} parent=31 // pred_check
          %p570 = pneg %p392
        $region74: #{_lambda_.2} parent=31 // pred_check_branch
          %572 = sbr.rel (%p570) target = $region76
        $region75: #{_lambda_.2} parent=31 // pred_region
          %p573 = scmp.lt.s32.totalorder %s28, 1
          %s574 = scalar_select %p573, %s28, 1
          %s575 = scalar_lea.vmem %s14, %s574
        $region76: #{_lambda_.2} parent=31 // pred_fallthru
          _
        // Predicated region
        $region77: #{_lambda_.2} parent=31 // pred_check
          %p576 = pneg %p418
        $region78: #{_lambda_.2} parent=31 // pred_check_branch
          %578 = sbr.rel (%p576) target = $region80
        $region79: #{_lambda_.2} parent=31 // pred_region
          %p579 = scmp.lt.s32.totalorder %s28, 1
          %s580 = scalar_select %p579, %s28, 1
          %s581 = scalar_lea.vmem %s15, %s580
        $region80: #{_lambda_.2} parent=31 // pred_fallthru
          _
      $region32: #{_lambda_.2} parent=5 // pred_fallthru
        _
      %p582 = scmp.le.s32.totalorder 1, %s28
      %p583 = scmp.lt.s32.totalorder %s28, 3
      %p584 = pnand %p582, %p583
      %p585 = pneg %p584
      // Predicated region
      $region81: #{_lambda_.2} parent=5 // pred_check
        _
      $region82: #{_lambda_.2} parent=5 // pred_check_branch
        %587 = sbr.rel (%p584) target = $region84
      $region83: #{_lambda_.2} parent=5 // pred_region
        %s588 = ssub.s32 %s28, 1
        %s589 = sand.u32 %s177, 1
        %s590 = scalar_lea.sflag [#allocation3], %s589
        %s591 = sand.u32 %s177, 1
        %s592 = smul.addr %s591, 32
        %s593 = scalar_lea.vmem [#allocation2], %s592
        // Predicated region
        $region85: #{_lambda_.2} parent=83 // pred_check
          %p594 = pneg %p190
        $region86: #{_lambda_.2} parent=83 // pred_check_branch
          %596 = sbr.rel (%p594) target = $region88
        $region87: #{_lambda_.2} parent=83 // pred_region
          %597 = dma.done %s590, 512
        $region88: #{_lambda_.2} parent=83 // pred_fallthru
          _
        %s598 = sand.u32 %s281, 1
        %s599 = scalar_lea.sflag [#allocation5], %s598
        %s600 = sand.u32 %s281, 1
        %s601 = smul.addr %s600, 32
        %s602 = scalar_lea.vmem [#allocation4], %s601
        // Predicated region
        $region89: #{_lambda_.2} parent=83 // pred_check
          %p603 = pneg %p294
        $region90: #{_lambda_.2} parent=83 // pred_check_branch
          %605 = sbr.rel (%p603) target = $region92
        $region91: #{_lambda_.2} parent=83 // pred_region
          %606 = dma.done %s599, 512
        $region92: #{_lambda_.2} parent=83 // pred_fallthru
          _
        %p607 = pneg %p49
        %p608 = pneg %p46
        %p609 = pneg %p70
        %p610 = pneg %p67
        %p611 = pneg %p91
        %p612 = pneg %p88
        %p613 = pneg %p112
        %p614 = pneg %p109
        %p615 = scmp.lt.s32.totalorder %s33, 1
        %s616 = scalar_select %p615, %s33, 1
        %s617 = smul.addr %s616, 4
        %s618 = smul.addr %s617, 8
        %s619 = scalar_lea.vmem %s4, %s618
        %p620 = pneg %p138
        %p621 = pneg %p135
        %p622 = scmp.lt.s32.totalorder %s33, 1
        %s623 = scalar_select %p622, %s33, 1
        %s624 = scalar_lea.vmem %s5, %s623
        %p625 = pneg %p164
        %p626 = pneg %p161
        %s627 = sand.u32 %s177, 1
        %s628 = scalar_lea.sflag [#allocation3], %s627
        %s629 = sand.u32 %s177, 1
        %s630 = smul.addr %s629, 32
        %s631 = scalar_lea.vmem [#allocation2], %s630
        %p632 = pneg %p190
        %p633 = pneg %p187
        %p634 = scmp.lt.s32.totalorder %s33, 1
        %s635 = scalar_select %p634, %s33, 1
        %s636 = scalar_lea.vmem %s7, %s635
        %p637 = pneg %p216
        %p638 = pneg %p213
        %p639 = scmp.lt.s32.totalorder %s33, 1
        %s640 = scalar_select %p639, %s33, 1
        %s641 = scalar_lea.vmem %s8, %s640
        %p642 = pneg %p242
        %p643 = pneg %p239
        %p644 = scmp.lt.s32.totalorder %s33, 1
        %s645 = scalar_select %p644, %s33, 1
        %s646 = scalar_lea.vmem %s9, %s645
        %p647 = pneg %p268
        %p648 = pneg %p265
        %s649 = sand.u32 %s281, 1
        %s650 = scalar_lea.sflag [#allocation5], %s649
        %s651 = sand.u32 %s281, 1
        %s652 = smul.addr %s651, 32
        %s653 = scalar_lea.vmem [#allocation4], %s652
        %p654 = pneg %p294
        %p655 = pneg %p291
        %p656 = scmp.lt.s32.totalorder %s33, 1
        %s657 = scalar_select %p656, %s33, 1
        %s658 = scalar_lea.vmem %s11, %s657
        %p659 = pneg %p320
        %p660 = pneg %p317
        %p661 = scmp.lt.s32.totalorder %s33, 1
        %s662 = scalar_select %p661, %s33, 1
        %s663 = smul.addr %s662, 8
        %s664 = smul.addr %s663, 8
        %s665 = scalar_lea.vmem %s12, %s664
        %p666 = pneg %p346
        %p667 = pneg %p343
        %p668 = scmp.lt.s32.totalorder %s33, 1
        %s669 = scalar_select %p668, %s33, 1
        %s670 = scalar_lea.vmem %s13, %s669
        %p671 = pneg %p372
        %p672 = pneg %p369
        %p673 = scmp.lt.s32.totalorder %s33, 1
        %s674 = scalar_select %p673, %s33, 1
        %s675 = scalar_lea.vmem %s14, %s674
        %p676 = pneg %p398
        %p677 = pneg %p395
        %p678 = scmp.lt.s32.totalorder %s33, 1
        %s679 = scalar_select %p678, %s33, 1
        %s680 = scalar_lea.vmem %s15, %s679
        %p681 = pneg %p424
        %p682 = pneg %p421
        %p683 = pneg %p445
        %p684 = pneg %p442
        %p685 = scmp.lt.s32.totalorder %s33, 1
        %s686 = scalar_select %p685, %s33, 1
        %s687 = smul.addr %s686, 4
        %s688 = smul.addr %s687, 8
        %s689 = scalar_lea.vmem %s4, %s688
        %p690 = scmp.lt.s32.totalorder %s33, 1
        %s691 = scalar_select %p690, %s33, 1
        %s692 = scalar_lea.vmem %s5, %s691
        %p693 = scmp.lt.s32.totalorder %s33, 1
        %s694 = scalar_select %p693, %s33, 1
        %s695 = scalar_lea.vmem %s7, %s694
        %p696 = scmp.lt.s32.totalorder %s33, 1
        %s697 = scalar_select %p696, %s33, 1
        %s698 = scalar_lea.vmem %s8, %s697
        %p699 = scmp.lt.s32.totalorder %s33, 1
        %s700 = scalar_select %p699, %s33, 1
        %s701 = scalar_lea.vmem %s9, %s700
        %p702 = scmp.lt.s32.totalorder %s33, 1
        %s703 = scalar_select %p702, %s33, 1
        %s704 = scalar_lea.vmem %s11, %s703
        %p705 = scmp.lt.s32.totalorder %s33, 1
        %s706 = scalar_select %p705, %s33, 1
        %s707 = smul.addr %s706, 8
        %s708 = smul.addr %s707, 8
        %s709 = scalar_lea.vmem %s12, %s708
        %p710 = scmp.lt.s32.totalorder %s33, 1
        %s711 = scalar_select %p710, %s33, 1
        %s712 = scalar_lea.vmem %s13, %s711
        %p713 = scmp.lt.s32.totalorder %s33, 1
        %s714 = scalar_select %p713, %s33, 1
        %s715 = scalar_lea.vmem %s14, %s714
        %p716 = scmp.lt.s32.totalorder %s33, 1
        %s717 = scalar_select %p716, %s33, 1
        %s718 = scalar_lea.vmem %s15, %s717
        %p719 = scmp.eq.s32.totalorder %s33, 0
        // Predicated region
        $region93: #{_lambda_.2} parent=83 // pred_check
          %p720 = pneg %p719
        $region94: #{_lambda_.2} parent=83 // pred_check_branch
          %722 = sbr.rel (%p720) target = $region96
        $region95: #{_lambda_.2} parent=83 // pred_region
          %v723 = vld [vmem:[%s0] sm:$0xff]
          %v724 = vld [vmem:[%s0 + $0x8] sm:$0xff]
          %v725 = vld [vmem:[%s2] sm:$0x1]
          %v726 = vld [vmem:[%s3] sm:$0x1]
          %vm727 = vcmask 261120
          %v728 = vsel %vm727, %v723, 0.0
          %729 = vadd.xlane.f32.xlu0 %v728
          %v730 = vpop.xlane.xlu0 %729
          %v731 = vsel %vm727, %v724, 0.0
          %732 = vadd.xlane.f32.xlu0 %v731
          %v733 = vpop.xlane.xlu0 %732
          %v734 = vrcp.pop 32.0
          %v735 = vmul.f32 %v730, %v734
          %v736 = vmul.f32 %v733, %v734
          %v737 = vsub.f32 %v723, %v735
          %v738 = vsub.f32 %v724, %v736
          %v739 = vmul.f32 %v737, %v737
          %v740 = vmul.f32 %v738, %v738
          %v741 = vsel %vm727, %v739, 0.0
          %742 = vadd.xlane.f32.xlu0 %v741
          %v743 = vpop.xlane.xlu0 %742
          %v744 = vsel %vm727, %v740, 0.0
          %745 = vadd.xlane.f32.xlu0 %v744
          %v746 = vpop.xlane.xlu0 %745
          %v747 = vmul.f32 %v743, %v734
          %v748 = vmul.f32 %v746, %v734
          %v749 = vadd.f32 %v747, 1e-12
          %v750 = vadd.f32 %v748, 1e-12
          %v751 = vrsqrt.pop %v749
          %v752 = vrsqrt.pop %v750
          %v753 = vmul.f32 %v737, %v751
          %v754 = vmul.f32 %v738, %v752
          %v756 = vlaneseq
          %v757 = vshrl.u32 %v756, 7
          %v758 = vsub.s32 0, %v757
          %v759 = vrot.slane %v725, %v758
          %v761 = vmul.f32 %v753, %v759
          %v762 = vmul.f32 %v754, %v759
          %v764 = vlaneseq
          %v765 = vshrl.u32 %v764, 7
          %v766 = vsub.s32 0, %v765
          %v767 = vrot.slane %v726, %v766
          %v769 = vadd.f32 %v761, %v767
          %v770 = vadd.f32 %v762, %v767
          %771 = vst.msk [vmem:[%s16] sm:$0xff] %vm727, %v769
          %772 = vst.msk [vmem:[%s16 + $0x8] sm:$0xff] %vm727, %v770
        $region96: #{_lambda_.2} parent=83 // pred_fallthru
          _
        %v773 = vld [vmem:[%s16] sm:$0xff]
        %v774 = vld [vmem:[%s16 + $0x8] sm:$0xff]
        %v775 = vld [vmem:[%s689] sm:$0xff]
        %v776 = vld [vmem:[%s689 + $0x8] sm:$0xff]
        %v777 = vld [vmem:[%s689 + $0x10] sm:$0xff]
        %v778 = vld [vmem:[%s689 + $0x18] sm:$0xff]
        %v779 = vld [vmem:[%s692] sm:$0x1]
        %v781 = vlaneseq
        %v782 = vshrl.u32 %v781, 7
        %v783 = vsub.s32 0, %v782
        %v784 = vrot.slane %v779, %v783
        %vm786 = vcmask 261120
        %v788 = vsel %vm786, %v773, 0
        %v791 = vsel %vm786, %v774, 0
        %793 = vmatprep.subr.mxu0 0.0
        %794 = vmatpush1.msra.mxu0 0.0
        %795 = vmatprep.subr.mxu0 0.0
        %796 = vmatpush1.msra.mxu0 0.0
        %797 = vmatprep.subr.mxu0 0.0
        %798 = vmatpush1.msra.mxu0 0.0
        %799 = vmatprep.subr.mxu0 0.0
        %800 = vmatpush1.msra.mxu0 0.0
        %801 = vmatprep.subr.mxu0 0.0
        %802 = vmatpush1.msra.mxu0 0.0
        %803 = vmatprep.subr.mxu0 0.0
        %804 = vmatpush1.msra.mxu0 0.0
        %805 = vmatprep.subr.mxu0 0.0
        %806 = vmatpush1.msra.mxu0 0.0
        %807 = vmatprep.subr.mxu0 0.0
        %808 = vmatpush1.msra.mxu0 0.0
        %809 = vmatprep.subr.mxu0 0.0
        %810 = vmatpush1.msra.mxu0 0.0
        %811 = vmatprep.subr.mxu0 0.0
        %812 = vmatpush1.msra.mxu0 0.0
        %813 = vmatprep.subr.mxu0 0.0
        %814 = vmatpush1.msra.mxu0 0.0
        %815 = vmatprep.subr.mxu0 0.0
        %816 = vmatpush1.msra.mxu0 0.0
        %817 = vmatprep.subr.mxu0 0.0
        %818 = vmatpush1.msra.mxu0 %v778
        %819 = vmatprep.subr.mxu0 0.0
        %820 = vmatpush1.msra.mxu0 %v777
        %821 = vmatprep.subr.mxu0 0.0
        %822 = vmatpush1.msra.mxu0 %v776
        %823 = vmatprep.subr.mxu0 0.0
        %824 = vmatpush1.msra.mxu0 %v775
        %825 = vmatprep.subr.mxu0 0.0
        %826 = vmatpush2.msra.mxu0 0.0
        %827 = vmatprep.subr.mxu0 0.0
        %828 = vmatpush2.msra.mxu0 0.0
        %829 = vmatprep.subr.mxu0 0.0
        %830 = vmatpush2.msra.mxu0 0.0
        %831 = vmatprep.subr.mxu0 0.0
        %832 = vmatpush2.msra.mxu0 0.0
        %833 = vmatprep.subr.mxu0 0.0
        %834 = vmatpush2.msra.mxu0 0.0
        %835 = vmatprep.subr.mxu0 0.0
        %836 = vmatpush2.msra.mxu0 0.0
        %837 = vmatprep.subr.mxu0 0.0
        %838 = vmatpush2.msra.mxu0 0.0
        %839 = vmatprep.subr.mxu0 0.0
        %840 = vmatpush2.msra.mxu0 0.0
        %841 = vmatprep.subr.mxu0 0.0
        %842 = vmatpush2.msra.mxu0 0.0
        %843 = vmatprep.subr.mxu0 0.0
        %844 = vmatpush2.msra.mxu0 0.0
        %845 = vmatprep.subr.mxu0 0.0
        %846 = vmatpush2.msra.mxu0 0.0
        %847 = vmatprep.subr.mxu0 0.0
        %848 = vmatpush2.msra.mxu0 0.0
        %849 = vmatprep.subr.mxu0 0.0
        %850 = vmatpush2.msra.mxu0 0.0
        %851 = vmatprep.subr.mxu0 0.0
        %852 = vmatpush2.msra.mxu0 0.0
        %853 = vmatprep.subr.mxu0 0.0
        %854 = vmatpush2.msra.mxu0 0.0
        %855 = vmatprep.subr.mxu0 0.0
        %856 = vmatpush2.msra.mxu0 0.0
        %857 = vmatprep.mubr.f32.mxu0 0.0
        %858 = vmatmul.mubr.f32.gmra.mxu0 %v788
        %v859 = vpop.f32.mrf.mxu0
        %v860 = vadd.f32 %v784, %v859
        %v861 = vpop.f32.mrf.mxu0
        %862 = vmatprep.mubr.f32.mxu0 0.0
        %863 = vmatmul.mubr.f32.gmra.mxu0 %v791
        %v864 = vpop.f32.mrf.mxu0
        %v865 = vadd.f32 %v784, %v864
        %v866 = vpop.f32.mrf.mxu0
        %867 = vdwg.mxu0
        %v868 = vld [vmem:[%s1] sm:$0x3]
        %v869 = vsub.f32 1.0, %v868
        %v870 = vmul.f32 %v869, -10000.0
        %v873 = vunpack.c.l.s4 1966171168
        %v874 = vunpack.c.0.s8 %v873
        %v875 = vlaneseq
        %v876 = vshrl.u32 %v875, 7
        %v877 = vsub.s32 %v874, %v876
        %v878 = vrot.slane %v870, %v877
        %v879 = vcombine.high %v878, %v878
        %v881 = vunpack.c.l.s4 1966171168
        %v882 = vunpack.c.0.s8 %v881
        %v883 = vlaneseq
        %v884 = vshrl.u32 %v883, 7
        %v885 = vsub.s32 %v882, %v884
        %v886 = vrot.slane %v878, %v885
        %v888 = vunpack.c.l.s4 1966171168
        %v889 = vunpack.c.0.s8 %v888
        %v890 = vlaneseq
        %v891 = vshrl.u32 %v890, 7
        %v892 = vsub.s32 %v889, %v891
        %v893 = vrot.slane %v879, %v892
        %895 = vrot.lane.b32.xlu0 %v860, 96
        %v896 = vpop.permute.xlu0 %895
        %vm897 = vcmask 64512
        %v898 = vsel %vm897, %v860, 0
        %v900 = vsel %vm897, %v896, 0
        %902 = vmatprep.subr.mxu0 0.0
        %903 = vmatpush1.xpose.msra.mxu0 0.0
        %904 = vmatprep.subr.mxu0 0.0
        %905 = vmatpush1.xpose.msra.mxu0 0.0
        %906 = vmatprep.subr.mxu0 0.0
        %907 = vmatpush1.xpose.msra.mxu0 0.0
        %908 = vmatprep.subr.mxu0 0.0
        %909 = vmatpush1.xpose.msra.mxu0 0.0
        %910 = vmatprep.subr.mxu0 0.0
        %911 = vmatpush1.xpose.msra.mxu0 0.0
        %912 = vmatprep.subr.mxu0 0.0
        %913 = vmatpush1.xpose.msra.mxu0 0.0
        %914 = vmatprep.subr.mxu0 0.0
        %915 = vmatpush1.xpose.msra.mxu0 0.0
        %916 = vmatprep.subr.mxu0 0.0
        %917 = vmatpush1.xpose.msra.mxu0 0.0
        %918 = vmatprep.subr.mxu0 0.0
        %919 = vmatpush1.xpose.msra.mxu0 0.0
        %920 = vmatprep.subr.mxu0 0.0
        %921 = vmatpush1.xpose.msra.mxu0 0.0
        %922 = vmatprep.subr.mxu0 0.0
        %923 = vmatpush1.xpose.msra.mxu0 0.0
        %924 = vmatprep.subr.mxu0 0.0
        %925 = vmatpush1.xpose.msra.mxu0 0.0
        %926 = vmatprep.subr.mxu0 0.0
        %927 = vmatpush1.xpose.msra.mxu0 0.0
        %928 = vmatprep.subr.mxu0 0.0
        %929 = vmatpush1.xpose.msra.mxu0 0.0
        %930 = vmatprep.subr.mxu0 0.0
        %931 = vmatpush1.xpose.msra.mxu0 0.0
        %932 = vmatprep.subr.mxu0 0.0
        %933 = vmatpush1.xpose.msra.mxu0 %v900
        %934 = vmatprep.subr.mxu0 0.0
        %935 = vmatpush2.xpose.msra.mxu0 0.0
        %936 = vmatprep.subr.mxu0 0.0
        %937 = vmatpush2.xpose.msra.mxu0 0.0
        %938 = vmatprep.subr.mxu0 0.0
        %939 = vmatpush2.xpose.msra.mxu0 0.0
        %940 = vmatprep.subr.mxu0 0.0
        %941 = vmatpush2.xpose.msra.mxu0 0.0
        %942 = vmatprep.subr.mxu0 0.0
        %943 = vmatpush2.xpose.msra.mxu0 0.0
        %944 = vmatprep.subr.mxu0 0.0
        %945 = vmatpush2.xpose.msra.mxu0 0.0
        %946 = vmatprep.subr.mxu0 0.0
        %947 = vmatpush2.xpose.msra.mxu0 0.0
        %948 = vmatprep.subr.mxu0 0.0
        %949 = vmatpush2.xpose.msra.mxu0 0.0
        %950 = vmatprep.subr.mxu0 0.0
        %951 = vmatpush2.xpose.msra.mxu0 0.0
        %952 = vmatprep.subr.mxu0 0.0
        %953 = vmatpush2.xpose.msra.mxu0 0.0
        %954 = vmatprep.subr.mxu0 0.0
        %955 = vmatpush2.xpose.msra.mxu0 0.0
        %956 = vmatprep.subr.mxu0 0.0
        %957 = vmatpush2.xpose.msra.mxu0 0.0
        %958 = vmatprep.subr.mxu0 0.0
        %959 = vmatpush2.xpose.msra.mxu0 0.0
        %960 = vmatprep.subr.mxu0 0.0
        %961 = vmatpush2.xpose.msra.mxu0 0.0
        %962 = vmatprep.subr.mxu0 0.0
        %963 = vmatpush2.xpose.msra.mxu0 0.0
        %964 = vmatprep.subr.mxu0 0.0
        %965 = vmatpush2.xpose.msra.mxu0 0.0
        %966 = vmatprep.mubr.f32.mxu0 0.0
        %967 = vmatmul.mubr.f32.gmra.mxu0 %v898
        %v968 = vpop.f32.mrf.mxu0
        %v969 = vadd.f32 0.0, %v968
        %v970 = vpop.f32.mrf.mxu0
        %971 = vdwg.mxu0
        %973 = vrot.lane.b32.xlu0 %v865, 96
        %v974 = vpop.permute.xlu0 %973
        %v975 = vsel %vm897, %v865, 0
        %v977 = vsel %vm897, %v974, 0
        %979 = vmatprep.subr.mxu0 0.0
        %980 = vmatpush1.xpose.msra.mxu0 0.0
        %981 = vmatprep.subr.mxu0 0.0
        %982 = vmatpush1.xpose.msra.mxu0 0.0
        %983 = vmatprep.subr.mxu0 0.0
        %984 = vmatpush1.xpose.msra.mxu0 0.0
        %985 = vmatprep.subr.mxu0 0.0
        %986 = vmatpush1.xpose.msra.mxu0 0.0
        %987 = vmatprep.subr.mxu0 0.0
        %988 = vmatpush1.xpose.msra.mxu0 0.0
        %989 = vmatprep.subr.mxu0 0.0
        %990 = vmatpush1.xpose.msra.mxu0 0.0
        %991 = vmatprep.subr.mxu0 0.0
        %992 = vmatpush1.xpose.msra.mxu0 0.0
        %993 = vmatprep.subr.mxu0 0.0
        %994 = vmatpush1.xpose.msra.mxu0 0.0
        %995 = vmatprep.subr.mxu0 0.0
        %996 = vmatpush1.xpose.msra.mxu0 0.0
        %997 = vmatprep.subr.mxu0 0.0
        %998 = vmatpush1.xpose.msra.mxu0 0.0
        %999 = vmatprep.subr.mxu0 0.0
        %1000 = vmatpush1.xpose.msra.mxu0 0.0
        %1001 = vmatprep.subr.mxu0 0.0
        %1002 = vmatpush1.xpose.msra.mxu0 0.0
        %1003 = vmatprep.subr.mxu0 0.0
        %1004 = vmatpush1.xpose.msra.mxu0 0.0
        %1005 = vmatprep.subr.mxu0 0.0
        %1006 = vmatpush1.xpose.msra.mxu0 0.0
        %1007 = vmatprep.subr.mxu0 0.0
        %1008 = vmatpush1.xpose.msra.mxu0 0.0
        %1009 = vmatprep.subr.mxu0 0.0
        %1010 = vmatpush1.xpose.msra.mxu0 %v977
        %1011 = vmatprep.subr.mxu0 0.0
        %1012 = vmatpush2.xpose.msra.mxu0 0.0
        %1013 = vmatprep.subr.mxu0 0.0
        %1014 = vmatpush2.xpose.msra.mxu0 0.0
        %1015 = vmatprep.subr.mxu0 0.0
        %1016 = vmatpush2.xpose.msra.mxu0 0.0
        %1017 = vmatprep.subr.mxu0 0.0
        %1018 = vmatpush2.xpose.msra.mxu0 0.0
        %1019 = vmatprep.subr.mxu0 0.0
        %1020 = vmatpush2.xpose.msra.mxu0 0.0
        %1021 = vmatprep.subr.mxu0 0.0
        %1022 = vmatpush2.xpose.msra.mxu0 0.0
        %1023 = vmatprep.subr.mxu0 0.0
        %1024 = vmatpush2.xpose.msra.mxu0 0.0
        %1025 = vmatprep.subr.mxu0 0.0
        %1026 = vmatpush2.xpose.msra.mxu0 0.0
        %1027 = vmatprep.subr.mxu0 0.0
        %1028 = vmatpush2.xpose.msra.mxu0 0.0
        %1029 = vmatprep.subr.mxu0 0.0
        %1030 = vmatpush2.xpose.msra.mxu0 0.0
        %1031 = vmatprep.subr.mxu0 0.0
        %1032 = vmatpush2.xpose.msra.mxu0 0.0
        %1033 = vmatprep.subr.mxu0 0.0
        %1034 = vmatpush2.xpose.msra.mxu0 0.0
        %1035 = vmatprep.subr.mxu0 0.0
        %1036 = vmatpush2.xpose.msra.mxu0 0.0
        %1037 = vmatprep.subr.mxu0 0.0
        %1038 = vmatpush2.xpose.msra.mxu0 0.0
        %1039 = vmatprep.subr.mxu0 0.0
        %1040 = vmatpush2.xpose.msra.mxu0 0.0
        %1041 = vmatprep.subr.mxu0 0.0
        %1042 = vmatpush2.xpose.msra.mxu0 0.0
        %1043 = vmatprep.mubr.f32.mxu0 0.0
        %1044 = vmatmul.mubr.f32.gmra.mxu0 %v975
        %v1045 = vpop.f32.mrf.mxu0
        %v1046 = vadd.f32 0.0, %v1045
        %v1047 = vpop.f32.mrf.mxu0
        %1048 = vdwg.mxu0
        %v1049 = vmul.f32 %v969, 0.35355338
        %v1050 = vmul.f32 %v1046, 0.35355338
        %v1051 = vlaneseq
        %v1052 = vshrl.u32 %v1051, 7
        %v1053 = vsub.s32 0, %v1052
        %v1054 = vrot.slane %v886, %v1053
        %v1055 = vlaneseq
        %v1056 = vshrl.u32 %v1055, 7
        %v1057 = vsub.s32 0, %v1056
        %v1058 = vrot.slane %v893, %v1057
        %v1061 = vadd.f32 %v1049, %v1054
        %v1062 = vadd.f32 %v1050, %v1058
        %v1063 = vsel %vm897, %v1061, -inf
        %1064 = vmax.xlane.f32.xlu0 %v1063
        %v1065 = vpop.xlane.xlu0 %1064
        %v1066 = vsel %vm897, %v1062, -inf
        %1067 = vmax.xlane.f32.xlu0 %v1066
        %v1068 = vpop.xlane.xlu0 %1067
        %v1069 = vsub.f32 %v1061, %v1065
        %v1070 = vsub.f32 %v1062, %v1068
        %v1071 = vmul.f32 %v1069, 1.442695
        %v1072 = vpow.pop %v1071
        %v1073 = vmul.f32 %v1070, 1.442695
        %v1074 = vpow.pop %v1073
        %v1075 = vsel %vm897, %v1072, 0.0
        %1076 = vadd.xlane.f32.xlu0 %v1075
        %v1077 = vpop.xlane.xlu0 %1076
        %v1078 = vsel %vm897, %v1074, 0.0
        %1079 = vadd.xlane.f32.xlu0 %v1078
        %v1080 = vpop.xlane.xlu0 %1079
        %v1081 = vrcp.pop %v1077
        %v1082 = vrcp.pop %v1080
        %v1083 = vmul.f32 %v1072, %v1081
        %v1084 = vmul.f32 %v1074, %v1082
        %1085 = vrot.lane.b32.xlu0 %v860, 64
        %v1086 = vpop.permute.xlu0 %1085
        %v1089 = vsel %vm897, %v1083, 0
        %1091 = vmatprep.subr.mxu0 0.0
        %1092 = vmatpush1.msra.mxu0 0.0
        %1093 = vmatprep.subr.mxu0 0.0
        %1094 = vmatpush1.msra.mxu0 0.0
        %1095 = vmatprep.subr.mxu0 0.0
        %1096 = vmatpush1.msra.mxu0 0.0
        %1097 = vmatprep.subr.mxu0 0.0
        %1098 = vmatpush1.msra.mxu0 0.0
        %1099 = vmatprep.subr.mxu0 0.0
        %1100 = vmatpush1.msra.mxu0 0.0
        %1101 = vmatprep.subr.mxu0 0.0
        %1102 = vmatpush1.msra.mxu0 0.0
        %1103 = vmatprep.subr.mxu0 0.0
        %1104 = vmatpush1.msra.mxu0 0.0
        %1105 = vmatprep.subr.mxu0 0.0
        %1106 = vmatpush1.msra.mxu0 0.0
        %1107 = vmatprep.subr.mxu0 0.0
        %1108 = vmatpush1.msra.mxu0 0.0
        %1109 = vmatprep.subr.mxu0 0.0
        %1110 = vmatpush1.msra.mxu0 0.0
        %1111 = vmatprep.subr.mxu0 0.0
        %1112 = vmatpush1.msra.mxu0 0.0
        %1113 = vmatprep.subr.mxu0 0.0
        %1114 = vmatpush1.msra.mxu0 0.0
        %1115 = vmatprep.subr.mxu0 0.0
        %1116 = vmatpush1.msra.mxu0 0.0
        %1117 = vmatprep.subr.mxu0 0.0
        %1118 = vmatpush1.msra.mxu0 0.0
        %1119 = vmatprep.subr.mxu0 0.0
        %1120 = vmatpush1.msra.mxu0 0.0
        %1121 = vmatprep.subr.mxu0 0.0
        %1122 = vmatpush1.msra.mxu0 %v1086
        %1123 = vmatprep.subr.mxu0 0.0
        %1124 = vmatpush2.msra.mxu0 0.0
        %1125 = vmatprep.subr.mxu0 0.0
        %1126 = vmatpush2.msra.mxu0 0.0
        %1127 = vmatprep.subr.mxu0 0.0
        %1128 = vmatpush2.msra.mxu0 0.0
        %1129 = vmatprep.subr.mxu0 0.0
        %1130 = vmatpush2.msra.mxu0 0.0
        %1131 = vmatprep.subr.mxu0 0.0
        %1132 = vmatpush2.msra.mxu0 0.0
        %1133 = vmatprep.subr.mxu0 0.0
        %1134 = vmatpush2.msra.mxu0 0.0
        %1135 = vmatprep.subr.mxu0 0.0
        %1136 = vmatpush2.msra.mxu0 0.0
        %1137 = vmatprep.subr.mxu0 0.0
        %1138 = vmatpush2.msra.mxu0 0.0
        %1139 = vmatprep.subr.mxu0 0.0
        %1140 = vmatpush2.msra.mxu0 0.0
        %1141 = vmatprep.subr.mxu0 0.0
        %1142 = vmatpush2.msra.mxu0 0.0
        %1143 = vmatprep.subr.mxu0 0.0
        %1144 = vmatpush2.msra.mxu0 0.0
        %1145 = vmatprep.subr.mxu0 0.0
        %1146 = vmatpush2.msra.mxu0 0.0
        %1147 = vmatprep.subr.mxu0 0.0
        %1148 = vmatpush2.msra.mxu0 0.0
        %1149 = vmatprep.subr.mxu0 0.0
        %1150 = vmatpush2.msra.mxu0 0.0
        %1151 = vmatprep.subr.mxu0 0.0
        %1152 = vmatpush2.msra.mxu0 0.0
        %1153 = vmatprep.subr.mxu0 0.0
        %1154 = vmatpush2.msra.mxu0 0.0
        %1155 = vmatprep.mubr.f32.mxu0 0.0
        %1156 = vmatmul.mubr.f32.gmra.mxu0 %v1089
        %v1157 = vpop.f32.mrf.mxu0
        %v1158 = vadd.f32 0.0, %v1157
        %v1159 = vpop.f32.mrf.mxu0
        %1160 = vdwg.mxu0
        %1161 = vrot.lane.b32.xlu0 %v865, 64
        %v1162 = vpop.permute.xlu0 %1161
        %v1165 = vsel %vm897, %v1084, 0
        %1167 = vmatprep.subr.mxu0 0.0
        %1168 = vmatpush1.msra.mxu0 0.0
        %1169 = vmatprep.subr.mxu0 0.0
        %1170 = vmatpush1.msra.mxu0 0.0
        %1171 = vmatprep.subr.mxu0 0.0
        %1172 = vmatpush1.msra.mxu0 0.0
        %1173 = vmatprep.subr.mxu0 0.0
        %1174 = vmatpush1.msra.mxu0 0.0
        %1175 = vmatprep.subr.mxu0 0.0
        %1176 = vmatpush1.msra.mxu0 0.0
        %1177 = vmatprep.subr.mxu0 0.0
        %1178 = vmatpush1.msra.mxu0 0.0
        %1179 = vmatprep.subr.mxu0 0.0
        %1180 = vmatpush1.msra.mxu0 0.0
        %1181 = vmatprep.subr.mxu0 0.0
        %1182 = vmatpush1.msra.mxu0 0.0
        %1183 = vmatprep.subr.mxu0 0.0
        %1184 = vmatpush1.msra.mxu0 0.0
        %1185 = vmatprep.subr.mxu0 0.0
        %1186 = vmatpush1.msra.mxu0 0.0
        %1187 = vmatprep.subr.mxu0 0.0
        %1188 = vmatpush1.msra.mxu0 0.0
        %1189 = vmatprep.subr.mxu0 0.0
        %1190 = vmatpush1.msra.mxu0 0.0
        %1191 = vmatprep.subr.mxu0 0.0
        %1192 = vmatpush1.msra.mxu0 0.0
        %1193 = vmatprep.subr.mxu0 0.0
        %1194 = vmatpush1.msra.mxu0 0.0
        %1195 = vmatprep.subr.mxu0 0.0
        %1196 = vmatpush1.msra.mxu0 0.0
        %1197 = vmatprep.subr.mxu0 0.0
        %1198 = vmatpush1.msra.mxu0 %v1162
        %1199 = vmatprep.subr.mxu0 0.0
        %1200 = vmatpush2.msra.mxu0 0.0
        %1201 = vmatprep.subr.mxu0 0.0
        %1202 = vmatpush2.msra.mxu0 0.0
        %1203 = vmatprep.subr.mxu0 0.0
        %1204 = vmatpush2.msra.mxu0 0.0
        %1205 = vmatprep.subr.mxu0 0.0
        %1206 = vmatpush2.msra.mxu0 0.0
        %1207 = vmatprep.subr.mxu0 0.0
        %1208 = vmatpush2.msra.mxu0 0.0
        %1209 = vmatprep.subr.mxu0 0.0
        %1210 = vmatpush2.msra.mxu0 0.0
        %1211 = vmatprep.subr.mxu0 0.0
        %1212 = vmatpush2.msra.mxu0 0.0
        %1213 = vmatprep.subr.mxu0 0.0
        %1214 = vmatpush2.msra.mxu0 0.0
        %1215 = vmatprep.subr.mxu0 0.0
        %1216 = vmatpush2.msra.mxu0 0.0
        %1217 = vmatprep.subr.mxu0 0.0
        %1218 = vmatpush2.msra.mxu0 0.0
        %1219 = vmatprep.subr.mxu0 0.0
        %1220 = vmatpush2.msra.mxu0 0.0
        %1221 = vmatprep.subr.mxu0 0.0
        %1222 = vmatpush2.msra.mxu0 0.0
        %1223 = vmatprep.subr.mxu0 0.0
        %1224 = vmatpush2.msra.mxu0 0.0
        %1225 = vmatprep.subr.mxu0 0.0
        %1226 = vmatpush2.msra.mxu0 0.0
        %1227 = vmatprep.subr.mxu0 0.0
        %1228 = vmatpush2.msra.mxu0 0.0
        %1229 = vmatprep.subr.mxu0 0.0
        %1230 = vmatpush2.msra.mxu0 0.0
        %1231 = vmatprep.mubr.f32.mxu0 0.0
        %1232 = vmatmul.mubr.f32.gmra.mxu0 %v1165
        %v1233 = vpop.f32.mrf.mxu0
        %v1234 = vadd.f32 0.0, %v1233
        %v1235 = vpop.f32.mrf.mxu0
        %1236 = vdwg.mxu0
        %1237 = vrot.lane.b32.xlu0 %v860, 120
        %v1238 = vpop.permute.xlu0 %1237
        %1239 = vrot.lane.b32.xlu0 %v860, 88
        %v1240 = vpop.permute.xlu0 %1239
        %v1241 = vsel %vm897, %v1238, 0
        %v1243 = vsel %vm897, %v1240, 0
        %1245 = vmatprep.subr.mxu0 0.0
        %1246 = vmatpush1.xpose.msra.mxu0 0.0
        %1247 = vmatprep.subr.mxu0 0.0
        %1248 = vmatpush1.xpose.msra.mxu0 0.0
        %1249 = vmatprep.subr.mxu0 0.0
        %1250 = vmatpush1.xpose.msra.mxu0 0.0
        %1251 = vmatprep.subr.mxu0 0.0
        %1252 = vmatpush1.xpose.msra.mxu0 0.0
        %1253 = vmatprep.subr.mxu0 0.0
        %1254 = vmatpush1.xpose.msra.mxu0 0.0
        %1255 = vmatprep.subr.mxu0 0.0
        %1256 = vmatpush1.xpose.msra.mxu0 0.0
        %1257 = vmatprep.subr.mxu0 0.0
        %1258 = vmatpush1.xpose.msra.mxu0 0.0
        %1259 = vmatprep.subr.mxu0 0.0
        %1260 = vmatpush1.xpose.msra.mxu0 0.0
        %1261 = vmatprep.subr.mxu0 0.0
        %1262 = vmatpush1.xpose.msra.mxu0 0.0
        %1263 = vmatprep.subr.mxu0 0.0
        %1264 = vmatpush1.xpose.msra.mxu0 0.0
        %1265 = vmatprep.subr.mxu0 0.0
        %1266 = vmatpush1.xpose.msra.mxu0 0.0
        %1267 = vmatprep.subr.mxu0 0.0
        %1268 = vmatpush1.xpose.msra.mxu0 0.0
        %1269 = vmatprep.subr.mxu0 0.0
        %1270 = vmatpush1.xpose.msra.mxu0 0.0
        %1271 = vmatprep.subr.mxu0 0.0
        %1272 = vmatpush1.xpose.msra.mxu0 0.0
        %1273 = vmatprep.subr.mxu0 0.0
        %1274 = vmatpush1.xpose.msra.mxu0 0.0
        %1275 = vmatprep.subr.mxu0 0.0
        %1276 = vmatpush1.xpose.msra.mxu0 %v1243
        %1277 = vmatprep.subr.mxu0 0.0
        %1278 = vmatpush2.xpose.msra.mxu0 0.0
        %1279 = vmatprep.subr.mxu0 0.0
        %1280 = vmatpush2.xpose.msra.mxu0 0.0
        %1281 = vmatprep.subr.mxu0 0.0
        %1282 = vmatpush2.xpose.msra.mxu0 0.0
        %1283 = vmatprep.subr.mxu0 0.0
        %1284 = vmatpush2.xpose.msra.mxu0 0.0
        %1285 = vmatprep.subr.mxu0 0.0
        %1286 = vmatpush2.xpose.msra.mxu0 0.0
        %1287 = vmatprep.subr.mxu0 0.0
        %1288 = vmatpush2.xpose.msra.mxu0 0.0
        %1289 = vmatprep.subr.mxu0 0.0
        %1290 = vmatpush2.xpose.msra.mxu0 0.0
        %1291 = vmatprep.subr.mxu0 0.0
        %1292 = vmatpush2.xpose.msra.mxu0 0.0
        %1293 = vmatprep.subr.mxu0 0.0
        %1294 = vmatpush2.xpose.msra.mxu0 0.0
        %1295 = vmatprep.subr.mxu0 0.0
        %1296 = vmatpush2.xpose.msra.mxu0 0.0
        %1297 = vmatprep.subr.mxu0 0.0
        %1298 = vmatpush2.xpose.msra.mxu0 0.0
        %1299 = vmatprep.subr.mxu0 0.0
        %1300 = vmatpush2.xpose.msra.mxu0 0.0
        %1301 = vmatprep.subr.mxu0 0.0
        %1302 = vmatpush2.xpose.msra.mxu0 0.0
        %1303 = vmatprep.subr.mxu0 0.0
        %1304 = vmatpush2.xpose.msra.mxu0 0.0
        %1305 = vmatprep.subr.mxu0 0.0
        %1306 = vmatpush2.xpose.msra.mxu0 0.0
        %1307 = vmatprep.subr.mxu0 0.0
        %1308 = vmatpush2.xpose.msra.mxu0 0.0
        %1309 = vmatprep.mubr.f32.mxu0 0.0
        %1310 = vmatmul.mubr.f32.gmra.mxu0 %v1241
        %v1311 = vpop.f32.mrf.mxu0
        %v1312 = vadd.f32 0.0, %v1311
        %v1313 = vpop.f32.mrf.mxu0
        %1314 = vdwg.mxu0
        %1315 = vrot.lane.b32.xlu0 %v865, 120
        %v1316 = vpop.permute.xlu0 %1315
        %1317 = vrot.lane.b32.xlu0 %v865, 88
        %v1318 = vpop.permute.xlu0 %1317
        %v1319 = vsel %vm897, %v1316, 0
        %v1321 = vsel %vm897, %v1318, 0
        %1323 = vmatprep.subr.mxu0 0.0
        %1324 = vmatpush1.xpose.msra.mxu0 0.0
        %1325 = vmatprep.subr.mxu0 0.0
        %1326 = vmatpush1.xpose.msra.mxu0 0.0
        %1327 = vmatprep.subr.mxu0 0.0
        %1328 = vmatpush1.xpose.msra.mxu0 0.0
        %1329 = vmatprep.subr.mxu0 0.0
        %1330 = vmatpush1.xpose.msra.mxu0 0.0
        %1331 = vmatprep.subr.mxu0 0.0
        %1332 = vmatpush1.xpose.msra.mxu0 0.0
        %1333 = vmatprep.subr.mxu0 0.0
        %1334 = vmatpush1.xpose.msra.mxu0 0.0
        %1335 = vmatprep.subr.mxu0 0.0
        %1336 = vmatpush1.xpose.msra.mxu0 0.0
        %1337 = vmatprep.subr.mxu0 0.0
        %1338 = vmatpush1.xpose.msra.mxu0 0.0
        %1339 = vmatprep.subr.mxu0 0.0
        %1340 = vmatpush1.xpose.msra.mxu0 0.0
        %1341 = vmatprep.subr.mxu0 0.0
        %1342 = vmatpush1.xpose.msra.mxu0 0.0
        %1343 = vmatprep.subr.mxu0 0.0
        %1344 = vmatpush1.xpose.msra.mxu0 0.0
        %1345 = vmatprep.subr.mxu0 0.0
        %1346 = vmatpush1.xpose.msra.mxu0 0.0
        %1347 = vmatprep.subr.mxu0 0.0
        %1348 = vmatpush1.xpose.msra.mxu0 0.0
        %1349 = vmatprep.subr.mxu0 0.0
        %1350 = vmatpush1.xpose.msra.mxu0 0.0
        %1351 = vmatprep.subr.mxu0 0.0
        %1352 = vmatpush1.xpose.msra.mxu0 0.0
        %1353 = vmatprep.subr.mxu0 0.0
        %1354 = vmatpush1.xpose.msra.mxu0 %v1321
        %1355 = vmatprep.subr.mxu0 0.0
        %1356 = vmatpush2.xpose.msra.mxu0 0.0
        %1357 = vmatprep.subr.mxu0 0.0
        %1358 = vmatpush2.xpose.msra.mxu0 0.0
        %1359 = vmatprep.subr.mxu0 0.0
        %1360 = vmatpush2.xpose.msra.mxu0 0.0
        %1361 = vmatprep.subr.mxu0 0.0
        %1362 = vmatpush2.xpose.msra.mxu0 0.0
        %1363 = vmatprep.subr.mxu0 0.0
        %1364 = vmatpush2.xpose.msra.mxu0 0.0
        %1365 = vmatprep.subr.mxu0 0.0
        %1366 = vmatpush2.xpose.msra.mxu0 0.0
        %1367 = vmatprep.subr.mxu0 0.0
        %1368 = vmatpush2.xpose.msra.mxu0 0.0
        %1369 = vmatprep.subr.mxu0 0.0
        %1370 = vmatpush2.xpose.msra.mxu0 0.0
        %1371 = vmatprep.subr.mxu0 0.0
        %1372 = vmatpush2.xpose.msra.mxu0 0.0
        %1373 = vmatprep.subr.mxu0 0.0
        %1374 = vmatpush2.xpose.msra.mxu0 0.0
        %1375 = vmatprep.subr.mxu0 0.0
        %1376 = vmatpush2.xpose.msra.mxu0 0.0
        %1377 = vmatprep.subr.mxu0 0.0
        %1378 = vmatpush2.xpose.msra.mxu0 0.0
        %1379 = vmatprep.subr.mxu0 0.0
        %1380 = vmatpush2.xpose.msra.mxu0 0.0
        %1381 = vmatprep.subr.mxu0 0.0
        %1382 = vmatpush2.xpose.msra.mxu0 0.0
        %1383 = vmatprep.subr.mxu0 0.0
        %1384 = vmatpush2.xpose.msra.mxu0 0.0
        %1385 = vmatprep.subr.mxu0 0.0
        %1386 = vmatpush2.xpose.msra.mxu0 0.0
        %1387 = vmatprep.mubr.f32.mxu0 0.0
        %1388 = vmatmul.mubr.f32.gmra.mxu0 %v1319
        %v1389 = vpop.f32.mrf.mxu0
        %v1390 = vadd.f32 0.0, %v1389
        %v1391 = vpop.f32.mrf.mxu0
        %1392 = vdwg.mxu0
        %v1393 = vmul.f32 %v1312, 0.35355338
        %v1394 = vmul.f32 %v1390, 0.35355338
        %v1395 = vadd.f32 %v1393, %v1054
        %v1396 = vadd.f32 %v1394, %v1058
        %v1397 = vsel %vm897, %v1395, -inf
        %1398 = vmax.xlane.f32.xlu0 %v1397
        %v1399 = vpop.xlane.xlu0 %1398
        %v1400 = vsel %vm897, %v1396, -inf
        %1401 = vmax.xlane.f32.xlu0 %v1400
        %v1402 = vpop.xlane.xlu0 %1401
        %v1403 = vsub.f32 %v1395, %v1399
        %v1404 = vsub.f32 %v1396, %v1402
        %v1405 = vmul.f32 %v1403, 1.442695
        %v1406 = vpow.pop %v1405
        %v1407 = vmul.f32 %v1404, 1.442695
        %v1408 = vpow.pop %v1407
        %v1409 = vsel %vm897, %v1406, 0.0
        %1410 = vadd.xlane.f32.xlu0 %v1409
        %v1411 = vpop.xlane.xlu0 %1410
        %v1412 = vsel %vm897, %v1408, 0.0
        %1413 = vadd.xlane.f32.xlu0 %v1412
        %v1414 = vpop.xlane.xlu0 %1413
        %v1415 = vrcp.pop %v1411
        %v1416 = vrcp.pop %v1414
        %v1417 = vmul.f32 %v1406, %v1415
        %v1418 = vmul.f32 %v1408, %v1416
        %1419 = vrot.lane.b32.xlu0 %v860, 56
        %v1420 = vpop.permute.xlu0 %1419
        %v1423 = vsel %vm897, %v1417, 0
        %1425 = vmatprep.subr.mxu0 0.0
        %1426 = vmatpush1.msra.mxu0 0.0
        %1427 = vmatprep.subr.mxu0 0.0
        %1428 = vmatpush1.msra.mxu0 0.0
        %1429 = vmatprep.subr.mxu0 0.0
        %1430 = vmatpush1.msra.mxu0 0.0
        %1431 = vmatprep.subr.mxu0 0.0
        %1432 = vmatpush1.msra.mxu0 0.0
        %1433 = vmatprep.subr.mxu0 0.0
        %1434 = vmatpush1.msra.mxu0 0.0
        %1435 = vmatprep.subr.mxu0 0.0
        %1436 = vmatpush1.msra.mxu0 0.0
        %1437 = vmatprep.subr.mxu0 0.0
        %1438 = vmatpush1.msra.mxu0 0.0
        %1439 = vmatprep.subr.mxu0 0.0
        %1440 = vmatpush1.msra.mxu0 0.0
        %1441 = vmatprep.subr.mxu0 0.0
        %1442 = vmatpush1.msra.mxu0 0.0
        %1443 = vmatprep.subr.mxu0 0.0
        %1444 = vmatpush1.msra.mxu0 0.0
        %1445 = vmatprep.subr.mxu0 0.0
        %1446 = vmatpush1.msra.mxu0 0.0
        %1447 = vmatprep.subr.mxu0 0.0
        %1448 = vmatpush1.msra.mxu0 0.0
        %1449 = vmatprep.subr.mxu0 0.0
        %1450 = vmatpush1.msra.mxu0 0.0
        %1451 = vmatprep.subr.mxu0 0.0
        %1452 = vmatpush1.msra.mxu0 0.0
        %1453 = vmatprep.subr.mxu0 0.0
        %1454 = vmatpush1.msra.mxu0 0.0
        %1455 = vmatprep.subr.mxu0 0.0
        %1456 = vmatpush1.msra.mxu0 %v1420
        %1457 = vmatprep.subr.mxu0 0.0
        %1458 = vmatpush2.msra.mxu0 0.0
        %1459 = vmatprep.subr.mxu0 0.0
        %1460 = vmatpush2.msra.mxu0 0.0
        %1461 = vmatprep.subr.mxu0 0.0
        %1462 = vmatpush2.msra.mxu0 0.0
        %1463 = vmatprep.subr.mxu0 0.0
        %1464 = vmatpush2.msra.mxu0 0.0
        %1465 = vmatprep.subr.mxu0 0.0
        %1466 = vmatpush2.msra.mxu0 0.0
        %1467 = vmatprep.subr.mxu0 0.0
        %1468 = vmatpush2.msra.mxu0 0.0
        %1469 = vmatprep.subr.mxu0 0.0
        %1470 = vmatpush2.msra.mxu0 0.0
        %1471 = vmatprep.subr.mxu0 0.0
        %1472 = vmatpush2.msra.mxu0 0.0
        %1473 = vmatprep.subr.mxu0 0.0
        %1474 = vmatpush2.msra.mxu0 0.0
        %1475 = vmatprep.subr.mxu0 0.0
        %1476 = vmatpush2.msra.mxu0 0.0
        %1477 = vmatprep.subr.mxu0 0.0
        %1478 = vmatpush2.msra.mxu0 0.0
        %1479 = vmatprep.subr.mxu0 0.0
        %1480 = vmatpush2.msra.mxu0 0.0
        %1481 = vmatprep.subr.mxu0 0.0
        %1482 = vmatpush2.msra.mxu0 0.0
        %1483 = vmatprep.subr.mxu0 0.0
        %1484 = vmatpush2.msra.mxu0 0.0
        %1485 = vmatprep.subr.mxu0 0.0
        %1486 = vmatpush2.msra.mxu0 0.0
        %1487 = vmatprep.subr.mxu0 0.0
        %1488 = vmatpush2.msra.mxu0 0.0
        %1489 = vmatprep.mubr.f32.mxu0 0.0
        %1490 = vmatmul.mubr.f32.gmra.mxu0 %v1423
        %v1491 = vpop.f32.mrf.mxu0
        %v1492 = vadd.f32 0.0, %v1491
        %v1493 = vpop.f32.mrf.mxu0
        %1494 = vdwg.mxu0
        %1495 = vrot.lane.b32.xlu0 %v865, 56
        %v1496 = vpop.permute.xlu0 %1495
        %v1499 = vsel %vm897, %v1418, 0
        %1501 = vmatprep.subr.mxu0 0.0
        %1502 = vmatpush1.msra.mxu0 0.0
        %1503 = vmatprep.subr.mxu0 0.0
        %1504 = vmatpush1.msra.mxu0 0.0
        %1505 = vmatprep.subr.mxu0 0.0
        %1506 = vmatpush1.msra.mxu0 0.0
        %1507 = vmatprep.subr.mxu0 0.0
        %1508 = vmatpush1.msra.mxu0 0.0
        %1509 = vmatprep.subr.mxu0 0.0
        %1510 = vmatpush1.msra.mxu0 0.0
        %1511 = vmatprep.subr.mxu0 0.0
        %1512 = vmatpush1.msra.mxu0 0.0
        %1513 = vmatprep.subr.mxu0 0.0
        %1514 = vmatpush1.msra.mxu0 0.0
        %1515 = vmatprep.subr.mxu0 0.0
        %1516 = vmatpush1.msra.mxu0 0.0
        %1517 = vmatprep.subr.mxu0 0.0
        %1518 = vmatpush1.msra.mxu0 0.0
        %1519 = vmatprep.subr.mxu0 0.0
        %1520 = vmatpush1.msra.mxu0 0.0
        %1521 = vmatprep.subr.mxu0 0.0
        %1522 = vmatpush1.msra.mxu0 0.0
        %1523 = vmatprep.subr.mxu0 0.0
        %1524 = vmatpush1.msra.mxu0 0.0
        %1525 = vmatprep.subr.mxu0 0.0
        %1526 = vmatpush1.msra.mxu0 0.0
        %1527 = vmatprep.subr.mxu0 0.0
        %1528 = vmatpush1.msra.mxu0 0.0
        %1529 = vmatprep.subr.mxu0 0.0
        %1530 = vmatpush1.msra.mxu0 0.0
        %1531 = vmatprep.subr.mxu0 0.0
        %1532 = vmatpush1.msra.mxu0 %v1496
        %1533 = vmatprep.subr.mxu0 0.0
        %1534 = vmatpush2.msra.mxu0 0.0
        %1535 = vmatprep.subr.mxu0 0.0
        %1536 = vmatpush2.msra.mxu0 0.0
        %1537 = vmatprep.subr.mxu0 0.0
        %1538 = vmatpush2.msra.mxu0 0.0
        %1539 = vmatprep.subr.mxu0 0.0
        %1540 = vmatpush2.msra.mxu0 0.0
        %1541 = vmatprep.subr.mxu0 0.0
        %1542 = vmatpush2.msra.mxu0 0.0
        %1543 = vmatprep.subr.mxu0 0.0
        %1544 = vmatpush2.msra.mxu0 0.0
        %1545 = vmatprep.subr.mxu0 0.0
        %1546 = vmatpush2.msra.mxu0 0.0
        %1547 = vmatprep.subr.mxu0 0.0
        %1548 = vmatpush2.msra.mxu0 0.0
        %1549 = vmatprep.subr.mxu0 0.0
        %1550 = vmatpush2.msra.mxu0 0.0
        %1551 = vmatprep.subr.mxu0 0.0
        %1552 = vmatpush2.msra.mxu0 0.0
        %1553 = vmatprep.subr.mxu0 0.0
        %1554 = vmatpush2.msra.mxu0 0.0
        %1555 = vmatprep.subr.mxu0 0.0
        %1556 = vmatpush2.msra.mxu0 0.0
        %1557 = vmatprep.subr.mxu0 0.0
        %1558 = vmatpush2.msra.mxu0 0.0
        %1559 = vmatprep.subr.mxu0 0.0
        %1560 = vmatpush2.msra.mxu0 0.0
        %1561 = vmatprep.subr.mxu0 0.0
        %1562 = vmatpush2.msra.mxu0 0.0
        %1563 = vmatprep.subr.mxu0 0.0
        %1564 = vmatpush2.msra.mxu0 0.0
        %1565 = vmatprep.mubr.f32.mxu0 0.0
        %1566 = vmatmul.mubr.f32.gmra.mxu0 %v1499
        %v1567 = vpop.f32.mrf.mxu0
        %v1568 = vadd.f32 0.0, %v1567
        %v1569 = vpop.f32.mrf.mxu0
        %1570 = vdwg.mxu0
        %1571 = vrot.lane.b32.xlu0 %v860, 112
        %v1572 = vpop.permute.xlu0 %1571
        %1573 = vrot.lane.b32.xlu0 %v860, 80
        %v1574 = vpop.permute.xlu0 %1573
        %v1575 = vsel %vm897, %v1572, 0
        %v1577 = vsel %vm897, %v1574, 0
        %1579 = vmatprep.subr.mxu0 0.0
        %1580 = vmatpush1.xpose.msra.mxu0 0.0
        %1581 = vmatprep.subr.mxu0 0.0
        %1582 = vmatpush1.xpose.msra.mxu0 0.0
        %1583 = vmatprep.subr.mxu0 0.0
        %1584 = vmatpush1.xpose.msra.mxu0 0.0
        %1585 = vmatprep.subr.mxu0 0.0
        %1586 = vmatpush1.xpose.msra.mxu0 0.0
        %1587 = vmatprep.subr.mxu0 0.0
        %1588 = vmatpush1.xpose.msra.mxu0 0.0
        %1589 = vmatprep.subr.mxu0 0.0
        %1590 = vmatpush1.xpose.msra.mxu0 0.0
        %1591 = vmatprep.subr.mxu0 0.0
        %1592 = vmatpush1.xpose.msra.mxu0 0.0
        %1593 = vmatprep.subr.mxu0 0.0
        %1594 = vmatpush1.xpose.msra.mxu0 0.0
        %1595 = vmatprep.subr.mxu0 0.0
        %1596 = vmatpush1.xpose.msra.mxu0 0.0
        %1597 = vmatprep.subr.mxu0 0.0
        %1598 = vmatpush1.xpose.msra.mxu0 0.0
        %1599 = vmatprep.subr.mxu0 0.0
        %1600 = vmatpush1.xpose.msra.mxu0 0.0
        %1601 = vmatprep.subr.mxu0 0.0
        %1602 = vmatpush1.xpose.msra.mxu0 0.0
        %1603 = vmatprep.subr.mxu0 0.0
        %1604 = vmatpush1.xpose.msra.mxu0 0.0
        %1605 = vmatprep.subr.mxu0 0.0
        %1606 = vmatpush1.xpose.msra.mxu0 0.0
        %1607 = vmatprep.subr.mxu0 0.0
        %1608 = vmatpush1.xpose.msra.mxu0 0.0
        %1609 = vmatprep.subr.mxu0 0.0
        %1610 = vmatpush1.xpose.msra.mxu0 %v1577
        %1611 = vmatprep.subr.mxu0 0.0
        %1612 = vmatpush2.xpose.msra.mxu0 0.0
        %1613 = vmatprep.subr.mxu0 0.0
        %1614 = vmatpush2.xpose.msra.mxu0 0.0
        %1615 = vmatprep.subr.mxu0 0.0
        %1616 = vmatpush2.xpose.msra.mxu0 0.0
        %1617 = vmatprep.subr.mxu0 0.0
        %1618 = vmatpush2.xpose.msra.mxu0 0.0
        %1619 = vmatprep.subr.mxu0 0.0
        %1620 = vmatpush2.xpose.msra.mxu0 0.0
        %1621 = vmatprep.subr.mxu0 0.0
        %1622 = vmatpush2.xpose.msra.mxu0 0.0
        %1623 = vmatprep.subr.mxu0 0.0
        %1624 = vmatpush2.xpose.msra.mxu0 0.0
        %1625 = vmatprep.subr.mxu0 0.0
        %1626 = vmatpush2.xpose.msra.mxu0 0.0
        %1627 = vmatprep.subr.mxu0 0.0
        %1628 = vmatpush2.xpose.msra.mxu0 0.0
        %1629 = vmatprep.subr.mxu0 0.0
        %1630 = vmatpush2.xpose.msra.mxu0 0.0
        %1631 = vmatprep.subr.mxu0 0.0
        %1632 = vmatpush2.xpose.msra.mxu0 0.0
        %1633 = vmatprep.subr.mxu0 0.0
        %1634 = vmatpush2.xpose.msra.mxu0 0.0
        %1635 = vmatprep.subr.mxu0 0.0
        %1636 = vmatpush2.xpose.msra.mxu0 0.0
        %1637 = vmatprep.subr.mxu0 0.0
        %1638 = vmatpush2.xpose.msra.mxu0 0.0
        %1639 = vmatprep.subr.mxu0 0.0
        %1640 = vmatpush2.xpose.msra.mxu0 0.0
        %1641 = vmatprep.subr.mxu0 0.0
        %1642 = vmatpush2.xpose.msra.mxu0 0.0
        %1643 = vmatprep.mubr.f32.mxu0 0.0
        %1644 = vmatmul.mubr.f32.gmra.mxu0 %v1575
        %v1645 = vpop.f32.mrf.mxu0
        %v1646 = vadd.f32 0.0, %v1645
        %v1647 = vpop.f32.mrf.mxu0
        %1648 = vdwg.mxu0
        %1649 = vrot.lane.b32.xlu0 %v865, 112
        %v1650 = vpop.permute.xlu0 %1649
        %1651 = vrot.lane.b32.xlu0 %v865, 80
        %v1652 = vpop.permute.xlu0 %1651
        %v1653 = vsel %vm897, %v1650, 0
        %v1655 = vsel %vm897, %v1652, 0
        %1657 = vmatprep.subr.mxu0 0.0
        %1658 = vmatpush1.xpose.msra.mxu0 0.0
        %1659 = vmatprep.subr.mxu0 0.0
        %1660 = vmatpush1.xpose.msra.mxu0 0.0
        %1661 = vmatprep.subr.mxu0 0.0
        %1662 = vmatpush1.xpose.msra.mxu0 0.0
        %1663 = vmatprep.subr.mxu0 0.0
        %1664 = vmatpush1.xpose.msra.mxu0 0.0
        %1665 = vmatprep.subr.mxu0 0.0
        %1666 = vmatpush1.xpose.msra.mxu0 0.0
        %1667 = vmatprep.subr.mxu0 0.0
        %1668 = vmatpush1.xpose.msra.mxu0 0.0
        %1669 = vmatprep.subr.mxu0 0.0
        %1670 = vmatpush1.xpose.msra.mxu0 0.0
        %1671 = vmatprep.subr.mxu0 0.0
        %1672 = vmatpush1.xpose.msra.mxu0 0.0
        %1673 = vmatprep.subr.mxu0 0.0
        %1674 = vmatpush1.xpose.msra.mxu0 0.0
        %1675 = vmatprep.subr.mxu0 0.0
        %1676 = vmatpush1.xpose.msra.mxu0 0.0
        %1677 = vmatprep.subr.mxu0 0.0
        %1678 = vmatpush1.xpose.msra.mxu0 0.0
        %1679 = vmatprep.subr.mxu0 0.0
        %1680 = vmatpush1.xpose.msra.mxu0 0.0
        %1681 = vmatprep.subr.mxu0 0.0
        %1682 = vmatpush1.xpose.msra.mxu0 0.0
        %1683 = vmatprep.subr.mxu0 0.0
        %1684 = vmatpush1.xpose.msra.mxu0 0.0
        %1685 = vmatprep.subr.mxu0 0.0
        %1686 = vmatpush1.xpose.msra.mxu0 0.0
        %1687 = vmatprep.subr.mxu0 0.0
        %1688 = vmatpush1.xpose.msra.mxu0 %v1655
        %1689 = vmatprep.subr.mxu0 0.0
        %1690 = vmatpush2.xpose.msra.mxu0 0.0
        %1691 = vmatprep.subr.mxu0 0.0
        %1692 = vmatpush2.xpose.msra.mxu0 0.0
        %1693 = vmatprep.subr.mxu0 0.0
        %1694 = vmatpush2.xpose.msra.mxu0 0.0
        %1695 = vmatprep.subr.mxu0 0.0
        %1696 = vmatpush2.xpose.msra.mxu0 0.0
        %1697 = vmatprep.subr.mxu0 0.0
        %1698 = vmatpush2.xpose.msra.mxu0 0.0
        %1699 = vmatprep.subr.mxu0 0.0
        %1700 = vmatpush2.xpose.msra.mxu0 0.0
        %1701 = vmatprep.subr.mxu0 0.0
        %1702 = vmatpush2.xpose.msra.mxu0 0.0
        %1703 = vmatprep.subr.mxu0 0.0
        %1704 = vmatpush2.xpose.msra.mxu0 0.0
        %1705 = vmatprep.subr.mxu0 0.0
        %1706 = vmatpush2.xpose.msra.mxu0 0.0
        %1707 = vmatprep.subr.mxu0 0.0
        %1708 = vmatpush2.xpose.msra.mxu0 0.0
        %1709 = vmatprep.subr.mxu0 0.0
        %1710 = vmatpush2.xpose.msra.mxu0 0.0
        %1711 = vmatprep.subr.mxu0 0.0
        %1712 = vmatpush2.xpose.msra.mxu0 0.0
        %1713 = vmatprep.subr.mxu0 0.0
        %1714 = vmatpush2.xpose.msra.mxu0 0.0
        %1715 = vmatprep.subr.mxu0 0.0
        %1716 = vmatpush2.xpose.msra.mxu0 0.0
        %1717 = vmatprep.subr.mxu0 0.0
        %1718 = vmatpush2.xpose.msra.mxu0 0.0
        %1719 = vmatprep.subr.mxu0 0.0
        %1720 = vmatpush2.xpose.msra.mxu0 0.0
        %1721 = vmatprep.mubr.f32.mxu0 0.0
        %1722 = vmatmul.mubr.f32.gmra.mxu0 %v1653
        %v1723 = vpop.f32.mrf.mxu0
        %v1724 = vadd.f32 0.0, %v1723
        %v1725 = vpop.f32.mrf.mxu0
        %1726 = vdwg.mxu0
        %v1727 = vmul.f32 %v1646, 0.35355338
        %v1728 = vmul.f32 %v1724, 0.35355338
        %v1729 = vadd.f32 %v1727, %v1054
        %v1730 = vadd.f32 %v1728, %v1058
        %v1731 = vsel %vm897, %v1729, -inf
        %1732 = vmax.xlane.f32.xlu0 %v1731
        %v1733 = vpop.xlane.xlu0 %1732
        %v1734 = vsel %vm897, %v1730, -inf
        %1735 = vmax.xlane.f32.xlu0 %v1734
        %v1736 = vpop.xlane.xlu0 %1735
        %v1737 = vsub.f32 %v1729, %v1733
        %v1738 = vsub.f32 %v1730, %v1736
        %v1739 = vmul.f32 %v1737, 1.442695
        %v1740 = vpow.pop %v1739
        %v1741 = vmul.f32 %v1738, 1.442695
        %v1742 = vpow.pop %v1741
        %v1743 = vsel %vm897, %v1740, 0.0
        %1744 = vadd.xlane.f32.xlu0 %v1743
        %v1745 = vpop.xlane.xlu0 %1744
        %v1746 = vsel %vm897, %v1742, 0.0
        %1747 = vadd.xlane.f32.xlu0 %v1746
        %v1748 = vpop.xlane.xlu0 %1747
        %v1749 = vrcp.pop %v1745
        %v1750 = vrcp.pop %v1748
        %v1751 = vmul.f32 %v1740, %v1749
        %v1752 = vmul.f32 %v1742, %v1750
        %1753 = vrot.lane.b32.xlu0 %v860, 48
        %v1754 = vpop.permute.xlu0 %1753
        %v1757 = vsel %vm897, %v1751, 0
        %1759 = vmatprep.subr.mxu0 0.0
        %1760 = vmatpush1.msra.mxu0 0.0
        %1761 = vmatprep.subr.mxu0 0.0
        %1762 = vmatpush1.msra.mxu0 0.0
        %1763 = vmatprep.subr.mxu0 0.0
        %1764 = vmatpush1.msra.mxu0 0.0
        %1765 = vmatprep.subr.mxu0 0.0
        %1766 = vmatpush1.msra.mxu0 0.0
        %1767 = vmatprep.subr.mxu0 0.0
        %1768 = vmatpush1.msra.mxu0 0.0
        %1769 = vmatprep.subr.mxu0 0.0
        %1770 = vmatpush1.msra.mxu0 0.0
        %1771 = vmatprep.subr.mxu0 0.0
        %1772 = vmatpush1.msra.mxu0 0.0
        %1773 = vmatprep.subr.mxu0 0.0
        %1774 = vmatpush1.msra.mxu0 0.0
        %1775 = vmatprep.subr.mxu0 0.0
        %1776 = vmatpush1.msra.mxu0 0.0
        %1777 = vmatprep.subr.mxu0 0.0
        %1778 = vmatpush1.msra.mxu0 0.0
        %1779 = vmatprep.subr.mxu0 0.0
        %1780 = vmatpush1.msra.mxu0 0.0
        %1781 = vmatprep.subr.mxu0 0.0
        %1782 = vmatpush1.msra.mxu0 0.0
        %1783 = vmatprep.subr.mxu0 0.0
        %1784 = vmatpush1.msra.mxu0 0.0
        %1785 = vmatprep.subr.mxu0 0.0
        %1786 = vmatpush1.msra.mxu0 0.0
        %1787 = vmatprep.subr.mxu0 0.0
        %1788 = vmatpush1.msra.mxu0 0.0
        %1789 = vmatprep.subr.mxu0 0.0
        %1790 = vmatpush1.msra.mxu0 %v1754
        %1791 = vmatprep.subr.mxu0 0.0
        %1792 = vmatpush2.msra.mxu0 0.0
        %1793 = vmatprep.subr.mxu0 0.0
        %1794 = vmatpush2.msra.mxu0 0.0
        %1795 = vmatprep.subr.mxu0 0.0
        %1796 = vmatpush2.msra.mxu0 0.0
        %1797 = vmatprep.subr.mxu0 0.0
        %1798 = vmatpush2.msra.mxu0 0.0
        %1799 = vmatprep.subr.mxu0 0.0
        %1800 = vmatpush2.msra.mxu0 0.0
        %1801 = vmatprep.subr.mxu0 0.0
        %1802 = vmatpush2.msra.mxu0 0.0
        %1803 = vmatprep.subr.mxu0 0.0
        %1804 = vmatpush2.msra.mxu0 0.0
        %1805 = vmatprep.subr.mxu0 0.0
        %1806 = vmatpush2.msra.mxu0 0.0
        %1807 = vmatprep.subr.mxu0 0.0
        %1808 = vmatpush2.msra.mxu0 0.0
        %1809 = vmatprep.subr.mxu0 0.0
        %1810 = vmatpush2.msra.mxu0 0.0
        %1811 = vmatprep.subr.mxu0 0.0
        %1812 = vmatpush2.msra.mxu0 0.0
        %1813 = vmatprep.subr.mxu0 0.0
        %1814 = vmatpush2.msra.mxu0 0.0
        %1815 = vmatprep.subr.mxu0 0.0
        %1816 = vmatpush2.msra.mxu0 0.0
        %1817 = vmatprep.subr.mxu0 0.0
        %1818 = vmatpush2.msra.mxu0 0.0
        %1819 = vmatprep.subr.mxu0 0.0
        %1820 = vmatpush2.msra.mxu0 0.0
        %1821 = vmatprep.subr.mxu0 0.0
        %1822 = vmatpush2.msra.mxu0 0.0
        %1823 = vmatprep.mubr.f32.mxu0 0.0
        %1824 = vmatmul.mubr.f32.gmra.mxu0 %v1757
        %v1825 = vpop.f32.mrf.mxu0
        %v1826 = vadd.f32 0.0, %v1825
        %v1827 = vpop.f32.mrf.mxu0
        %1828 = vdwg.mxu0
        %1829 = vrot.lane.b32.xlu0 %v865, 48
        %v1830 = vpop.permute.xlu0 %1829
        %v1833 = vsel %vm897, %v1752, 0
        %1835 = vmatprep.subr.mxu0 0.0
        %1836 = vmatpush1.msra.mxu0 0.0
        %1837 = vmatprep.subr.mxu0 0.0
        %1838 = vmatpush1.msra.mxu0 0.0
        %1839 = vmatprep.subr.mxu0 0.0
        %1840 = vmatpush1.msra.mxu0 0.0
        %1841 = vmatprep.subr.mxu0 0.0
        %1842 = vmatpush1.msra.mxu0 0.0
        %1843 = vmatprep.subr.mxu0 0.0
        %1844 = vmatpush1.msra.mxu0 0.0
        %1845 = vmatprep.subr.mxu0 0.0
        %1846 = vmatpush1.msra.mxu0 0.0
        %1847 = vmatprep.subr.mxu0 0.0
        %1848 = vmatpush1.msra.mxu0 0.0
        %1849 = vmatprep.subr.mxu0 0.0
        %1850 = vmatpush1.msra.mxu0 0.0
        %1851 = vmatprep.subr.mxu0 0.0
        %1852 = vmatpush1.msra.mxu0 0.0
        %1853 = vmatprep.subr.mxu0 0.0
        %1854 = vmatpush1.msra.mxu0 0.0
        %1855 = vmatprep.subr.mxu0 0.0
        %1856 = vmatpush1.msra.mxu0 0.0
        %1857 = vmatprep.subr.mxu0 0.0
        %1858 = vmatpush1.msra.mxu0 0.0
        %1859 = vmatprep.subr.mxu0 0.0
        %1860 = vmatpush1.msra.mxu0 0.0
        %1861 = vmatprep.subr.mxu0 0.0
        %1862 = vmatpush1.msra.mxu0 0.0
        %1863 = vmatprep.subr.mxu0 0.0
        %1864 = vmatpush1.msra.mxu0 0.0
        %1865 = vmatprep.subr.mxu0 0.0
        %1866 = vmatpush1.msra.mxu0 %v1830
        %1867 = vmatprep.subr.mxu0 0.0
        %1868 = vmatpush2.msra.mxu0 0.0
        %1869 = vmatprep.subr.mxu0 0.0
        %1870 = vmatpush2.msra.mxu0 0.0
        %1871 = vmatprep.subr.mxu0 0.0
        %1872 = vmatpush2.msra.mxu0 0.0
        %1873 = vmatprep.subr.mxu0 0.0
        %1874 = vmatpush2.msra.mxu0 0.0
        %1875 = vmatprep.subr.mxu0 0.0
        %1876 = vmatpush2.msra.mxu0 0.0
        %1877 = vmatprep.subr.mxu0 0.0
        %1878 = vmatpush2.msra.mxu0 0.0
        %1879 = vmatprep.subr.mxu0 0.0
        %1880 = vmatpush2.msra.mxu0 0.0
        %1881 = vmatprep.subr.mxu0 0.0
        %1882 = vmatpush2.msra.mxu0 0.0
        %1883 = vmatprep.subr.mxu0 0.0
        %1884 = vmatpush2.msra.mxu0 0.0
        %1885 = vmatprep.subr.mxu0 0.0
        %1886 = vmatpush2.msra.mxu0 0.0
        %1887 = vmatprep.subr.mxu0 0.0
        %1888 = vmatpush2.msra.mxu0 0.0
        %1889 = vmatprep.subr.mxu0 0.0
        %1890 = vmatpush2.msra.mxu0 0.0
        %1891 = vmatprep.subr.mxu0 0.0
        %1892 = vmatpush2.msra.mxu0 0.0
        %1893 = vmatprep.subr.mxu0 0.0
        %1894 = vmatpush2.msra.mxu0 0.0
        %1895 = vmatprep.subr.mxu0 0.0
        %1896 = vmatpush2.msra.mxu0 0.0
        %1897 = vmatprep.subr.mxu0 0.0
        %1898 = vmatpush2.msra.mxu0 0.0
        %1899 = vmatprep.mubr.f32.mxu0 0.0
        %1900 = vmatmul.mubr.f32.gmra.mxu0 %v1833
        %v1901 = vpop.f32.mrf.mxu0
        %v1902 = vadd.f32 0.0, %v1901
        %v1903 = vpop.f32.mrf.mxu0
        %1904 = vdwg.mxu0
        %1905 = vrot.lane.b32.xlu0 %v860, 104
        %v1906 = vpop.permute.xlu0 %1905
        %1907 = vrot.lane.b32.xlu0 %v860, 72
        %v1908 = vpop.permute.xlu0 %1907
        %v1909 = vsel %vm897, %v1906, 0
        %v1911 = vsel %vm897, %v1908, 0
        %1913 = vmatprep.subr.mxu0 0.0
        %1914 = vmatpush1.xpose.msra.mxu0 0.0
        %1915 = vmatprep.subr.mxu0 0.0
        %1916 = vmatpush1.xpose.msra.mxu0 0.0
        %1917 = vmatprep.subr.mxu0 0.0
        %1918 = vmatpush1.xpose.msra.mxu0 0.0
        %1919 = vmatprep.subr.mxu0 0.0
        %1920 = vmatpush1.xpose.msra.mxu0 0.0
        %1921 = vmatprep.subr.mxu0 0.0
        %1922 = vmatpush1.xpose.msra.mxu0 0.0
        %1923 = vmatprep.subr.mxu0 0.0
        %1924 = vmatpush1.xpose.msra.mxu0 0.0
        %1925 = vmatprep.subr.mxu0 0.0
        %1926 = vmatpush1.xpose.msra.mxu0 0.0
        %1927 = vmatprep.subr.mxu0 0.0
        %1928 = vmatpush1.xpose.msra.mxu0 0.0
        %1929 = vmatprep.subr.mxu0 0.0
        %1930 = vmatpush1.xpose.msra.mxu0 0.0
        %1931 = vmatprep.subr.mxu0 0.0
        %1932 = vmatpush1.xpose.msra.mxu0 0.0
        %1933 = vmatprep.subr.mxu0 0.0
        %1934 = vmatpush1.xpose.msra.mxu0 0.0
        %1935 = vmatprep.subr.mxu0 0.0
        %1936 = vmatpush1.xpose.msra.mxu0 0.0
        %1937 = vmatprep.subr.mxu0 0.0
        %1938 = vmatpush1.xpose.msra.mxu0 0.0
        %1939 = vmatprep.subr.mxu0 0.0
        %1940 = vmatpush1.xpose.msra.mxu0 0.0
        %1941 = vmatprep.subr.mxu0 0.0
        %1942 = vmatpush1.xpose.msra.mxu0 0.0
        %1943 = vmatprep.subr.mxu0 0.0
        %1944 = vmatpush1.xpose.msra.mxu0 %v1911
        %1945 = vmatprep.subr.mxu0 0.0
        %1946 = vmatpush2.xpose.msra.mxu0 0.0
        %1947 = vmatprep.subr.mxu0 0.0
        %1948 = vmatpush2.xpose.msra.mxu0 0.0
        %1949 = vmatprep.subr.mxu0 0.0
        %1950 = vmatpush2.xpose.msra.mxu0 0.0
        %1951 = vmatprep.subr.mxu0 0.0
        %1952 = vmatpush2.xpose.msra.mxu0 0.0
        %1953 = vmatprep.subr.mxu0 0.0
        %1954 = vmatpush2.xpose.msra.mxu0 0.0
        %1955 = vmatprep.subr.mxu0 0.0
        %1956 = vmatpush2.xpose.msra.mxu0 0.0
        %1957 = vmatprep.subr.mxu0 0.0
        %1958 = vmatpush2.xpose.msra.mxu0 0.0
        %1959 = vmatprep.subr.mxu0 0.0
        %1960 = vmatpush2.xpose.msra.mxu0 0.0
        %1961 = vmatprep.subr.mxu0 0.0
        %1962 = vmatpush2.xpose.msra.mxu0 0.0
        %1963 = vmatprep.subr.mxu0 0.0
        %1964 = vmatpush2.xpose.msra.mxu0 0.0
        %1965 = vmatprep.subr.mxu0 0.0
        %1966 = vmatpush2.xpose.msra.mxu0 0.0
        %1967 = vmatprep.subr.mxu0 0.0
        %1968 = vmatpush2.xpose.msra.mxu0 0.0
        %1969 = vmatprep.subr.mxu0 0.0
        %1970 = vmatpush2.xpose.msra.mxu0 0.0
        %1971 = vmatprep.subr.mxu0 0.0
        %1972 = vmatpush2.xpose.msra.mxu0 0.0
        %1973 = vmatprep.subr.mxu0 0.0
        %1974 = vmatpush2.xpose.msra.mxu0 0.0
        %1975 = vmatprep.subr.mxu0 0.0
        %1976 = vmatpush2.xpose.msra.mxu0 0.0
        %1977 = vmatprep.mubr.f32.mxu0 0.0
        %1978 = vmatmul.mubr.f32.gmra.mxu0 %v1909
        %v1979 = vpop.f32.mrf.mxu0
        %v1980 = vadd.f32 0.0, %v1979
        %v1981 = vpop.f32.mrf.mxu0
        %1982 = vdwg.mxu0
        %1983 = vrot.lane.b32.xlu0 %v865, 104
        %v1984 = vpop.permute.xlu0 %1983
        %1985 = vrot.lane.b32.xlu0 %v865, 72
        %v1986 = vpop.permute.xlu0 %1985
        %v1987 = vsel %vm897, %v1984, 0
        %v1989 = vsel %vm897, %v1986, 0
        %1991 = vmatprep.subr.mxu0 0.0
        %1992 = vmatpush1.xpose.msra.mxu0 0.0
        %1993 = vmatprep.subr.mxu0 0.0
        %1994 = vmatpush1.xpose.msra.mxu0 0.0
        %1995 = vmatprep.subr.mxu0 0.0
        %1996 = vmatpush1.xpose.msra.mxu0 0.0
        %1997 = vmatprep.subr.mxu0 0.0
        %1998 = vmatpush1.xpose.msra.mxu0 0.0
        %1999 = vmatprep.subr.mxu0 0.0
        %2000 = vmatpush1.xpose.msra.mxu0 0.0
        %2001 = vmatprep.subr.mxu0 0.0
        %2002 = vmatpush1.xpose.msra.mxu0 0.0
        %2003 = vmatprep.subr.mxu0 0.0
        %2004 = vmatpush1.xpose.msra.mxu0 0.0
        %2005 = vmatprep.subr.mxu0 0.0
        %2006 = vmatpush1.xpose.msra.mxu0 0.0
        %2007 = vmatprep.subr.mxu0 0.0
        %2008 = vmatpush1.xpose.msra.mxu0 0.0
        %2009 = vmatprep.subr.mxu0 0.0
        %2010 = vmatpush1.xpose.msra.mxu0 0.0
        %2011 = vmatprep.subr.mxu0 0.0
        %2012 = vmatpush1.xpose.msra.mxu0 0.0
        %2013 = vmatprep.subr.mxu0 0.0
        %2014 = vmatpush1.xpose.msra.mxu0 0.0
        %2015 = vmatprep.subr.mxu0 0.0
        %2016 = vmatpush1.xpose.msra.mxu0 0.0
        %2017 = vmatprep.subr.mxu0 0.0
        %2018 = vmatpush1.xpose.msra.mxu0 0.0
        %2019 = vmatprep.subr.mxu0 0.0
        %2020 = vmatpush1.xpose.msra.mxu0 0.0
        %2021 = vmatprep.subr.mxu0 0.0
        %2022 = vmatpush1.xpose.msra.mxu0 %v1989
        %2023 = vmatprep.subr.mxu0 0.0
        %2024 = vmatpush2.xpose.msra.mxu0 0.0
        %2025 = vmatprep.subr.mxu0 0.0
        %2026 = vmatpush2.xpose.msra.mxu0 0.0
        %2027 = vmatprep.subr.mxu0 0.0
        %2028 = vmatpush2.xpose.msra.mxu0 0.0
        %2029 = vmatprep.subr.mxu0 0.0
        %2030 = vmatpush2.xpose.msra.mxu0 0.0
        %2031 = vmatprep.subr.mxu0 0.0
        %2032 = vmatpush2.xpose.msra.mxu0 0.0
        %2033 = vmatprep.subr.mxu0 0.0
        %2034 = vmatpush2.xpose.msra.mxu0 0.0
        %2035 = vmatprep.subr.mxu0 0.0
        %2036 = vmatpush2.xpose.msra.mxu0 0.0
        %2037 = vmatprep.subr.mxu0 0.0
        %2038 = vmatpush2.xpose.msra.mxu0 0.0
        %2039 = vmatprep.subr.mxu0 0.0
        %2040 = vmatpush2.xpose.msra.mxu0 0.0
        %2041 = vmatprep.subr.mxu0 0.0
        %2042 = vmatpush2.xpose.msra.mxu0 0.0
        %2043 = vmatprep.subr.mxu0 0.0
        %2044 = vmatpush2.xpose.msra.mxu0 0.0
        %2045 = vmatprep.subr.mxu0 0.0
        %2046 = vmatpush2.xpose.msra.mxu0 0.0
        %2047 = vmatprep.subr.mxu0 0.0
        %2048 = vmatpush2.xpose.msra.mxu0 0.0
        %2049 = vmatprep.subr.mxu0 0.0
        %2050 = vmatpush2.xpose.msra.mxu0 0.0
        %2051 = vmatprep.subr.mxu0 0.0
        %2052 = vmatpush2.xpose.msra.mxu0 0.0
        %2053 = vmatprep.subr.mxu0 0.0
        %2054 = vmatpush2.xpose.msra.mxu0 0.0
        %2055 = vmatprep.mubr.f32.mxu0 0.0
        %2056 = vmatmul.mubr.f32.gmra.mxu0 %v1987
        %v2057 = vpop.f32.mrf.mxu0
        %v2058 = vadd.f32 0.0, %v2057
        %v2059 = vpop.f32.mrf.mxu0
        %2060 = vdwg.mxu0
        %v2061 = vmul.f32 %v1980, 0.35355338
        %v2062 = vmul.f32 %v2058, 0.35355338
        %v2063 = vadd.f32 %v2061, %v1054
        %v2064 = vadd.f32 %v2062, %v1058
        %v2065 = vsel %vm897, %v2063, -inf
        %2066 = vmax.xlane.f32.xlu0 %v2065
        %v2067 = vpop.xlane.xlu0 %2066
        %v2068 = vsel %vm897, %v2064, -inf
        %2069 = vmax.xlane.f32.xlu0 %v2068
        %v2070 = vpop.xlane.xlu0 %2069
        %v2071 = vsub.f32 %v2063, %v2067
        %v2072 = vsub.f32 %v2064, %v2070
        %v2073 = vmul.f32 %v2071, 1.442695
        %v2074 = vpow.pop %v2073
        %v2075 = vmul.f32 %v2072, 1.442695
        %v2076 = vpow.pop %v2075
        %v2077 = vsel %vm897, %v2074, 0.0
        %2078 = vadd.xlane.f32.xlu0 %v2077
        %v2079 = vpop.xlane.xlu0 %2078
        %v2080 = vsel %vm897, %v2076, 0.0
        %2081 = vadd.xlane.f32.xlu0 %v2080
        %v2082 = vpop.xlane.xlu0 %2081
        %v2083 = vrcp.pop %v2079
        %v2084 = vrcp.pop %v2082
        %v2085 = vmul.f32 %v2074, %v2083
        %v2086 = vmul.f32 %v2076, %v2084
        %2087 = vrot.lane.b32.xlu0 %v860, 40
        %v2088 = vpop.permute.xlu0 %2087
        %v2091 = vsel %vm897, %v2085, 0
        %2093 = vmatprep.subr.mxu0 0.0
        %2094 = vmatpush1.msra.mxu0 0.0
        %2095 = vmatprep.subr.mxu0 0.0
        %2096 = vmatpush1.msra.mxu0 0.0
        %2097 = vmatprep.subr.mxu0 0.0
        %2098 = vmatpush1.msra.mxu0 0.0
        %2099 = vmatprep.subr.mxu0 0.0
        %2100 = vmatpush1.msra.mxu0 0.0
        %2101 = vmatprep.subr.mxu0 0.0
        %2102 = vmatpush1.msra.mxu0 0.0
        %2103 = vmatprep.subr.mxu0 0.0
        %2104 = vmatpush1.msra.mxu0 0.0
        %2105 = vmatprep.subr.mxu0 0.0
        %2106 = vmatpush1.msra.mxu0 0.0
        %2107 = vmatprep.subr.mxu0 0.0
        %2108 = vmatpush1.msra.mxu0 0.0
        %2109 = vmatprep.subr.mxu0 0.0
        %2110 = vmatpush1.msra.mxu0 0.0
        %2111 = vmatprep.subr.mxu0 0.0
        %2112 = vmatpush1.msra.mxu0 0.0
        %2113 = vmatprep.subr.mxu0 0.0
        %2114 = vmatpush1.msra.mxu0 0.0
        %2115 = vmatprep.subr.mxu0 0.0
        %2116 = vmatpush1.msra.mxu0 0.0
        %2117 = vmatprep.subr.mxu0 0.0
        %2118 = vmatpush1.msra.mxu0 0.0
        %2119 = vmatprep.subr.mxu0 0.0
        %2120 = vmatpush1.msra.mxu0 0.0
        %2121 = vmatprep.subr.mxu0 0.0
        %2122 = vmatpush1.msra.mxu0 0.0
        %2123 = vmatprep.subr.mxu0 0.0
        %2124 = vmatpush1.msra.mxu0 %v2088
        %2125 = vmatprep.subr.mxu0 0.0
        %2126 = vmatpush2.msra.mxu0 0.0
        %2127 = vmatprep.subr.mxu0 0.0
        %2128 = vmatpush2.msra.mxu0 0.0
        %2129 = vmatprep.subr.mxu0 0.0
        %2130 = vmatpush2.msra.mxu0 0.0
        %2131 = vmatprep.subr.mxu0 0.0
        %2132 = vmatpush2.msra.mxu0 0.0
        %2133 = vmatprep.subr.mxu0 0.0
        %2134 = vmatpush2.msra.mxu0 0.0
        %2135 = vmatprep.subr.mxu0 0.0
        %2136 = vmatpush2.msra.mxu0 0.0
        %2137 = vmatprep.subr.mxu0 0.0
        %2138 = vmatpush2.msra.mxu0 0.0
        %2139 = vmatprep.subr.mxu0 0.0
        %2140 = vmatpush2.msra.mxu0 0.0
        %2141 = vmatprep.subr.mxu0 0.0
        %2142 = vmatpush2.msra.mxu0 0.0
        %2143 = vmatprep.subr.mxu0 0.0
        %2144 = vmatpush2.msra.mxu0 0.0
        %2145 = vmatprep.subr.mxu0 0.0
        %2146 = vmatpush2.msra.mxu0 0.0
        %2147 = vmatprep.subr.mxu0 0.0
        %2148 = vmatpush2.msra.mxu0 0.0
        %2149 = vmatprep.subr.mxu0 0.0
        %2150 = vmatpush2.msra.mxu0 0.0
        %2151 = vmatprep.subr.mxu0 0.0
        %2152 = vmatpush2.msra.mxu0 0.0
        %2153 = vmatprep.subr.mxu0 0.0
        %2154 = vmatpush2.msra.mxu0 0.0
        %2155 = vmatprep.subr.mxu0 0.0
        %2156 = vmatpush2.msra.mxu0 0.0
        %2157 = vmatprep.mubr.f32.mxu0 0.0
        %2158 = vmatmul.mubr.f32.gmra.mxu0 %v2091
        %v2159 = vpop.f32.mrf.mxu0
        %v2160 = vadd.f32 0.0, %v2159
        %v2161 = vpop.f32.mrf.mxu0
        %2162 = vdwg.mxu0
        %2163 = vrot.lane.b32.xlu0 %v865, 40
        %v2164 = vpop.permute.xlu0 %2163
        %v2167 = vsel %vm897, %v2086, 0
        %2169 = vmatprep.subr.mxu0 0.0
        %2170 = vmatpush1.msra.mxu0 0.0
        %2171 = vmatprep.subr.mxu0 0.0
        %2172 = vmatpush1.msra.mxu0 0.0
        %2173 = vmatprep.subr.mxu0 0.0
        %2174 = vmatpush1.msra.mxu0 0.0
        %2175 = vmatprep.subr.mxu0 0.0
        %2176 = vmatpush1.msra.mxu0 0.0
        %2177 = vmatprep.subr.mxu0 0.0
        %2178 = vmatpush1.msra.mxu0 0.0
        %2179 = vmatprep.subr.mxu0 0.0
        %2180 = vmatpush1.msra.mxu0 0.0
        %2181 = vmatprep.subr.mxu0 0.0
        %2182 = vmatpush1.msra.mxu0 0.0
        %2183 = vmatprep.subr.mxu0 0.0
        %2184 = vmatpush1.msra.mxu0 0.0
        %2185 = vmatprep.subr.mxu0 0.0
        %2186 = vmatpush1.msra.mxu0 0.0
        %2187 = vmatprep.subr.mxu0 0.0
        %2188 = vmatpush1.msra.mxu0 0.0
        %2189 = vmatprep.subr.mxu0 0.0
        %2190 = vmatpush1.msra.mxu0 0.0
        %2191 = vmatprep.subr.mxu0 0.0
        %2192 = vmatpush1.msra.mxu0 0.0
        %2193 = vmatprep.subr.mxu0 0.0
        %2194 = vmatpush1.msra.mxu0 0.0
        %2195 = vmatprep.subr.mxu0 0.0
        %2196 = vmatpush1.msra.mxu0 0.0
        %2197 = vmatprep.subr.mxu0 0.0
        %2198 = vmatpush1.msra.mxu0 0.0
        %2199 = vmatprep.subr.mxu0 0.0
        %2200 = vmatpush1.msra.mxu0 %v2164
        %2201 = vmatprep.subr.mxu0 0.0
        %2202 = vmatpush2.msra.mxu0 0.0
        %2203 = vmatprep.subr.mxu0 0.0
        %2204 = vmatpush2.msra.mxu0 0.0
        %2205 = vmatprep.subr.mxu0 0.0
        %2206 = vmatpush2.msra.mxu0 0.0
        %2207 = vmatprep.subr.mxu0 0.0
        %2208 = vmatpush2.msra.mxu0 0.0
        %2209 = vmatprep.subr.mxu0 0.0
        %2210 = vmatpush2.msra.mxu0 0.0
        %2211 = vmatprep.subr.mxu0 0.0
        %2212 = vmatpush2.msra.mxu0 0.0
        %2213 = vmatprep.subr.mxu0 0.0
        %2214 = vmatpush2.msra.mxu0 0.0
        %2215 = vmatprep.subr.mxu0 0.0
        %2216 = vmatpush2.msra.mxu0 0.0
        %2217 = vmatprep.subr.mxu0 0.0
        %2218 = vmatpush2.msra.mxu0 0.0
        %2219 = vmatprep.subr.mxu0 0.0
        %2220 = vmatpush2.msra.mxu0 0.0
        %2221 = vmatprep.subr.mxu0 0.0
        %2222 = vmatpush2.msra.mxu0 0.0
        %2223 = vmatprep.subr.mxu0 0.0
        %2224 = vmatpush2.msra.mxu0 0.0
        %2225 = vmatprep.subr.mxu0 0.0
        %2226 = vmatpush2.msra.mxu0 0.0
        %2227 = vmatprep.subr.mxu0 0.0
        %2228 = vmatpush2.msra.mxu0 0.0
        %2229 = vmatprep.subr.mxu0 0.0
        %2230 = vmatpush2.msra.mxu0 0.0
        %2231 = vmatprep.subr.mxu0 0.0
        %2232 = vmatpush2.msra.mxu0 0.0
        %2233 = vmatprep.mubr.f32.mxu0 0.0
        %2234 = vmatmul.mubr.f32.gmra.mxu0 %v2167
        %v2235 = vpop.f32.mrf.mxu0
        %v2236 = vadd.f32 0.0, %v2235
        %v2237 = vpop.f32.mrf.mxu0
        %2238 = vdwg.mxu0
        %2241 = vrot.lane.b32.xlu0 %v1492, 8
        %v2242 = vpop.permute.xlu0 %2241
        %2243 = vrot.lane.b32.xlu0 %v1568, 8
        %v2244 = vpop.permute.xlu0 %2243
        %2249 = vrot.lane.b32.xlu0 %v1826, 16
        %v2250 = vpop.permute.xlu0 %2249
        %2251 = vrot.lane.b32.xlu0 %v1902, 16
        %v2252 = vpop.permute.xlu0 %2251
        %2257 = vrot.lane.b32.xlu0 %v2160, 24
        %v2258 = vpop.permute.xlu0 %2257
        %2259 = vrot.lane.b32.xlu0 %v2236, 24
        %v2260 = vpop.permute.xlu0 %2259
        %v2263 = vsel %vm897, %v1158, %v2242
        %v2264 = vsel %vm897, %v1234, %v2244
        %vm2265 = vcmask 130048
        %v2266 = vsel %vm2265, %v2263, %v2250
        %v2267 = vsel %vm2265, %v2264, %v2252
        %vm2268 = vcmask 195584
        %v2269 = vsel %vm2268, %v2266, %v2258
        %v2270 = vsel %vm2268, %v2267, %v2260
        %v2271 = vld [vmem:[%s593] sm:$0xff]
        %v2272 = vld [vmem:[%s593 + $0x8] sm:$0xff]
        %v2273 = vld [vmem:[%s593 + $0x10] sm:$0xff]
        %v2274 = vld [vmem:[%s593 + $0x18] sm:$0xff]
        %v2275 = vld [vmem:[%s695] sm:$0x1]
        %v2277 = vlaneseq
        %v2278 = vshrl.u32 %v2277, 7
        %v2279 = vsub.s32 0, %v2278
        %v2280 = vrot.slane %v2275, %v2279
        %v2283 = vsel %vm786, %v2269, 0
        %v2286 = vsel %vm786, %v2270, 0
        %2288 = vmatprep.subr.mxu0 0.0
        %2289 = vmatpush1.msra.mxu0 0.0
        %2290 = vmatprep.subr.mxu0 0.0
        %2291 = vmatpush1.msra.mxu0 0.0
        %2292 = vmatprep.subr.mxu0 0.0
        %2293 = vmatpush1.msra.mxu0 0.0
        %2294 = vmatprep.subr.mxu0 0.0
        %2295 = vmatpush1.msra.mxu0 0.0
        %2296 = vmatprep.subr.mxu0 0.0
        %2297 = vmatpush1.msra.mxu0 0.0
        %2298 = vmatprep.subr.mxu0 0.0
        %2299 = vmatpush1.msra.mxu0 0.0
        %2300 = vmatprep.subr.mxu0 0.0
        %2301 = vmatpush1.msra.mxu0 0.0
        %2302 = vmatprep.subr.mxu0 0.0
        %2303 = vmatpush1.msra.mxu0 0.0
        %2304 = vmatprep.subr.mxu0 0.0
        %2305 = vmatpush1.msra.mxu0 0.0
        %2306 = vmatprep.subr.mxu0 0.0
        %2307 = vmatpush1.msra.mxu0 0.0
        %2308 = vmatprep.subr.mxu0 0.0
        %2309 = vmatpush1.msra.mxu0 0.0
        %2310 = vmatprep.subr.mxu0 0.0
        %2311 = vmatpush1.msra.mxu0 0.0
        %2312 = vmatprep.subr.mxu0 0.0
        %2313 = vmatpush1.msra.mxu0 %v2274
        %2314 = vmatprep.subr.mxu0 0.0
        %2315 = vmatpush1.msra.mxu0 %v2273
        %2316 = vmatprep.subr.mxu0 0.0
        %2317 = vmatpush1.msra.mxu0 %v2272
        %2318 = vmatprep.subr.mxu0 0.0
        %2319 = vmatpush1.msra.mxu0 %v2271
        %2320 = vmatprep.subr.mxu0 0.0
        %2321 = vmatpush2.msra.mxu0 0.0
        %2322 = vmatprep.subr.mxu0 0.0
        %2323 = vmatpush2.msra.mxu0 0.0
        %2324 = vmatprep.subr.mxu0 0.0
        %2325 = vmatpush2.msra.mxu0 0.0
        %2326 = vmatprep.subr.mxu0 0.0
        %2327 = vmatpush2.msra.mxu0 0.0
        %2328 = vmatprep.subr.mxu0 0.0
        %2329 = vmatpush2.msra.mxu0 0.0
        %2330 = vmatprep.subr.mxu0 0.0
        %2331 = vmatpush2.msra.mxu0 0.0
        %2332 = vmatprep.subr.mxu0 0.0
        %2333 = vmatpush2.msra.mxu0 0.0
        %2334 = vmatprep.subr.mxu0 0.0
        %2335 = vmatpush2.msra.mxu0 0.0
        %2336 = vmatprep.subr.mxu0 0.0
        %2337 = vmatpush2.msra.mxu0 0.0
        %2338 = vmatprep.subr.mxu0 0.0
        %2339 = vmatpush2.msra.mxu0 0.0
        %2340 = vmatprep.subr.mxu0 0.0
        %2341 = vmatpush2.msra.mxu0 0.0
        %2342 = vmatprep.subr.mxu0 0.0
        %2343 = vmatpush2.msra.mxu0 0.0
        %2344 = vmatprep.subr.mxu0 0.0
        %2345 = vmatpush2.msra.mxu0 0.0
        %2346 = vmatprep.subr.mxu0 0.0
        %2347 = vmatpush2.msra.mxu0 0.0
        %2348 = vmatprep.subr.mxu0 0.0
        %2349 = vmatpush2.msra.mxu0 0.0
        %2350 = vmatprep.subr.mxu0 0.0
        %2351 = vmatpush2.msra.mxu0 0.0
        %2352 = vmatprep.mubr.f32.mxu0 0.0
        %2353 = vmatmul.mubr.f32.gmra.mxu0 %v2283
        %v2354 = vpop.f32.mrf.mxu0
        %v2355 = vadd.f32 %v2280, %v2354
        %v2356 = vpop.f32.mrf.mxu0
        %2357 = vmatprep.mubr.f32.mxu0 0.0
        %2358 = vmatmul.mubr.f32.gmra.mxu0 %v2286
        %v2359 = vpop.f32.mrf.mxu0
        %v2360 = vadd.f32 %v2280, %v2359
        %v2361 = vpop.f32.mrf.mxu0
        %2362 = vdwg.mxu0
        %v2363 = vadd.f32 %v773, %v2355
        %v2364 = vadd.f32 %v774, %v2360
        %v2365 = vld [vmem:[%s698] sm:$0x1]
        %v2366 = vld [vmem:[%s701] sm:$0x1]
        %v2367 = vsel %vm786, %v2363, 0.0
        %2368 = vadd.xlane.f32.xlu0 %v2367
        %v2369 = vpop.xlane.xlu0 %2368
        %v2370 = vsel %vm786, %v2364, 0.0
        %2371 = vadd.xlane.f32.xlu0 %v2370
        %v2372 = vpop.xlane.xlu0 %2371
        %v2373 = vrcp.pop 32.0
        %v2374 = vmul.f32 %v2369, %v2373
        %v2375 = vmul.f32 %v2372, %v2373
        %v2376 = vsub.f32 %v2363, %v2374
        %v2377 = vsub.f32 %v2364, %v2375
        %v2378 = vmul.f32 %v2376, %v2376
        %v2379 = vmul.f32 %v2377, %v2377
        %v2380 = vsel %vm786, %v2378, 0.0
        %2381 = vadd.xlane.f32.xlu0 %v2380
        %v2382 = vpop.xlane.xlu0 %2381
        %v2383 = vsel %vm786, %v2379, 0.0
        %2384 = vadd.xlane.f32.xlu0 %v2383
        %v2385 = vpop.xlane.xlu0 %2384
        %v2386 = vmul.f32 %v2382, %v2373
        %v2387 = vmul.f32 %v2385, %v2373
        %v2388 = vadd.f32 %v2386, 1e-12
        %v2389 = vadd.f32 %v2387, 1e-12
        %v2390 = vrsqrt.pop %v2388
        %v2391 = vrsqrt.pop %v2389
        %v2392 = vmul.f32 %v2376, %v2390
        %v2393 = vmul.f32 %v2377, %v2391
        %v2395 = vlaneseq
        %v2396 = vshrl.u32 %v2395, 7
        %v2397 = vsub.s32 0, %v2396
        %v2398 = vrot.slane %v2365, %v2397
        %v2400 = vmul.f32 %v2392, %v2398
        %v2401 = vmul.f32 %v2393, %v2398
        %v2403 = vlaneseq
        %v2404 = vshrl.u32 %v2403, 7
        %v2405 = vsub.s32 0, %v2404
        %v2406 = vrot.slane %v2366, %v2405
        %v2408 = vadd.f32 %v2400, %v2406
        %v2409 = vadd.f32 %v2401, %v2406
        %v2410 = vld [vmem:[%s602] sm:$0xff]
        %v2411 = vld [vmem:[%s602 + $0x8] sm:$0xff]
        %v2412 = vld [vmem:[%s602 + $0x10] sm:$0xff]
        %v2413 = vld [vmem:[%s602 + $0x18] sm:$0xff]
        %v2414 = vld [vmem:[%s704] sm:$0x1]
        %v2416 = vlaneseq
        %v2417 = vshrl.u32 %v2416, 7
        %v2418 = vsub.s32 0, %v2417
        %v2419 = vrot.slane %v2414, %v2418
        %v2422 = vsel %vm786, %v2408, 0
        %v2425 = vsel %vm786, %v2409, 0
        %2427 = vmatprep.subr.mxu0 0.0
        %2428 = vmatpush1.msra.mxu0 0.0
        %2429 = vmatprep.subr.mxu0 0.0
        %2430 = vmatpush1.msra.mxu0 0.0
        %2431 = vmatprep.subr.mxu0 0.0
        %2432 = vmatpush1.msra.mxu0 0.0
        %2433 = vmatprep.subr.mxu0 0.0
        %2434 = vmatpush1.msra.mxu0 0.0
        %2435 = vmatprep.subr.mxu0 0.0
        %2436 = vmatpush1.msra.mxu0 0.0
        %2437 = vmatprep.subr.mxu0 0.0
        %2438 = vmatpush1.msra.mxu0 0.0
        %2439 = vmatprep.subr.mxu0 0.0
        %2440 = vmatpush1.msra.mxu0 0.0
        %2441 = vmatprep.subr.mxu0 0.0
        %2442 = vmatpush1.msra.mxu0 0.0
        %2443 = vmatprep.subr.mxu0 0.0
        %2444 = vmatpush1.msra.mxu0 0.0
        %2445 = vmatprep.subr.mxu0 0.0
        %2446 = vmatpush1.msra.mxu0 0.0
        %2447 = vmatprep.subr.mxu0 0.0
        %2448 = vmatpush1.msra.mxu0 0.0
        %2449 = vmatprep.subr.mxu0 0.0
        %2450 = vmatpush1.msra.mxu0 0.0
        %2451 = vmatprep.subr.mxu0 0.0
        %2452 = vmatpush1.msra.mxu0 %v2413
        %2453 = vmatprep.subr.mxu0 0.0
        %2454 = vmatpush1.msra.mxu0 %v2412
        %2455 = vmatprep.subr.mxu0 0.0
        %2456 = vmatpush1.msra.mxu0 %v2411
        %2457 = vmatprep.subr.mxu0 0.0
        %2458 = vmatpush1.msra.mxu0 %v2410
        %2459 = vmatprep.subr.mxu0 0.0
        %2460 = vmatpush2.msra.mxu0 0.0
        %2461 = vmatprep.subr.mxu0 0.0
        %2462 = vmatpush2.msra.mxu0 0.0
        %2463 = vmatprep.subr.mxu0 0.0
        %2464 = vmatpush2.msra.mxu0 0.0
        %2465 = vmatprep.subr.mxu0 0.0
        %2466 = vmatpush2.msra.mxu0 0.0
        %2467 = vmatprep.subr.mxu0 0.0
        %2468 = vmatpush2.msra.mxu0 0.0
        %2469 = vmatprep.subr.mxu0 0.0
        %2470 = vmatpush2.msra.mxu0 0.0
        %2471 = vmatprep.subr.mxu0 0.0
        %2472 = vmatpush2.msra.mxu0 0.0
        %2473 = vmatprep.subr.mxu0 0.0
        %2474 = vmatpush2.msra.mxu0 0.0
        %2475 = vmatprep.subr.mxu0 0.0
        %2476 = vmatpush2.msra.mxu0 0.0
        %2477 = vmatprep.subr.mxu0 0.0
        %2478 = vmatpush2.msra.mxu0 0.0
        %2479 = vmatprep.subr.mxu0 0.0
        %2480 = vmatpush2.msra.mxu0 0.0
        %2481 = vmatprep.subr.mxu0 0.0
        %2482 = vmatpush2.msra.mxu0 0.0
        %2483 = vmatprep.subr.mxu0 0.0
        %2484 = vmatpush2.msra.mxu0 0.0
        %2485 = vmatprep.subr.mxu0 0.0
        %2486 = vmatpush2.msra.mxu0 0.0
        %2487 = vmatprep.subr.mxu0 0.0
        %2488 = vmatpush2.msra.mxu0 0.0
        %2489 = vmatprep.subr.mxu0 0.0
        %2490 = vmatpush2.msra.mxu0 0.0
        %2491 = vmatprep.mubr.f32.mxu0 0.0
        %2492 = vmatmul.mubr.f32.gmra.mxu0 %v2422
        %v2493 = vpop.f32.mrf.mxu0
        %v2494 = vadd.f32 %v2419, %v2493
        %v2495 = vpop.f32.mrf.mxu0
        %2496 = vmatprep.mubr.f32.mxu0 0.0
        %2497 = vmatmul.mubr.f32.gmra.mxu0 %v2425
        %v2498 = vpop.f32.mrf.mxu0
        %v2499 = vadd.f32 %v2419, %v2498
        %v2500 = vpop.f32.mrf.mxu0
        %2501 = vdwg.mxu0
        %v2502 = vmul.f32 %v2494, 0.5
        %v2503 = vmul.f32 %v2499, 0.5
        %v2504 = vmul.f32 %v2494, 0.044715
        %v2505 = vmul.f32 %v2499, 0.044715
        %v2506 = vmul.f32 %v2504, %v2494
        %v2507 = vmul.f32 %v2505, %v2499
        %v2508 = vmul.f32 %v2506, %v2494
        %v2509 = vmul.f32 %v2507, %v2499
        %v2510 = vadd.f32 %v2494, %v2508
        %v2511 = vadd.f32 %v2499, %v2509
        %v2512 = vmul.f32 %v2510, 0.7978846
        %v2513 = vmul.f32 %v2511, 0.7978846
        %v2514 = vtanh.pop %v2512
        %v2515 = vtanh.pop %v2513
        %v2516 = vadd.f32 %v2514, 1.0
        %v2517 = vadd.f32 %v2515, 1.0
        %v2518 = vmul.f32 %v2502, %v2516
        %v2519 = vmul.f32 %v2503, %v2517
        %v2520 = vld [vmem:[%s709] sm:$0xff]
        %v2521 = vld [vmem:[%s709 + $0x8] sm:$0xff]
        %v2522 = vld [vmem:[%s709 + $0x10] sm:$0xff]
        %v2523 = vld [vmem:[%s709 + $0x18] sm:$0xff]
        %v2524 = vld [vmem:[%s709 + $0x20] sm:$0xff]
        %v2525 = vld [vmem:[%s709 + $0x28] sm:$0xff]
        %v2526 = vld [vmem:[%s709 + $0x30] sm:$0xff]
        %v2527 = vld [vmem:[%s709 + $0x38] sm:$0xff]
        %v2528 = vld [vmem:[%s712] sm:$0x1]
        %v2530 = vlaneseq
        %v2531 = vshrl.u32 %v2530, 7
        %v2532 = vsub.s32 0, %v2531
        %v2533 = vrot.slane %v2528, %v2532
        %vm2535 = vcmask 523264
        %v2537 = vsel %vm2535, %v2518, 0
        %v2540 = vsel %vm2535, %v2519, 0
        %2542 = vmatprep.subr.mxu0 0.0
        %2543 = vmatpush1.msra.mxu0 0.0
        %2544 = vmatprep.subr.mxu0 0.0
        %2545 = vmatpush1.msra.mxu0 0.0
        %2546 = vmatprep.subr.mxu0 0.0
        %2547 = vmatpush1.msra.mxu0 0.0
        %2548 = vmatprep.subr.mxu0 0.0
        %2549 = vmatpush1.msra.mxu0 0.0
        %2550 = vmatprep.subr.mxu0 0.0
        %2551 = vmatpush1.msra.mxu0 0.0
        %2552 = vmatprep.subr.mxu0 0.0
        %2553 = vmatpush1.msra.mxu0 0.0
        %2554 = vmatprep.subr.mxu0 0.0
        %2555 = vmatpush1.msra.mxu0 0.0
        %2556 = vmatprep.subr.mxu0 0.0
        %2557 = vmatpush1.msra.mxu0 0.0
        %2558 = vmatprep.subr.mxu0 0.0
        %2559 = vmatpush1.msra.mxu0 %v2527
        %2560 = vmatprep.subr.mxu0 0.0
        %2561 = vmatpush1.msra.mxu0 %v2526
        %2562 = vmatprep.subr.mxu0 0.0
        %2563 = vmatpush1.msra.mxu0 %v2525
        %2564 = vmatprep.subr.mxu0 0.0
        %2565 = vmatpush1.msra.mxu0 %v2524
        %2566 = vmatprep.subr.mxu0 0.0
        %2567 = vmatpush1.msra.mxu0 %v2523
        %2568 = vmatprep.subr.mxu0 0.0
        %2569 = vmatpush1.msra.mxu0 %v2522
        %2570 = vmatprep.subr.mxu0 0.0
        %2571 = vmatpush1.msra.mxu0 %v2521
        %2572 = vmatprep.subr.mxu0 0.0
        %2573 = vmatpush1.msra.mxu0 %v2520
        %2574 = vmatprep.subr.mxu0 0.0
        %2575 = vmatpush2.msra.mxu0 0.0
        %2576 = vmatprep.subr.mxu0 0.0
        %2577 = vmatpush2.msra.mxu0 0.0
        %2578 = vmatprep.subr.mxu0 0.0
        %2579 = vmatpush2.msra.mxu0 0.0
        %2580 = vmatprep.subr.mxu0 0.0
        %2581 = vmatpush2.msra.mxu0 0.0
        %2582 = vmatprep.subr.mxu0 0.0
        %2583 = vmatpush2.msra.mxu0 0.0
        %2584 = vmatprep.subr.mxu0 0.0
        %2585 = vmatpush2.msra.mxu0 0.0
        %2586 = vmatprep.subr.mxu0 0.0
        %2587 = vmatpush2.msra.mxu0 0.0
        %2588 = vmatprep.subr.mxu0 0.0
        %2589 = vmatpush2.msra.mxu0 0.0
        %2590 = vmatprep.subr.mxu0 0.0
        %2591 = vmatpush2.msra.mxu0 0.0
        %2592 = vmatprep.subr.mxu0 0.0
        %2593 = vmatpush2.msra.mxu0 0.0
        %2594 = vmatprep.subr.mxu0 0.0
        %2595 = vmatpush2.msra.mxu0 0.0
        %2596 = vmatprep.subr.mxu0 0.0
        %2597 = vmatpush2.msra.mxu0 0.0
        %2598 = vmatprep.subr.mxu0 0.0
        %2599 = vmatpush2.msra.mxu0 0.0
        %2600 = vmatprep.subr.mxu0 0.0
        %2601 = vmatpush2.msra.mxu0 0.0
        %2602 = vmatprep.subr.mxu0 0.0
        %2603 = vmatpush2.msra.mxu0 0.0
        %2604 = vmatprep.subr.mxu0 0.0
        %2605 = vmatpush2.msra.mxu0 0.0
        %2606 = vmatprep.mubr.f32.mxu0 0.0
        %2607 = vmatmul.mubr.f32.gmra.mxu0 %v2537
        %v2608 = vpop.f32.mrf.mxu0
        %v2609 = vadd.f32 %v2533, %v2608
        %v2610 = vpop.f32.mrf.mxu0
        %2611 = vmatprep.mubr.f32.mxu0 0.0
        %2612 = vmatmul.mubr.f32.gmra.mxu0 %v2540
        %v2613 = vpop.f32.mrf.mxu0
        %v2614 = vadd.f32 %v2533, %v2613
        %v2615 = vpop.f32.mrf.mxu0
        %2616 = vdwg.mxu0
        %v2617 = vadd.f32 %v2408, %v2609
        %v2618 = vadd.f32 %v2409, %v2614
        %v2619 = vld [vmem:[%s715] sm:$0x1]
        %v2620 = vld [vmem:[%s718] sm:$0x1]
        %v2621 = vsel %vm786, %v2617, 0.0
        %2622 = vadd.xlane.f32.xlu0 %v2621
        %v2623 = vpop.xlane.xlu0 %2622
        %v2624 = vsel %vm786, %v2618, 0.0
        %2625 = vadd.xlane.f32.xlu0 %v2624
        %v2626 = vpop.xlane.xlu0 %2625
        %v2627 = vmul.f32 %v2623, %v2373
        %v2628 = vmul.f32 %v2626, %v2373
        %v2629 = vsub.f32 %v2617, %v2627
        %v2630 = vsub.f32 %v2618, %v2628
        %v2631 = vmul.f32 %v2629, %v2629
        %v2632 = vmul.f32 %v2630, %v2630
        %v2633 = vsel %vm786, %v2631, 0.0
        %2634 = vadd.xlane.f32.xlu0 %v2633
        %v2635 = vpop.xlane.xlu0 %2634
        %v2636 = vsel %vm786, %v2632, 0.0
        %2637 = vadd.xlane.f32.xlu0 %v2636
        %v2638 = vpop.xlane.xlu0 %2637
        %v2639 = vmul.f32 %v2635, %v2373
        %v2640 = vmul.f32 %v2638, %v2373
        %v2641 = vadd.f32 %v2639, 1e-12
        %v2642 = vadd.f32 %v2640, 1e-12
        %v2643 = vrsqrt.pop %v2641
        %v2644 = vrsqrt.pop %v2642
        %v2645 = vmul.f32 %v2629, %v2643
        %v2646 = vmul.f32 %v2630, %v2644
        %v2648 = vlaneseq
        %v2649 = vshrl.u32 %v2648, 7
        %v2650 = vsub.s32 0, %v2649
        %v2651 = vrot.slane %v2619, %v2650
        %v2653 = vmul.f32 %v2645, %v2651
        %v2654 = vmul.f32 %v2646, %v2651
        %v2656 = vlaneseq
        %v2657 = vshrl.u32 %v2656, 7
        %v2658 = vsub.s32 0, %v2657
        %v2659 = vrot.slane %v2620, %v2658
        %v2661 = vadd.f32 %v2653, %v2659
        %v2662 = vadd.f32 %v2654, %v2659
        %2663 = vst.msk [vmem:[%s16] sm:$0xff] %vm786, %v2661
        %2664 = vst.msk [vmem:[%s16 + $0x8] sm:$0xff] %vm786, %v2662
        // Predicated region
        $region97: #{_lambda_.2} parent=83 // pred_check
          %p2665 = pneg %p442
        $region98: #{_lambda_.2} parent=83 // pred_check_branch
          %2667 = sbr.rel (%p2665) target = $region100
        $region99: #{_lambda_.2} parent=83 // pred_region
          _
        $region100: #{_lambda_.2} parent=83 // pred_fallthru
          _
        // Predicated region
        $region101: #{_lambda_.2} parent=83 // pred_check
          %p2668 = pneg %p442
        $region102: #{_lambda_.2} parent=83 // pred_check_branch
          %2670 = sbr.rel (%p2668) target = $region104
        $region103: #{_lambda_.2} parent=83 // pred_region
          _
        $region104: #{_lambda_.2} parent=83 // pred_fallthru
          _
      $region84: #{_lambda_.2} parent=5 // pred_fallthru
        _
      %p2671 = scmp.le.s32.totalorder 2, %s28
      // Predicated region
      $region105: #{_lambda_.2} parent=5 // pred_check
        %p2672 = pneg %p2671
      $region106: #{_lambda_.2} parent=5 // pred_check_branch
        %2674 = sbr.rel (%p2672) target = $region108
      $region107: #{_lambda_.2} parent=5 // pred_region
        %s2675 = ssub.s32 %s28, 2
      $region108: #{_lambda_.2} parent=5 // pred_fallthru
        _
    $region6: #{_lambda_.2} parent=1 // loop_footer
      %s32 = sadd.s32 1, %s28
    $region7: #{_lambda_.2} parent=1 // loop_footer_branch
      %27 = sbr.rel target = $region3
    $region8: #{_lambda_.2} parent=1 // loop_exit
      _
    %2676 = vsyncpa [#allocation3], 1
    %s2677 = scalar_lea.sflag [#allocation3], 1
    %2678 = vsyncpa %s2677, 1
    %2679 = vsyncpa [#allocation5], 1
    %s2680 = scalar_lea.sflag [#allocation5], 1
    %2681 = vsyncpa %s2680, 1

</llo_original>
